<compile_context>
chip_gen: v5e
topology: v5e:2x2
jax: 0.10.0
libtpu: 0.0.40
codegen_flags: <defaults>
</compile_context>

<pallas_src>
import functools
import math

import jax
import jax.numpy as jnp
from jax import lax
from jax.experimental import pallas as pl
from jax.experimental.pallas import tpu as pltpu

NEG_INF = -1e30  # finite "minus infinity"; diagonal is never masked -> no NaN


# ----------------------------------------------------------------------------
# Fused decoder kernel: one grid step == one batch element, full stack.
# ----------------------------------------------------------------------------
def _decoder_kernel(
    tgt_ref, mem_ref,
    w_sa_qkv_ref, b_sa_qkv_ref, w_sa_out_ref, b_sa_out_ref,
    w_ca_qkv_ref, b_ca_qkv_ref, w_ca_out_ref, b_ca_out_ref,
    w_ff1_ref, b_ff1_ref, w_ff2_ref, b_ff2_ref,
    ln1_w_ref, ln1_b_ref, ln2_w_ref, ln2_b_ref, ln3_w_ref, ln3_b_ref,
    fin_w_ref, fin_b_ref, gen_w_ref, gen_b_ref,
    o_ref, *, nhead, num_layers, eps):
    f32 = jnp.float32
    x = tgt_ref[0].astype(f32)          # (S, D)
    mem = mem_ref[0].astype(f32)        # (Sm, D)
    S, D = x.shape
    Dh = D // nhead
    scale = 1.0 / math.sqrt(Dh)

    # Causal additive bias, built once per grid step.
    row = lax.broadcasted_iota(jnp.int32, (S, S), 0)
    col = lax.broadcasted_iota(jnp.int32, (S, S), 1)
    causal_bias = jnp.where(col <= row, 0.0, NEG_INF).astype(f32)

    def layer_norm(h, g, b):
        mu = jnp.mean(h, axis=-1, keepdims=True)
        hc = h - mu
        var = jnp.mean(hc * hc, axis=-1, keepdims=True)
        return hc * lax.rsqrt(var + eps) * g + b

    def mha(q_in, kv_in, w_qkv, b_qkv, w_out, b_out, bias):
        # q_in: (Sq, D); kv_in: (Sk, D); w_qkv: (D, 3D) in (in, out) layout.
        if q_in is kv_in:
            # Fused single QKV matmul -> (Sq, 3D), lane width 192.
            qkv = jnp.dot(q_in, w_qkv, preferred_element_type=f32) + b_qkv
            q = qkv[:, :D]
            k = qkv[:, D:2 * D]
            v = qkv[:, 2 * D:]
        else:
            q = (jnp.dot(q_in, w_qkv[:, :D], preferred_element_type=f32)
                 + b_qkv[:, :D])
            kv = (jnp.dot(kv_in, w_qkv[:, D:], preferred_element_type=f32)
                  + b_qkv[:, D:])
            k = kv[:, :D]
            v = kv[:, D:]

        # Per-head attention with head-concat fused into the output projection:
        #   concat_h(o_h) @ Wo  ==  sum_h o_h @ Wo[h*Dh:(h+1)*Dh, :]
        out = b_out                                   # (1, D), broadcasts
        for h in range(nhead):
            sl = slice(h * Dh, (h + 1) * Dh)
            # q @ k^T via dot_general contracting last dims (no transpose op).
            s = lax.dot_general(q[:, sl], k[:, sl],
                                (((1,), (1,)), ((), ())),
                                preferred_element_type=f32) * scale
            if bias is not None:
                s = s + bias
            m = jnp.max(s, axis=-1, keepdims=True)
            p = jnp.exp(s - m)
            denom = jnp.sum(p, axis=-1, keepdims=True)
            p = p * pl.reciprocal(denom, approx=True)
            oh = jnp.dot(p, v[:, sl], preferred_element_type=f32)   # (Sq, Dh)
            out = out + jnp.dot(oh, w_out[sl, :],
                                preferred_element_type=f32)         # (Sq, D)
        return out

    for li in range(num_layers):
        # --- self-attention (causal) + add & norm1 (post-norm) ---
        sa = mha(x, x,
                 w_sa_qkv_ref[li].astype(f32), b_sa_qkv_ref[li].astype(f32),
                 w_sa_out_ref[li].astype(f32), b_sa_out_ref[li].astype(f32),
                 causal_bias)
        x = layer_norm(x + sa,
                       ln1_w_ref[li].astype(f32), ln1_b_ref[li].astype(f32))

        # --- cross-attention over memory + add & norm2 ---
        ca = mha(x, mem,
                 w_ca_qkv_ref[li].astype(f32), b_ca_qkv_ref[li].astype(f32),
                 w_ca_out_ref[li].astype(f32), b_ca_out_ref[li].astype(f32),
                 None)
        x = layer_norm(x + ca,
                       ln2_w_ref[li].astype(f32), ln2_b_ref[li].astype(f32))

        # --- ReLU FFN + add & norm3 ---
        h = jnp.dot(x, w_ff1_ref[li].astype(f32), preferred_element_type=f32)
        h = jnp.maximum(h + b_ff1_ref[li].astype(f32), 0.0)      # (S, FF=128)
        y = jnp.dot(h, w_ff2_ref[li].astype(f32), preferred_element_type=f32)
        y = y + b_ff2_ref[li].astype(f32)
        x = layer_norm(x + y,
                       ln3_w_ref[li].astype(f32), ln3_b_ref[li].astype(f32))

    # --- final LayerNorm + generator (lane-dense (S, vocab) store) ---
    x = layer_norm(x, fin_w_ref[...].astype(f32), fin_b_ref[...].astype(f32))
    logits = jnp.dot(x, gen_w_ref[...].astype(f32), preferred_element_type=f32)
    logits = logits + gen_b_ref[...].astype(f32)
    o_ref[0] = logits.astype(o_ref.dtype)


# ----------------------------------------------------------------------------
# Forward wrapper: one pallas_call for the whole model.
# ----------------------------------------------------------------------------
def adversarial_decoder_forward(tgt, memory, packed, nhead, eps=1e-5):
    B, S, D = tgt.shape
    Sm = memory.shape[1]
    V = packed["gen_w"].shape[-1]
    L = packed["w_sa_qkv"].shape[0]

    weights = [
        packed["w_sa_qkv"], packed["b_sa_qkv"],
        packed["w_sa_out"], packed["b_sa_out"],
        packed["w_ca_qkv"], packed["b_ca_qkv"],
        packed["w_ca_out"], packed["b_ca_out"],
        packed["w_ff1"], packed["b_ff1"],
        packed["w_ff2"], packed["b_ff2"],
        packed["ln1_w"], packed["ln1_b"],
        packed["ln2_w"], packed["ln2_b"],
        packed["ln3_w"], packed["ln3_b"],
        packed["fin_w"], packed["fin_b"],
        packed["gen_w"], packed["gen_b"],
    ]

    def bcast_spec(a):
        nd = a.ndim
        return pl.BlockSpec(a.shape, lambda b, _nd=nd: (0,) * _nd)

    in_specs = (
        [pl.BlockSpec((1, S, D), lambda b: (b, 0, 0)),     # tgt: one batch elem
         pl.BlockSpec((1, Sm, D), lambda b: (b, 0, 0))]    # memory
        + [bcast_spec(w) for w in weights]                 # weights: resident
    )

    kernel = functools.partial(_decoder_kernel,
                               nhead=nhead, num_layers=L, eps=eps)
    return pl.pallas_call(
        kernel,
        out_shape=jax.ShapeDtypeStruct((B, S, V), tgt.dtype),
        grid=(B,),
        in_specs=in_specs,
        out_specs=pl.BlockSpec((1, S, V), lambda b: (b, 0, 0)),
        compiler_params=pltpu.CompilerParams(
            dimension_semantics=("parallel",)),   # v7x: split batch over 2 TCs
    )(tgt, memory, *weights)


# ----------------------------------------------------------------------------
# Parameters: torch-convention init, then ONE-TIME repack (transpose + stack).
# ----------------------------------------------------------------------------
def init_params(key, d_model, nhead, num_layers, dim_feedforward, vocab,
                dtype=jnp.float32):
    """Torch-convention weights: nn.Linear weight is (out_features, in_features)."""
    def normal(k, shape, scale=0.02):
        return (scale * jax.random.normal(k, shape)).astype(dtype)

    layers = []
    for li in range(num_layers):
        k = jax.random.fold_in(key, li)
        ks = jax.random.split(k, 8)
        layers.append({
            "self_attn": {
                "in_proj_weight": normal(ks[0], (3 * d_model, d_model)),
                "in_proj_bias": jnp.zeros((3 * d_model,), dtype),
                "out_proj_weight": normal(ks[1], (d_model, d_model)),
                "out_proj_bias": jnp.zeros((d_model,), dtype),
            },
            "cross_attn": {
                "in_proj_weight": normal(ks[2], (3 * d_model, d_model)),
                "in_proj_bias": jnp.zeros((3 * d_model,), dtype),
                "out_proj_weight": normal(ks[3], (d_model, d_model)),
                "out_proj_bias": jnp.zeros((d_model,), dtype),
            },
            "linear1_w": normal(ks[4], (dim_feedforward, d_model)),
            "linear1_b": jnp.zeros((dim_feedforward,), dtype),
            "linear2_w": normal(ks[5], (d_model, dim_feedforward)),
            "linear2_b": jnp.zeros((d_model,), dtype),
            "norm1_w": jnp.ones((d_model,), dtype),
            "norm1_b": jnp.zeros((d_model,), dtype),
            "norm2_w": jnp.ones((d_model,), dtype),
            "norm2_b": jnp.zeros((d_model,), dtype),
            "norm3_w": jnp.ones((d_model,), dtype),
            "norm3_b": jnp.zeros((d_model,), dtype),
        })

    kg = jax.random.fold_in(key, 1000)
    return {
        "layers": layers,
        "final_norm_w": jnp.ones((d_model,), dtype),
        "final_norm_b": jnp.zeros((d_model,), dtype),
        "gen_w": normal(kg, (vocab, d_model)),
        "gen_b": jnp.zeros((vocab,), dtype),
    }


def pack_params(params):
    """One-time repack: transpose Linear weights to (in, out) and stack layers."""
    def stack(fn):
        return jnp.stack([fn(p) for p in params["layers"]], axis=0)

    return {
        "w_sa_qkv": stack(lambda p: p["self_attn"]["in_proj_weight"].T),
        "b_sa_qkv": stack(lambda p: p["self_attn"]["in_proj_bias"][None, :]),
        "w_sa_out": stack(lambda p: p["self_attn"]["out_proj_weight"].T),
        "b_sa_out": stack(lambda p: p["self_attn"]["out_proj_bias"][None, :]),
        "w_ca_qkv": stack(lambda p: p["cross_attn"]["in_proj_weight"].T),
        "b_ca_qkv": stack(lambda p: p["cross_attn"]["in_proj_bias"][None, :]),
        "w_ca_out": stack(lambda p: p["cross_attn"]["out_proj_weight"].T),
        "b_ca_out": stack(lambda p: p["cross_attn"]["out_proj_bias"][None, :]),
        "w_ff1": stack(lambda p: p["linear1_w"].T),
        "b_ff1": stack(lambda p: p["linear1_b"][None, :]),
        "w_ff2": stack(lambda p: p["linear2_w"].T),
        "b_ff2": stack(lambda p: p["linear2_b"][None, :]),
        "ln1_w": stack(lambda p: p["norm1_w"][None, :]),
        "ln1_b": stack(lambda p: p["norm1_b"][None, :]),
        "ln2_w": stack(lambda p: p["norm2_w"][None, :]),
        "ln2_b": stack(lambda p: p["norm2_b"][None, :]),
        "ln3_w": stack(lambda p: p["norm3_w"][None, :]),
        "ln3_b": stack(lambda p: p["norm3_b"][None, :]),
        "fin_w": params["final_norm_w"][None, :],
        "fin_b": params["final_norm_b"][None, :],
        "gen_w": params["gen_w"].T,
        "gen_b": params["gen_b"][None, :],
    }


# ----------------------------------------------------------------------------
# Main
# ----------------------------------------------------------------------------
if __name__ == "__main__":
    # Small shapes consistent with the module (scaled-down defaults).
    B, S_TGT, S_MEM = 2, 8, 8
    D_MODEL, NHEAD, N_LAYERS, D_FF, VOCAB = 64, 4, 2, 128, 256
    EPS = 1e-5

    root = jax.random.PRNGKey(0)
    k_tgt, k_mem, k_par = jax.random.split(root, 3)
    tgt = jax.random.normal(k_tgt, (B, S_TGT, D_MODEL), dtype=jnp.float32)
    memory = jax.random.normal(k_mem, (B, S_MEM, D_MODEL), dtype=jnp.float32)

    params = init_params(k_par, D_MODEL, NHEAD, N_LAYERS, D_FF, VOCAB)
    packed = pack_params(params)   # one-time transpose/stack; forward is transpose-free

    fwd = jax.jit(functools.partial(adversarial_decoder_forward,
                                    nhead=NHEAD, eps=EPS))
    out = fwd(tgt, memory, packed)
    out = jax.block_until_ready(out)

    assert out.shape == (B, S_TGT, VOCAB), out.shape
    assert bool(jnp.all(jnp.isfinite(out)))
    print("KERNEL_OK")
</pallas_src>

<mosaic_0001>
module attributes {stable_mosaic.version = 11 : i64} {
  func.func @_decoder_kernel(%arg0: i32, %arg1: memref<1x8x64xf32, #tpu.memory_space<vmem>>, %arg2: memref<1x8x64xf32, #tpu.memory_space<vmem>>, %arg3: memref<2x64x192xf32, #tpu.memory_space<vmem>>, %arg4: memref<2x1x192xf32, #tpu.memory_space<vmem>>, %arg5: memref<2x64x64xf32, #tpu.memory_space<vmem>>, %arg6: memref<2x1x64xf32, #tpu.memory_space<vmem>>, %arg7: memref<2x64x192xf32, #tpu.memory_space<vmem>>, %arg8: memref<2x1x192xf32, #tpu.memory_space<vmem>>, %arg9: memref<2x64x64xf32, #tpu.memory_space<vmem>>, %arg10: memref<2x1x64xf32, #tpu.memory_space<vmem>>, %arg11: memref<2x64x128xf32, #tpu.memory_space<vmem>>, %arg12: memref<2x1x128xf32, #tpu.memory_space<vmem>>, %arg13: memref<2x128x64xf32, #tpu.memory_space<vmem>>, %arg14: memref<2x1x64xf32, #tpu.memory_space<vmem>>, %arg15: memref<2x1x64xf32, #tpu.memory_space<vmem>>, %arg16: memref<2x1x64xf32, #tpu.memory_space<vmem>>, %arg17: memref<2x1x64xf32, #tpu.memory_space<vmem>>, %arg18: memref<2x1x64xf32, #tpu.memory_space<vmem>>, %arg19: memref<2x1x64xf32, #tpu.memory_space<vmem>>, %arg20: memref<2x1x64xf32, #tpu.memory_space<vmem>>, %arg21: memref<1x64xf32, #tpu.memory_space<vmem>>, %arg22: memref<1x64xf32, #tpu.memory_space<vmem>>, %arg23: memref<64x256xf32, #tpu.memory_space<vmem>>, %arg24: memref<1x256xf32, #tpu.memory_space<vmem>>, %arg25: memref<1x8x256xf32, #tpu.memory_space<vmem>>) attributes {dimension_semantics = [#tpu.dimension_semantics<parallel>], iteration_bounds = array<i64: 2>, scalar_prefetch = 0 : i64, scratch_operands = 0 : i64, tpu.core_type = #tpu.core_type<tc>, window_params = [{transform_indices = @transform_0, window_bounds = array<i64: 1, 8, 64>}, {transform_indices = @transform_1, window_bounds = array<i64: 1, 8, 64>}, {pipeline_mode = #tpu.pipeline_mode<synchronous>, transform_indices = @transform_2, window_bounds = array<i64: 2, 64, 192>}, {pipeline_mode = #tpu.pipeline_mode<synchronous>, transform_indices = @transform_3, window_bounds = array<i64: 2, 1, 192>}, {pipeline_mode = #tpu.pipeline_mode<synchronous>, transform_indices = @transform_4, window_bounds = array<i64: 2, 64, 64>}, {pipeline_mode = #tpu.pipeline_mode<synchronous>, transform_indices = @transform_5, window_bounds = array<i64: 2, 1, 64>}, {pipeline_mode = #tpu.pipeline_mode<synchronous>, transform_indices = @transform_6, window_bounds = array<i64: 2, 64, 192>}, {pipeline_mode = #tpu.pipeline_mode<synchronous>, transform_indices = @transform_7, window_bounds = array<i64: 2, 1, 192>}, {pipeline_mode = #tpu.pipeline_mode<synchronous>, transform_indices = @transform_8, window_bounds = array<i64: 2, 64, 64>}, {pipeline_mode = #tpu.pipeline_mode<synchronous>, transform_indices = @transform_9, window_bounds = array<i64: 2, 1, 64>}, {pipeline_mode = #tpu.pipeline_mode<synchronous>, transform_indices = @transform_10, window_bounds = array<i64: 2, 64, 128>}, {pipeline_mode = #tpu.pipeline_mode<synchronous>, transform_indices = @transform_11, window_bounds = array<i64: 2, 1, 128>}, {pipeline_mode = #tpu.pipeline_mode<synchronous>, transform_indices = @transform_12, window_bounds = array<i64: 2, 128, 64>}, {pipeline_mode = #tpu.pipeline_mode<synchronous>, transform_indices = @transform_13, window_bounds = array<i64: 2, 1, 64>}, {pipeline_mode = #tpu.pipeline_mode<synchronous>, transform_indices = @transform_14, window_bounds = array<i64: 2, 1, 64>}, {pipeline_mode = #tpu.pipeline_mode<synchronous>, transform_indices = @transform_15, window_bounds = array<i64: 2, 1, 64>}, {pipeline_mode = #tpu.pipeline_mode<synchronous>, transform_indices = @transform_16, window_bounds = array<i64: 2, 1, 64>}, {pipeline_mode = #tpu.pipeline_mode<synchronous>, transform_indices = @transform_17, window_bounds = array<i64: 2, 1, 64>}, {pipeline_mode = #tpu.pipeline_mode<synchronous>, transform_indices = @transform_18, window_bounds = array<i64: 2, 1, 64>}, {pipeline_mode = #tpu.pipeline_mode<synchronous>, transform_indices = @transform_19, window_bounds = array<i64: 2, 1, 64>}, {pipeline_mode = #tpu.pipeline_mode<synchronous>, transform_indices = @transform_20, window_bounds = array<i64: 1, 64>}, {pipeline_mode = #tpu.pipeline_mode<synchronous>, transform_indices = @transform_21, window_bounds = array<i64: 1, 64>}, {pipeline_mode = #tpu.pipeline_mode<synchronous>, transform_indices = @transform_22, window_bounds = array<i64: 64, 256>}, {pipeline_mode = #tpu.pipeline_mode<synchronous>, transform_indices = @transform_23, window_bounds = array<i64: 1, 256>}, {transform_indices = @transform_24, window_bounds = array<i64: 1, 8, 256>}]} {
    %c0 = arith.constant 0 : index
    %c0_0 = arith.constant 0 : index
    %c0_1 = arith.constant 0 : index
    %0 = vector.load %arg1[%c0, %c0_0, %c0_1] : memref<1x8x64xf32, #tpu.memory_space<vmem>>, vector<1x8x64xf32>
    %1 = vector.shape_cast %0 : vector<1x8x64xf32> to vector<8x64xf32>
    %c0_2 = arith.constant 0 : index
    %c0_3 = arith.constant 0 : index
    %c0_4 = arith.constant 0 : index
    %2 = vector.load %arg2[%c0_2, %c0_3, %c0_4] : memref<1x8x64xf32, #tpu.memory_space<vmem>>, vector<1x8x64xf32>
    %3 = vector.shape_cast %2 : vector<1x8x64xf32> to vector<8x64xf32>
    %4 = tpu.iota {dimensions = array<i32: 0>} : vector<8x8xi32>
    %5 = tpu.iota {dimensions = array<i32: 1>} : vector<8x8xi32>
    %6 = arith.cmpi sle, %5, %4 : vector<8x8xi32>
    %cst = arith.constant 0.000000e+00 : f32
    %cst_5 = arith.constant -1.000000e+30 : f32
    %7 = vector.broadcast %cst : f32 to vector<8x8xf32>
    %8 = vector.broadcast %cst_5 : f32 to vector<8x8xf32>
    %9 = arith.select %6, %7, %8 : vector<8x8xi1>, vector<8x8xf32>
    %c0_6 = arith.constant 0 : index
    %c0_7 = arith.constant 0 : index
    %c0_8 = arith.constant 0 : index
    %10 = vector.load %arg3[%c0_6, %c0_7, %c0_8] : memref<2x64x192xf32, #tpu.memory_space<vmem>>, vector<1x64x192xf32>
    %11 = vector.shape_cast %10 : vector<1x64x192xf32> to vector<64x192xf32>
    %c0_9 = arith.constant 0 : index
    %c0_10 = arith.constant 0 : index
    %c0_11 = arith.constant 0 : index
    %12 = vector.load %arg4[%c0_9, %c0_10, %c0_11] : memref<2x1x192xf32, #tpu.memory_space<vmem>>, vector<1x1x192xf32>
    %13 = vector.shape_cast %12 : vector<1x1x192xf32> to vector<1x192xf32>
    %c0_12 = arith.constant 0 : index
    %c0_13 = arith.constant 0 : index
    %c0_14 = arith.constant 0 : index
    %14 = vector.load %arg5[%c0_12, %c0_13, %c0_14] : memref<2x64x64xf32, #tpu.memory_space<vmem>>, vector<1x64x64xf32>
    %15 = vector.shape_cast %14 : vector<1x64x64xf32> to vector<64x64xf32>
    %c0_15 = arith.constant 0 : index
    %c0_16 = arith.constant 0 : index
    %c0_17 = arith.constant 0 : index
    %16 = vector.load %arg6[%c0_15, %c0_16, %c0_17] : memref<2x1x64xf32, #tpu.memory_space<vmem>>, vector<1x1x64xf32>
    %17 = vector.shape_cast %16 : vector<1x1x64xf32> to vector<1x64xf32>
    %cst_18 = arith.constant dense<0.000000e+00> : vector<8x192xf32>
    %18 = tpu.matmul %1, %11, %cst_18 {dimension_numbers = #tpu.dot_dimension_numbers<[1], [0], [0], [1], [0, 0, 1, 1], [], []>} : vector<8x64xf32>, vector<64x192xf32>, vector<8x192xf32> -> vector<8x192xf32>
    %19 = vector.broadcast %13 : vector<1x192xf32> to vector<8x192xf32>
    %20 = arith.addf %18, %19 : vector<8x192xf32>
    %21 = vector.extract_strided_slice %20 {offsets = [0, 0], sizes = [8, 64], strides = [1, 1]} : vector<8x192xf32> to vector<8x64xf32>
    %22 = vector.extract_strided_slice %20 {offsets = [0, 64], sizes = [8, 64], strides = [1, 1]} : vector<8x192xf32> to vector<8x64xf32>
    %23 = vector.extract_strided_slice %20 {offsets = [0, 128], sizes = [8, 64], strides = [1, 1]} : vector<8x192xf32> to vector<8x64xf32>
    %24 = vector.extract_strided_slice %21 {offsets = [0, 0], sizes = [8, 16], strides = [1, 1]} : vector<8x64xf32> to vector<8x16xf32>
    %25 = vector.extract_strided_slice %22 {offsets = [0, 0], sizes = [8, 16], strides = [1, 1]} : vector<8x64xf32> to vector<8x16xf32>
    %cst_19 = arith.constant dense<0.000000e+00> : vector<8x8xf32>
    %26 = tpu.matmul %24, %25, %cst_19 {dimension_numbers = #tpu.dot_dimension_numbers<[1], [1], [0], [0], [0, 0, 1, 0], [], []>} : vector<8x16xf32>, vector<8x16xf32>, vector<8x8xf32> -> vector<8x8xf32>
    %cst_20 = arith.constant 2.500000e-01 : f32
    %27 = vector.broadcast %cst_20 : f32 to vector<8x8xf32>
    %28 = arith.mulf %26, %27 : vector<8x8xf32>
    %29 = arith.addf %28, %9 : vector<8x8xf32>
    %cst_21 = arith.constant dense<0xFF800000> : vector<8xf32>
    %30 = vector.multi_reduction <maximumf>, %29, %cst_21 [1] : vector<8x8xf32> to vector<8xf32>
    %31 = vector.shape_cast %30 : vector<8xf32> to vector<8x1xf32>
    %32 = vector.broadcast %31 : vector<8x1xf32> to vector<8x8xf32>
    %33 = arith.subf %29, %32 : vector<8x8xf32>
    %34 = math.exp %33 : vector<8x8xf32>
    %cst_22 = arith.constant dense<0.000000e+00> : vector<8xf32>
    %35 = vector.multi_reduction <add>, %34, %cst_22 [1] : vector<8x8xf32> to vector<8xf32>
    %36 = vector.shape_cast %35 : vector<8xf32> to vector<8x1xf32>
    %37 = tpu.reciprocal %36 {approx = true} : vector<8x1xf32> -> vector<8x1xf32>
    %38 = vector.broadcast %37 : vector<8x1xf32> to vector<8x8xf32>
    %39 = arith.mulf %34, %38 : vector<8x8xf32>
    %40 = vector.extract_strided_slice %23 {offsets = [0, 0], sizes = [8, 16], strides = [1, 1]} : vector<8x64xf32> to vector<8x16xf32>
    %cst_23 = arith.constant dense<0.000000e+00> : vector<8x16xf32>
    %41 = tpu.matmul %39, %40, %cst_23 {dimension_numbers = #tpu.dot_dimension_numbers<[1], [0], [0], [1], [0, 0, 1, 1], [], []>} : vector<8x8xf32>, vector<8x16xf32>, vector<8x16xf32> -> vector<8x16xf32>
    %42 = vector.extract_strided_slice %15 {offsets = [0, 0], sizes = [16, 64], strides = [1, 1]} : vector<64x64xf32> to vector<16x64xf32>
    %cst_24 = arith.constant dense<0.000000e+00> : vector<8x64xf32>
    %43 = tpu.matmul %41, %42, %cst_24 {dimension_numbers = #tpu.dot_dimension_numbers<[1], [0], [0], [1], [0, 0, 1, 1], [], []>} : vector<8x16xf32>, vector<16x64xf32>, vector<8x64xf32> -> vector<8x64xf32>
    %44 = vector.broadcast %17 : vector<1x64xf32> to vector<8x64xf32>
    %45 = arith.addf %44, %43 : vector<8x64xf32>
    %46 = vector.extract_strided_slice %21 {offsets = [0, 16], sizes = [8, 16], strides = [1, 1]} : vector<8x64xf32> to vector<8x16xf32>
    %47 = vector.extract_strided_slice %22 {offsets = [0, 16], sizes = [8, 16], strides = [1, 1]} : vector<8x64xf32> to vector<8x16xf32>
    %cst_25 = arith.constant dense<0.000000e+00> : vector<8x8xf32>
    %48 = tpu.matmul %46, %47, %cst_25 {dimension_numbers = #tpu.dot_dimension_numbers<[1], [1], [0], [0], [0, 0, 1, 0], [], []>} : vector<8x16xf32>, vector<8x16xf32>, vector<8x8xf32> -> vector<8x8xf32>
    %cst_26 = arith.constant 2.500000e-01 : f32
    %49 = vector.broadcast %cst_26 : f32 to vector<8x8xf32>
    %50 = arith.mulf %48, %49 : vector<8x8xf32>
    %51 = arith.addf %50, %9 : vector<8x8xf32>
    %cst_27 = arith.constant dense<0xFF800000> : vector<8xf32>
    %52 = vector.multi_reduction <maximumf>, %51, %cst_27 [1] : vector<8x8xf32> to vector<8xf32>
    %53 = vector.shape_cast %52 : vector<8xf32> to vector<8x1xf32>
    %54 = vector.broadcast %53 : vector<8x1xf32> to vector<8x8xf32>
    %55 = arith.subf %51, %54 : vector<8x8xf32>
    %56 = math.exp %55 : vector<8x8xf32>
    %cst_28 = arith.constant dense<0.000000e+00> : vector<8xf32>
    %57 = vector.multi_reduction <add>, %56, %cst_28 [1] : vector<8x8xf32> to vector<8xf32>
    %58 = vector.shape_cast %57 : vector<8xf32> to vector<8x1xf32>
    %59 = tpu.reciprocal %58 {approx = true} : vector<8x1xf32> -> vector<8x1xf32>
    %60 = vector.broadcast %59 : vector<8x1xf32> to vector<8x8xf32>
    %61 = arith.mulf %56, %60 : vector<8x8xf32>
    %62 = vector.extract_strided_slice %23 {offsets = [0, 16], sizes = [8, 16], strides = [1, 1]} : vector<8x64xf32> to vector<8x16xf32>
    %cst_29 = arith.constant dense<0.000000e+00> : vector<8x16xf32>
    %63 = tpu.matmul %61, %62, %cst_29 {dimension_numbers = #tpu.dot_dimension_numbers<[1], [0], [0], [1], [0, 0, 1, 1], [], []>} : vector<8x8xf32>, vector<8x16xf32>, vector<8x16xf32> -> vector<8x16xf32>
    %64 = vector.extract_strided_slice %15 {offsets = [16, 0], sizes = [16, 64], strides = [1, 1]} : vector<64x64xf32> to vector<16x64xf32>
    %cst_30 = arith.constant dense<0.000000e+00> : vector<8x64xf32>
    %65 = tpu.matmul %63, %64, %cst_30 {dimension_numbers = #tpu.dot_dimension_numbers<[1], [0], [0], [1], [0, 0, 1, 1], [], []>} : vector<8x16xf32>, vector<16x64xf32>, vector<8x64xf32> -> vector<8x64xf32>
    %66 = arith.addf %45, %65 : vector<8x64xf32>
    %67 = vector.extract_strided_slice %21 {offsets = [0, 32], sizes = [8, 16], strides = [1, 1]} : vector<8x64xf32> to vector<8x16xf32>
    %68 = vector.extract_strided_slice %22 {offsets = [0, 32], sizes = [8, 16], strides = [1, 1]} : vector<8x64xf32> to vector<8x16xf32>
    %cst_31 = arith.constant dense<0.000000e+00> : vector<8x8xf32>
    %69 = tpu.matmul %67, %68, %cst_31 {dimension_numbers = #tpu.dot_dimension_numbers<[1], [1], [0], [0], [0, 0, 1, 0], [], []>} : vector<8x16xf32>, vector<8x16xf32>, vector<8x8xf32> -> vector<8x8xf32>
    %cst_32 = arith.constant 2.500000e-01 : f32
    %70 = vector.broadcast %cst_32 : f32 to vector<8x8xf32>
    %71 = arith.mulf %69, %70 : vector<8x8xf32>
    %72 = arith.addf %71, %9 : vector<8x8xf32>
    %cst_33 = arith.constant dense<0xFF800000> : vector<8xf32>
    %73 = vector.multi_reduction <maximumf>, %72, %cst_33 [1] : vector<8x8xf32> to vector<8xf32>
    %74 = vector.shape_cast %73 : vector<8xf32> to vector<8x1xf32>
    %75 = vector.broadcast %74 : vector<8x1xf32> to vector<8x8xf32>
    %76 = arith.subf %72, %75 : vector<8x8xf32>
    %77 = math.exp %76 : vector<8x8xf32>
    %cst_34 = arith.constant dense<0.000000e+00> : vector<8xf32>
    %78 = vector.multi_reduction <add>, %77, %cst_34 [1] : vector<8x8xf32> to vector<8xf32>
    %79 = vector.shape_cast %78 : vector<8xf32> to vector<8x1xf32>
    %80 = tpu.reciprocal %79 {approx = true} : vector<8x1xf32> -> vector<8x1xf32>
    %81 = vector.broadcast %80 : vector<8x1xf32> to vector<8x8xf32>
    %82 = arith.mulf %77, %81 : vector<8x8xf32>
    %83 = vector.extract_strided_slice %23 {offsets = [0, 32], sizes = [8, 16], strides = [1, 1]} : vector<8x64xf32> to vector<8x16xf32>
    %cst_35 = arith.constant dense<0.000000e+00> : vector<8x16xf32>
    %84 = tpu.matmul %82, %83, %cst_35 {dimension_numbers = #tpu.dot_dimension_numbers<[1], [0], [0], [1], [0, 0, 1, 1], [], []>} : vector<8x8xf32>, vector<8x16xf32>, vector<8x16xf32> -> vector<8x16xf32>
    %85 = vector.extract_strided_slice %15 {offsets = [32, 0], sizes = [16, 64], strides = [1, 1]} : vector<64x64xf32> to vector<16x64xf32>
    %cst_36 = arith.constant dense<0.000000e+00> : vector<8x64xf32>
    %86 = tpu.matmul %84, %85, %cst_36 {dimension_numbers = #tpu.dot_dimension_numbers<[1], [0], [0], [1], [0, 0, 1, 1], [], []>} : vector<8x16xf32>, vector<16x64xf32>, vector<8x64xf32> -> vector<8x64xf32>
    %87 = arith.addf %66, %86 : vector<8x64xf32>
    %88 = vector.extract_strided_slice %21 {offsets = [0, 48], sizes = [8, 16], strides = [1, 1]} : vector<8x64xf32> to vector<8x16xf32>
    %89 = vector.extract_strided_slice %22 {offsets = [0, 48], sizes = [8, 16], strides = [1, 1]} : vector<8x64xf32> to vector<8x16xf32>
    %cst_37 = arith.constant dense<0.000000e+00> : vector<8x8xf32>
    %90 = tpu.matmul %88, %89, %cst_37 {dimension_numbers = #tpu.dot_dimension_numbers<[1], [1], [0], [0], [0, 0, 1, 0], [], []>} : vector<8x16xf32>, vector<8x16xf32>, vector<8x8xf32> -> vector<8x8xf32>
    %cst_38 = arith.constant 2.500000e-01 : f32
    %91 = vector.broadcast %cst_38 : f32 to vector<8x8xf32>
    %92 = arith.mulf %90, %91 : vector<8x8xf32>
    %93 = arith.addf %92, %9 : vector<8x8xf32>
    %cst_39 = arith.constant dense<0xFF800000> : vector<8xf32>
    %94 = vector.multi_reduction <maximumf>, %93, %cst_39 [1] : vector<8x8xf32> to vector<8xf32>
    %95 = vector.shape_cast %94 : vector<8xf32> to vector<8x1xf32>
    %96 = vector.broadcast %95 : vector<8x1xf32> to vector<8x8xf32>
    %97 = arith.subf %93, %96 : vector<8x8xf32>
    %98 = math.exp %97 : vector<8x8xf32>
    %cst_40 = arith.constant dense<0.000000e+00> : vector<8xf32>
    %99 = vector.multi_reduction <add>, %98, %cst_40 [1] : vector<8x8xf32> to vector<8xf32>
    %100 = vector.shape_cast %99 : vector<8xf32> to vector<8x1xf32>
    %101 = tpu.reciprocal %100 {approx = true} : vector<8x1xf32> -> vector<8x1xf32>
    %102 = vector.broadcast %101 : vector<8x1xf32> to vector<8x8xf32>
    %103 = arith.mulf %98, %102 : vector<8x8xf32>
    %104 = vector.extract_strided_slice %23 {offsets = [0, 48], sizes = [8, 16], strides = [1, 1]} : vector<8x64xf32> to vector<8x16xf32>
    %cst_41 = arith.constant dense<0.000000e+00> : vector<8x16xf32>
    %105 = tpu.matmul %103, %104, %cst_41 {dimension_numbers = #tpu.dot_dimension_numbers<[1], [0], [0], [1], [0, 0, 1, 1], [], []>} : vector<8x8xf32>, vector<8x16xf32>, vector<8x16xf32> -> vector<8x16xf32>
    %106 = vector.extract_strided_slice %15 {offsets = [48, 0], sizes = [16, 64], strides = [1, 1]} : vector<64x64xf32> to vector<16x64xf32>
    %cst_42 = arith.constant dense<0.000000e+00> : vector<8x64xf32>
    %107 = tpu.matmul %105, %106, %cst_42 {dimension_numbers = #tpu.dot_dimension_numbers<[1], [0], [0], [1], [0, 0, 1, 1], [], []>} : vector<8x16xf32>, vector<16x64xf32>, vector<8x64xf32> -> vector<8x64xf32>
    %108 = arith.addf %87, %107 : vector<8x64xf32>
    %109 = arith.addf %1, %108 : vector<8x64xf32>
    %c0_43 = arith.constant 0 : index
    %c0_44 = arith.constant 0 : index
    %c0_45 = arith.constant 0 : index
    %110 = vector.load %arg15[%c0_43, %c0_44, %c0_45] : memref<2x1x64xf32, #tpu.memory_space<vmem>>, vector<1x1x64xf32>
    %111 = vector.shape_cast %110 : vector<1x1x64xf32> to vector<1x64xf32>
    %c0_46 = arith.constant 0 : index
    %c0_47 = arith.constant 0 : index
    %c0_48 = arith.constant 0 : index
    %112 = vector.load %arg16[%c0_46, %c0_47, %c0_48] : memref<2x1x64xf32, #tpu.memory_space<vmem>>, vector<1x1x64xf32>
    %113 = vector.shape_cast %112 : vector<1x1x64xf32> to vector<1x64xf32>
    %cst_49 = arith.constant dense<0.000000e+00> : vector<8xf32>
    %114 = vector.multi_reduction <add>, %109, %cst_49 [1] : vector<8x64xf32> to vector<8xf32>
    %115 = vector.shape_cast %114 : vector<8xf32> to vector<8x1xf32>
    %cst_50 = arith.constant 6.400000e+01 : f32
    %116 = vector.broadcast %cst_50 : f32 to vector<8x1xf32>
    %117 = arith.divf %115, %116 : vector<8x1xf32>
    %118 = vector.broadcast %117 : vector<8x1xf32> to vector<8x64xf32>
    %119 = arith.subf %109, %118 : vector<8x64xf32>
    %120 = arith.mulf %119, %119 : vector<8x64xf32>
    %cst_51 = arith.constant dense<0.000000e+00> : vector<8xf32>
    %121 = vector.multi_reduction <add>, %120, %cst_51 [1] : vector<8x64xf32> to vector<8xf32>
    %122 = vector.shape_cast %121 : vector<8xf32> to vector<8x1xf32>
    %cst_52 = arith.constant 6.400000e+01 : f32
    %123 = vector.broadcast %cst_52 : f32 to vector<8x1xf32>
    %124 = arith.divf %122, %123 : vector<8x1xf32>
    %cst_53 = arith.constant 9.99999974E-6 : f32
    %125 = vector.broadcast %cst_53 : f32 to vector<8x1xf32>
    %126 = arith.addf %124, %125 : vector<8x1xf32>
    %127 = math.rsqrt %126 : vector<8x1xf32>
    %128 = vector.broadcast %127 : vector<8x1xf32> to vector<8x64xf32>
    %129 = arith.mulf %119, %128 : vector<8x64xf32>
    %130 = vector.broadcast %111 : vector<1x64xf32> to vector<8x64xf32>
    %131 = arith.mulf %129, %130 : vector<8x64xf32>
    %132 = vector.broadcast %113 : vector<1x64xf32> to vector<8x64xf32>
    %133 = arith.addf %131, %132 : vector<8x64xf32>
    %c0_54 = arith.constant 0 : index
    %c0_55 = arith.constant 0 : index
    %c0_56 = arith.constant 0 : index
    %134 = vector.load %arg7[%c0_54, %c0_55, %c0_56] : memref<2x64x192xf32, #tpu.memory_space<vmem>>, vector<1x64x192xf32>
    %135 = vector.shape_cast %134 : vector<1x64x192xf32> to vector<64x192xf32>
    %c0_57 = arith.constant 0 : index
    %c0_58 = arith.constant 0 : index
    %c0_59 = arith.constant 0 : index
    %136 = vector.load %arg8[%c0_57, %c0_58, %c0_59] : memref<2x1x192xf32, #tpu.memory_space<vmem>>, vector<1x1x192xf32>
    %137 = vector.shape_cast %136 : vector<1x1x192xf32> to vector<1x192xf32>
    %c0_60 = arith.constant 0 : index
    %c0_61 = arith.constant 0 : index
    %c0_62 = arith.constant 0 : index
    %138 = vector.load %arg9[%c0_60, %c0_61, %c0_62] : memref<2x64x64xf32, #tpu.memory_space<vmem>>, vector<1x64x64xf32>
    %139 = vector.shape_cast %138 : vector<1x64x64xf32> to vector<64x64xf32>
    %c0_63 = arith.constant 0 : index
    %c0_64 = arith.constant 0 : index
    %c0_65 = arith.constant 0 : index
    %140 = vector.load %arg10[%c0_63, %c0_64, %c0_65] : memref<2x1x64xf32, #tpu.memory_space<vmem>>, vector<1x1x64xf32>
    %141 = vector.shape_cast %140 : vector<1x1x64xf32> to vector<1x64xf32>
    %142 = vector.extract_strided_slice %135 {offsets = [0, 0], sizes = [64, 64], strides = [1, 1]} : vector<64x192xf32> to vector<64x64xf32>
    %cst_66 = arith.constant dense<0.000000e+00> : vector<8x64xf32>
    %143 = tpu.matmul %133, %142, %cst_66 {dimension_numbers = #tpu.dot_dimension_numbers<[1], [0], [0], [1], [0, 0, 1, 1], [], []>} : vector<8x64xf32>, vector<64x64xf32>, vector<8x64xf32> -> vector<8x64xf32>
    %144 = vector.extract_strided_slice %137 {offsets = [0, 0], sizes = [1, 64], strides = [1, 1]} : vector<1x192xf32> to vector<1x64xf32>
    %145 = vector.broadcast %144 : vector<1x64xf32> to vector<8x64xf32>
    %146 = arith.addf %143, %145 : vector<8x64xf32>
    %147 = vector.extract_strided_slice %135 {offsets = [0, 64], sizes = [64, 128], strides = [1, 1]} : vector<64x192xf32> to vector<64x128xf32>
    %cst_67 = arith.constant dense<0.000000e+00> : vector<8x128xf32>
    %148 = tpu.matmul %3, %147, %cst_67 {dimension_numbers = #tpu.dot_dimension_numbers<[1], [0], [0], [1], [0, 0, 1, 1], [], []>} : vector<8x64xf32>, vector<64x128xf32>, vector<8x128xf32> -> vector<8x128xf32>
    %149 = vector.extract_strided_slice %137 {offsets = [0, 64], sizes = [1, 128], strides = [1, 1]} : vector<1x192xf32> to vector<1x128xf32>
    %150 = vector.broadcast %149 : vector<1x128xf32> to vector<8x128xf32>
    %151 = arith.addf %148, %150 : vector<8x128xf32>
    %152 = vector.extract_strided_slice %151 {offsets = [0, 0], sizes = [8, 64], strides = [1, 1]} : vector<8x128xf32> to vector<8x64xf32>
    %153 = vector.extract_strided_slice %151 {offsets = [0, 64], sizes = [8, 64], strides = [1, 1]} : vector<8x128xf32> to vector<8x64xf32>
    %154 = vector.extract_strided_slice %146 {offsets = [0, 0], sizes = [8, 16], strides = [1, 1]} : vector<8x64xf32> to vector<8x16xf32>
    %155 = vector.extract_strided_slice %152 {offsets = [0, 0], sizes = [8, 16], strides = [1, 1]} : vector<8x64xf32> to vector<8x16xf32>
    %cst_68 = arith.constant dense<0.000000e+00> : vector<8x8xf32>
    %156 = tpu.matmul %154, %155, %cst_68 {dimension_numbers = #tpu.dot_dimension_numbers<[1], [1], [0], [0], [0, 0, 1, 0], [], []>} : vector<8x16xf32>, vector<8x16xf32>, vector<8x8xf32> -> vector<8x8xf32>
    %cst_69 = arith.constant 2.500000e-01 : f32
    %157 = vector.broadcast %cst_69 : f32 to vector<8x8xf32>
    %158 = arith.mulf %156, %157 : vector<8x8xf32>
    %cst_70 = arith.constant dense<0xFF800000> : vector<8xf32>
    %159 = vector.multi_reduction <maximumf>, %158, %cst_70 [1] : vector<8x8xf32> to vector<8xf32>
    %160 = vector.shape_cast %159 : vector<8xf32> to vector<8x1xf32>
    %161 = vector.broadcast %160 : vector<8x1xf32> to vector<8x8xf32>
    %162 = arith.subf %158, %161 : vector<8x8xf32>
    %163 = math.exp %162 : vector<8x8xf32>
    %cst_71 = arith.constant dense<0.000000e+00> : vector<8xf32>
    %164 = vector.multi_reduction <add>, %163, %cst_71 [1] : vector<8x8xf32> to vector<8xf32>
    %165 = vector.shape_cast %164 : vector<8xf32> to vector<8x1xf32>
    %166 = tpu.reciprocal %165 {approx = true} : vector<8x1xf32> -> vector<8x1xf32>
    %167 = vector.broadcast %166 : vector<8x1xf32> to vector<8x8xf32>
    %168 = arith.mulf %163, %167 : vector<8x8xf32>
    %169 = vector.extract_strided_slice %153 {offsets = [0, 0], sizes = [8, 16], strides = [1, 1]} : vector<8x64xf32> to vector<8x16xf32>
    %cst_72 = arith.constant dense<0.000000e+00> : vector<8x16xf32>
    %170 = tpu.matmul %168, %169, %cst_72 {dimension_numbers = #tpu.dot_dimension_numbers<[1], [0], [0], [1], [0, 0, 1, 1], [], []>} : vector<8x8xf32>, vector<8x16xf32>, vector<8x16xf32> -> vector<8x16xf32>
    %171 = vector.extract_strided_slice %139 {offsets = [0, 0], sizes = [16, 64], strides = [1, 1]} : vector<64x64xf32> to vector<16x64xf32>
    %cst_73 = arith.constant dense<0.000000e+00> : vector<8x64xf32>
    %172 = tpu.matmul %170, %171, %cst_73 {dimension_numbers = #tpu.dot_dimension_numbers<[1], [0], [0], [1], [0, 0, 1, 1], [], []>} : vector<8x16xf32>, vector<16x64xf32>, vector<8x64xf32> -> vector<8x64xf32>
    %173 = vector.broadcast %141 : vector<1x64xf32> to vector<8x64xf32>
    %174 = arith.addf %173, %172 : vector<8x64xf32>
    %175 = vector.extract_strided_slice %146 {offsets = [0, 16], sizes = [8, 16], strides = [1, 1]} : vector<8x64xf32> to vector<8x16xf32>
    %176 = vector.extract_strided_slice %152 {offsets = [0, 16], sizes = [8, 16], strides = [1, 1]} : vector<8x64xf32> to vector<8x16xf32>
    %cst_74 = arith.constant dense<0.000000e+00> : vector<8x8xf32>
    %177 = tpu.matmul %175, %176, %cst_74 {dimension_numbers = #tpu.dot_dimension_numbers<[1], [1], [0], [0], [0, 0, 1, 0], [], []>} : vector<8x16xf32>, vector<8x16xf32>, vector<8x8xf32> -> vector<8x8xf32>
    %cst_75 = arith.constant 2.500000e-01 : f32
    %178 = vector.broadcast %cst_75 : f32 to vector<8x8xf32>
    %179 = arith.mulf %177, %178 : vector<8x8xf32>
    %cst_76 = arith.constant dense<0xFF800000> : vector<8xf32>
    %180 = vector.multi_reduction <maximumf>, %179, %cst_76 [1] : vector<8x8xf32> to vector<8xf32>
    %181 = vector.shape_cast %180 : vector<8xf32> to vector<8x1xf32>
    %182 = vector.broadcast %181 : vector<8x1xf32> to vector<8x8xf32>
    %183 = arith.subf %179, %182 : vector<8x8xf32>
    %184 = math.exp %183 : vector<8x8xf32>
    %cst_77 = arith.constant dense<0.000000e+00> : vector<8xf32>
    %185 = vector.multi_reduction <add>, %184, %cst_77 [1] : vector<8x8xf32> to vector<8xf32>
    %186 = vector.shape_cast %185 : vector<8xf32> to vector<8x1xf32>
    %187 = tpu.reciprocal %186 {approx = true} : vector<8x1xf32> -> vector<8x1xf32>
    %188 = vector.broadcast %187 : vector<8x1xf32> to vector<8x8xf32>
    %189 = arith.mulf %184, %188 : vector<8x8xf32>
    %190 = vector.extract_strided_slice %153 {offsets = [0, 16], sizes = [8, 16], strides = [1, 1]} : vector<8x64xf32> to vector<8x16xf32>
    %cst_78 = arith.constant dense<0.000000e+00> : vector<8x16xf32>
    %191 = tpu.matmul %189, %190, %cst_78 {dimension_numbers = #tpu.dot_dimension_numbers<[1], [0], [0], [1], [0, 0, 1, 1], [], []>} : vector<8x8xf32>, vector<8x16xf32>, vector<8x16xf32> -> vector<8x16xf32>
    %192 = vector.extract_strided_slice %139 {offsets = [16, 0], sizes = [16, 64], strides = [1, 1]} : vector<64x64xf32> to vector<16x64xf32>
    %cst_79 = arith.constant dense<0.000000e+00> : vector<8x64xf32>
    %193 = tpu.matmul %191, %192, %cst_79 {dimension_numbers = #tpu.dot_dimension_numbers<[1], [0], [0], [1], [0, 0, 1, 1], [], []>} : vector<8x16xf32>, vector<16x64xf32>, vector<8x64xf32> -> vector<8x64xf32>
    %194 = arith.addf %174, %193 : vector<8x64xf32>
    %195 = vector.extract_strided_slice %146 {offsets = [0, 32], sizes = [8, 16], strides = [1, 1]} : vector<8x64xf32> to vector<8x16xf32>
    %196 = vector.extract_strided_slice %152 {offsets = [0, 32], sizes = [8, 16], strides = [1, 1]} : vector<8x64xf32> to vector<8x16xf32>
    %cst_80 = arith.constant dense<0.000000e+00> : vector<8x8xf32>
    %197 = tpu.matmul %195, %196, %cst_80 {dimension_numbers = #tpu.dot_dimension_numbers<[1], [1], [0], [0], [0, 0, 1, 0], [], []>} : vector<8x16xf32>, vector<8x16xf32>, vector<8x8xf32> -> vector<8x8xf32>
    %cst_81 = arith.constant 2.500000e-01 : f32
    %198 = vector.broadcast %cst_81 : f32 to vector<8x8xf32>
    %199 = arith.mulf %197, %198 : vector<8x8xf32>
    %cst_82 = arith.constant dense<0xFF800000> : vector<8xf32>
    %200 = vector.multi_reduction <maximumf>, %199, %cst_82 [1] : vector<8x8xf32> to vector<8xf32>
    %201 = vector.shape_cast %200 : vector<8xf32> to vector<8x1xf32>
    %202 = vector.broadcast %201 : vector<8x1xf32> to vector<8x8xf32>
    %203 = arith.subf %199, %202 : vector<8x8xf32>
    %204 = math.exp %203 : vector<8x8xf32>
    %cst_83 = arith.constant dense<0.000000e+00> : vector<8xf32>
    %205 = vector.multi_reduction <add>, %204, %cst_83 [1] : vector<8x8xf32> to vector<8xf32>
    %206 = vector.shape_cast %205 : vector<8xf32> to vector<8x1xf32>
    %207 = tpu.reciprocal %206 {approx = true} : vector<8x1xf32> -> vector<8x1xf32>
    %208 = vector.broadcast %207 : vector<8x1xf32> to vector<8x8xf32>
    %209 = arith.mulf %204, %208 : vector<8x8xf32>
    %210 = vector.extract_strided_slice %153 {offsets = [0, 32], sizes = [8, 16], strides = [1, 1]} : vector<8x64xf32> to vector<8x16xf32>
    %cst_84 = arith.constant dense<0.000000e+00> : vector<8x16xf32>
    %211 = tpu.matmul %209, %210, %cst_84 {dimension_numbers = #tpu.dot_dimension_numbers<[1], [0], [0], [1], [0, 0, 1, 1], [], []>} : vector<8x8xf32>, vector<8x16xf32>, vector<8x16xf32> -> vector<8x16xf32>
    %212 = vector.extract_strided_slice %139 {offsets = [32, 0], sizes = [16, 64], strides = [1, 1]} : vector<64x64xf32> to vector<16x64xf32>
    %cst_85 = arith.constant dense<0.000000e+00> : vector<8x64xf32>
    %213 = tpu.matmul %211, %212, %cst_85 {dimension_numbers = #tpu.dot_dimension_numbers<[1], [0], [0], [1], [0, 0, 1, 1], [], []>} : vector<8x16xf32>, vector<16x64xf32>, vector<8x64xf32> -> vector<8x64xf32>
    %214 = arith.addf %194, %213 : vector<8x64xf32>
    %215 = vector.extract_strided_slice %146 {offsets = [0, 48], sizes = [8, 16], strides = [1, 1]} : vector<8x64xf32> to vector<8x16xf32>
    %216 = vector.extract_strided_slice %152 {offsets = [0, 48], sizes = [8, 16], strides = [1, 1]} : vector<8x64xf32> to vector<8x16xf32>
    %cst_86 = arith.constant dense<0.000000e+00> : vector<8x8xf32>
    %217 = tpu.matmul %215, %216, %cst_86 {dimension_numbers = #tpu.dot_dimension_numbers<[1], [1], [0], [0], [0, 0, 1, 0], [], []>} : vector<8x16xf32>, vector<8x16xf32>, vector<8x8xf32> -> vector<8x8xf32>
    %cst_87 = arith.constant 2.500000e-01 : f32
    %218 = vector.broadcast %cst_87 : f32 to vector<8x8xf32>
    %219 = arith.mulf %217, %218 : vector<8x8xf32>
    %cst_88 = arith.constant dense<0xFF800000> : vector<8xf32>
    %220 = vector.multi_reduction <maximumf>, %219, %cst_88 [1] : vector<8x8xf32> to vector<8xf32>
    %221 = vector.shape_cast %220 : vector<8xf32> to vector<8x1xf32>
    %222 = vector.broadcast %221 : vector<8x1xf32> to vector<8x8xf32>
    %223 = arith.subf %219, %222 : vector<8x8xf32>
    %224 = math.exp %223 : vector<8x8xf32>
    %cst_89 = arith.constant dense<0.000000e+00> : vector<8xf32>
    %225 = vector.multi_reduction <add>, %224, %cst_89 [1] : vector<8x8xf32> to vector<8xf32>
    %226 = vector.shape_cast %225 : vector<8xf32> to vector<8x1xf32>
    %227 = tpu.reciprocal %226 {approx = true} : vector<8x1xf32> -> vector<8x1xf32>
    %228 = vector.broadcast %227 : vector<8x1xf32> to vector<8x8xf32>
    %229 = arith.mulf %224, %228 : vector<8x8xf32>
    %230 = vector.extract_strided_slice %153 {offsets = [0, 48], sizes = [8, 16], strides = [1, 1]} : vector<8x64xf32> to vector<8x16xf32>
    %cst_90 = arith.constant dense<0.000000e+00> : vector<8x16xf32>
    %231 = tpu.matmul %229, %230, %cst_90 {dimension_numbers = #tpu.dot_dimension_numbers<[1], [0], [0], [1], [0, 0, 1, 1], [], []>} : vector<8x8xf32>, vector<8x16xf32>, vector<8x16xf32> -> vector<8x16xf32>
    %232 = vector.extract_strided_slice %139 {offsets = [48, 0], sizes = [16, 64], strides = [1, 1]} : vector<64x64xf32> to vector<16x64xf32>
    %cst_91 = arith.constant dense<0.000000e+00> : vector<8x64xf32>
    %233 = tpu.matmul %231, %232, %cst_91 {dimension_numbers = #tpu.dot_dimension_numbers<[1], [0], [0], [1], [0, 0, 1, 1], [], []>} : vector<8x16xf32>, vector<16x64xf32>, vector<8x64xf32> -> vector<8x64xf32>
    %234 = arith.addf %214, %233 : vector<8x64xf32>
    %235 = arith.addf %133, %234 : vector<8x64xf32>
    %c0_92 = arith.constant 0 : index
    %c0_93 = arith.constant 0 : index
    %c0_94 = arith.constant 0 : index
    %236 = vector.load %arg17[%c0_92, %c0_93, %c0_94] : memref<2x1x64xf32, #tpu.memory_space<vmem>>, vector<1x1x64xf32>
    %237 = vector.shape_cast %236 : vector<1x1x64xf32> to vector<1x64xf32>
    %c0_95 = arith.constant 0 : index
    %c0_96 = arith.constant 0 : index
    %c0_97 = arith.constant 0 : index
    %238 = vector.load %arg18[%c0_95, %c0_96, %c0_97] : memref<2x1x64xf32, #tpu.memory_space<vmem>>, vector<1x1x64xf32>
    %239 = vector.shape_cast %238 : vector<1x1x64xf32> to vector<1x64xf32>
    %cst_98 = arith.constant dense<0.000000e+00> : vector<8xf32>
    %240 = vector.multi_reduction <add>, %235, %cst_98 [1] : vector<8x64xf32> to vector<8xf32>
    %241 = vector.shape_cast %240 : vector<8xf32> to vector<8x1xf32>
    %cst_99 = arith.constant 6.400000e+01 : f32
    %242 = vector.broadcast %cst_99 : f32 to vector<8x1xf32>
    %243 = arith.divf %241, %242 : vector<8x1xf32>
    %244 = vector.broadcast %243 : vector<8x1xf32> to vector<8x64xf32>
    %245 = arith.subf %235, %244 : vector<8x64xf32>
    %246 = arith.mulf %245, %245 : vector<8x64xf32>
    %cst_100 = arith.constant dense<0.000000e+00> : vector<8xf32>
    %247 = vector.multi_reduction <add>, %246, %cst_100 [1] : vector<8x64xf32> to vector<8xf32>
    %248 = vector.shape_cast %247 : vector<8xf32> to vector<8x1xf32>
    %cst_101 = arith.constant 6.400000e+01 : f32
    %249 = vector.broadcast %cst_101 : f32 to vector<8x1xf32>
    %250 = arith.divf %248, %249 : vector<8x1xf32>
    %cst_102 = arith.constant 9.99999974E-6 : f32
    %251 = vector.broadcast %cst_102 : f32 to vector<8x1xf32>
    %252 = arith.addf %250, %251 : vector<8x1xf32>
    %253 = math.rsqrt %252 : vector<8x1xf32>
    %254 = vector.broadcast %253 : vector<8x1xf32> to vector<8x64xf32>
    %255 = arith.mulf %245, %254 : vector<8x64xf32>
    %256 = vector.broadcast %237 : vector<1x64xf32> to vector<8x64xf32>
    %257 = arith.mulf %255, %256 : vector<8x64xf32>
    %258 = vector.broadcast %239 : vector<1x64xf32> to vector<8x64xf32>
    %259 = arith.addf %257, %258 : vector<8x64xf32>
    %c0_103 = arith.constant 0 : index
    %c0_104 = arith.constant 0 : index
    %c0_105 = arith.constant 0 : index
    %260 = vector.load %arg11[%c0_103, %c0_104, %c0_105] : memref<2x64x128xf32, #tpu.memory_space<vmem>>, vector<1x64x128xf32>
    %261 = vector.shape_cast %260 : vector<1x64x128xf32> to vector<64x128xf32>
    %cst_106 = arith.constant dense<0.000000e+00> : vector<8x128xf32>
    %262 = tpu.matmul %259, %261, %cst_106 {dimension_numbers = #tpu.dot_dimension_numbers<[1], [0], [0], [1], [0, 0, 1, 1], [], []>} : vector<8x64xf32>, vector<64x128xf32>, vector<8x128xf32> -> vector<8x128xf32>
    %c0_107 = arith.constant 0 : index
    %c0_108 = arith.constant 0 : index
    %c0_109 = arith.constant 0 : index
    %263 = vector.load %arg12[%c0_107, %c0_108, %c0_109] : memref<2x1x128xf32, #tpu.memory_space<vmem>>, vector<1x1x128xf32>
    %264 = vector.shape_cast %263 : vector<1x1x128xf32> to vector<1x128xf32>
    %265 = vector.broadcast %264 : vector<1x128xf32> to vector<8x128xf32>
    %266 = arith.addf %262, %265 : vector<8x128xf32>
    %cst_110 = arith.constant 0.000000e+00 : f32
    %267 = vector.broadcast %cst_110 : f32 to vector<8x128xf32>
    %268 = arith.maximumf %266, %267 : vector<8x128xf32>
    %c0_111 = arith.constant 0 : index
    %c0_112 = arith.constant 0 : index
    %c0_113 = arith.constant 0 : index
    %269 = vector.load %arg13[%c0_111, %c0_112, %c0_113] : memref<2x128x64xf32, #tpu.memory_space<vmem>>, vector<1x128x64xf32>
    %270 = vector.shape_cast %269 : vector<1x128x64xf32> to vector<128x64xf32>
    %cst_114 = arith.constant dense<0.000000e+00> : vector<8x64xf32>
    %271 = tpu.matmul %268, %270, %cst_114 {dimension_numbers = #tpu.dot_dimension_numbers<[1], [0], [0], [1], [0, 0, 1, 1], [], []>} : vector<8x128xf32>, vector<128x64xf32>, vector<8x64xf32> -> vector<8x64xf32>
    %c0_115 = arith.constant 0 : index
    %c0_116 = arith.constant 0 : index
    %c0_117 = arith.constant 0 : index
    %272 = vector.load %arg14[%c0_115, %c0_116, %c0_117] : memref<2x1x64xf32, #tpu.memory_space<vmem>>, vector<1x1x64xf32>
    %273 = vector.shape_cast %272 : vector<1x1x64xf32> to vector<1x64xf32>
    %274 = vector.broadcast %273 : vector<1x64xf32> to vector<8x64xf32>
    %275 = arith.addf %271, %274 : vector<8x64xf32>
    %276 = arith.addf %259, %275 : vector<8x64xf32>
    %c0_118 = arith.constant 0 : index
    %c0_119 = arith.constant 0 : index
    %c0_120 = arith.constant 0 : index
    %277 = vector.load %arg19[%c0_118, %c0_119, %c0_120] : memref<2x1x64xf32, #tpu.memory_space<vmem>>, vector<1x1x64xf32>
    %278 = vector.shape_cast %277 : vector<1x1x64xf32> to vector<1x64xf32>
    %c0_121 = arith.constant 0 : index
    %c0_122 = arith.constant 0 : index
    %c0_123 = arith.constant 0 : index
    %279 = vector.load %arg20[%c0_121, %c0_122, %c0_123] : memref<2x1x64xf32, #tpu.memory_space<vmem>>, vector<1x1x64xf32>
    %280 = vector.shape_cast %279 : vector<1x1x64xf32> to vector<1x64xf32>
    %cst_124 = arith.constant dense<0.000000e+00> : vector<8xf32>
    %281 = vector.multi_reduction <add>, %276, %cst_124 [1] : vector<8x64xf32> to vector<8xf32>
    %282 = vector.shape_cast %281 : vector<8xf32> to vector<8x1xf32>
    %cst_125 = arith.constant 6.400000e+01 : f32
    %283 = vector.broadcast %cst_125 : f32 to vector<8x1xf32>
    %284 = arith.divf %282, %283 : vector<8x1xf32>
    %285 = vector.broadcast %284 : vector<8x1xf32> to vector<8x64xf32>
    %286 = arith.subf %276, %285 : vector<8x64xf32>
    %287 = arith.mulf %286, %286 : vector<8x64xf32>
    %cst_126 = arith.constant dense<0.000000e+00> : vector<8xf32>
    %288 = vector.multi_reduction <add>, %287, %cst_126 [1] : vector<8x64xf32> to vector<8xf32>
    %289 = vector.shape_cast %288 : vector<8xf32> to vector<8x1xf32>
    %cst_127 = arith.constant 6.400000e+01 : f32
    %290 = vector.broadcast %cst_127 : f32 to vector<8x1xf32>
    %291 = arith.divf %289, %290 : vector<8x1xf32>
    %cst_128 = arith.constant 9.99999974E-6 : f32
    %292 = vector.broadcast %cst_128 : f32 to vector<8x1xf32>
    %293 = arith.addf %291, %292 : vector<8x1xf32>
    %294 = math.rsqrt %293 : vector<8x1xf32>
    %295 = vector.broadcast %294 : vector<8x1xf32> to vector<8x64xf32>
    %296 = arith.mulf %286, %295 : vector<8x64xf32>
    %297 = vector.broadcast %278 : vector<1x64xf32> to vector<8x64xf32>
    %298 = arith.mulf %296, %297 : vector<8x64xf32>
    %299 = vector.broadcast %280 : vector<1x64xf32> to vector<8x64xf32>
    %300 = arith.addf %298, %299 : vector<8x64xf32>
    %c1 = arith.constant 1 : index
    %c0_129 = arith.constant 0 : index
    %c0_130 = arith.constant 0 : index
    %301 = vector.load %arg3[%c1, %c0_129, %c0_130] : memref<2x64x192xf32, #tpu.memory_space<vmem>>, vector<1x64x192xf32>
    %302 = vector.shape_cast %301 : vector<1x64x192xf32> to vector<64x192xf32>
    %c1_131 = arith.constant 1 : index
    %c0_132 = arith.constant 0 : index
    %c0_133 = arith.constant 0 : index
    %303 = vector.load %arg4[%c1_131, %c0_132, %c0_133] : memref<2x1x192xf32, #tpu.memory_space<vmem>>, vector<1x1x192xf32>
    %304 = vector.shape_cast %303 : vector<1x1x192xf32> to vector<1x192xf32>
    %c1_134 = arith.constant 1 : index
    %c0_135 = arith.constant 0 : index
    %c0_136 = arith.constant 0 : index
    %305 = vector.load %arg5[%c1_134, %c0_135, %c0_136] : memref<2x64x64xf32, #tpu.memory_space<vmem>>, vector<1x64x64xf32>
    %306 = vector.shape_cast %305 : vector<1x64x64xf32> to vector<64x64xf32>
    %c1_137 = arith.constant 1 : index
    %c0_138 = arith.constant 0 : index
    %c0_139 = arith.constant 0 : index
    %307 = vector.load %arg6[%c1_137, %c0_138, %c0_139] : memref<2x1x64xf32, #tpu.memory_space<vmem>>, vector<1x1x64xf32>
    %308 = vector.shape_cast %307 : vector<1x1x64xf32> to vector<1x64xf32>
    %cst_140 = arith.constant dense<0.000000e+00> : vector<8x192xf32>
    %309 = tpu.matmul %300, %302, %cst_140 {dimension_numbers = #tpu.dot_dimension_numbers<[1], [0], [0], [1], [0, 0, 1, 1], [], []>} : vector<8x64xf32>, vector<64x192xf32>, vector<8x192xf32> -> vector<8x192xf32>
    %310 = vector.broadcast %304 : vector<1x192xf32> to vector<8x192xf32>
    %311 = arith.addf %309, %310 : vector<8x192xf32>
    %312 = vector.extract_strided_slice %311 {offsets = [0, 0], sizes = [8, 64], strides = [1, 1]} : vector<8x192xf32> to vector<8x64xf32>
    %313 = vector.extract_strided_slice %311 {offsets = [0, 64], sizes = [8, 64], strides = [1, 1]} : vector<8x192xf32> to vector<8x64xf32>
    %314 = vector.extract_strided_slice %311 {offsets = [0, 128], sizes = [8, 64], strides = [1, 1]} : vector<8x192xf32> to vector<8x64xf32>
    %315 = vector.extract_strided_slice %312 {offsets = [0, 0], sizes = [8, 16], strides = [1, 1]} : vector<8x64xf32> to vector<8x16xf32>
    %316 = vector.extract_strided_slice %313 {offsets = [0, 0], sizes = [8, 16], strides = [1, 1]} : vector<8x64xf32> to vector<8x16xf32>
    %cst_141 = arith.constant dense<0.000000e+00> : vector<8x8xf32>
    %317 = tpu.matmul %315, %316, %cst_141 {dimension_numbers = #tpu.dot_dimension_numbers<[1], [1], [0], [0], [0, 0, 1, 0], [], []>} : vector<8x16xf32>, vector<8x16xf32>, vector<8x8xf32> -> vector<8x8xf32>
    %cst_142 = arith.constant 2.500000e-01 : f32
    %318 = vector.broadcast %cst_142 : f32 to vector<8x8xf32>
    %319 = arith.mulf %317, %318 : vector<8x8xf32>
    %320 = arith.addf %319, %9 : vector<8x8xf32>
    %cst_143 = arith.constant dense<0xFF800000> : vector<8xf32>
    %321 = vector.multi_reduction <maximumf>, %320, %cst_143 [1] : vector<8x8xf32> to vector<8xf32>
    %322 = vector.shape_cast %321 : vector<8xf32> to vector<8x1xf32>
    %323 = vector.broadcast %322 : vector<8x1xf32> to vector<8x8xf32>
    %324 = arith.subf %320, %323 : vector<8x8xf32>
    %325 = math.exp %324 : vector<8x8xf32>
    %cst_144 = arith.constant dense<0.000000e+00> : vector<8xf32>
    %326 = vector.multi_reduction <add>, %325, %cst_144 [1] : vector<8x8xf32> to vector<8xf32>
    %327 = vector.shape_cast %326 : vector<8xf32> to vector<8x1xf32>
    %328 = tpu.reciprocal %327 {approx = true} : vector<8x1xf32> -> vector<8x1xf32>
    %329 = vector.broadcast %328 : vector<8x1xf32> to vector<8x8xf32>
    %330 = arith.mulf %325, %329 : vector<8x8xf32>
    %331 = vector.extract_strided_slice %314 {offsets = [0, 0], sizes = [8, 16], strides = [1, 1]} : vector<8x64xf32> to vector<8x16xf32>
    %cst_145 = arith.constant dense<0.000000e+00> : vector<8x16xf32>
    %332 = tpu.matmul %330, %331, %cst_145 {dimension_numbers = #tpu.dot_dimension_numbers<[1], [0], [0], [1], [0, 0, 1, 1], [], []>} : vector<8x8xf32>, vector<8x16xf32>, vector<8x16xf32> -> vector<8x16xf32>
    %333 = vector.extract_strided_slice %306 {offsets = [0, 0], sizes = [16, 64], strides = [1, 1]} : vector<64x64xf32> to vector<16x64xf32>
    %cst_146 = arith.constant dense<0.000000e+00> : vector<8x64xf32>
    %334 = tpu.matmul %332, %333, %cst_146 {dimension_numbers = #tpu.dot_dimension_numbers<[1], [0], [0], [1], [0, 0, 1, 1], [], []>} : vector<8x16xf32>, vector<16x64xf32>, vector<8x64xf32> -> vector<8x64xf32>
    %335 = vector.broadcast %308 : vector<1x64xf32> to vector<8x64xf32>
    %336 = arith.addf %335, %334 : vector<8x64xf32>
    %337 = vector.extract_strided_slice %312 {offsets = [0, 16], sizes = [8, 16], strides = [1, 1]} : vector<8x64xf32> to vector<8x16xf32>
    %338 = vector.extract_strided_slice %313 {offsets = [0, 16], sizes = [8, 16], strides = [1, 1]} : vector<8x64xf32> to vector<8x16xf32>
    %cst_147 = arith.constant dense<0.000000e+00> : vector<8x8xf32>
    %339 = tpu.matmul %337, %338, %cst_147 {dimension_numbers = #tpu.dot_dimension_numbers<[1], [1], [0], [0], [0, 0, 1, 0], [], []>} : vector<8x16xf32>, vector<8x16xf32>, vector<8x8xf32> -> vector<8x8xf32>
    %cst_148 = arith.constant 2.500000e-01 : f32
    %340 = vector.broadcast %cst_148 : f32 to vector<8x8xf32>
    %341 = arith.mulf %339, %340 : vector<8x8xf32>
    %342 = arith.addf %341, %9 : vector<8x8xf32>
    %cst_149 = arith.constant dense<0xFF800000> : vector<8xf32>
    %343 = vector.multi_reduction <maximumf>, %342, %cst_149 [1] : vector<8x8xf32> to vector<8xf32>
    %344 = vector.shape_cast %343 : vector<8xf32> to vector<8x1xf32>
    %345 = vector.broadcast %344 : vector<8x1xf32> to vector<8x8xf32>
    %346 = arith.subf %342, %345 : vector<8x8xf32>
    %347 = math.exp %346 : vector<8x8xf32>
    %cst_150 = arith.constant dense<0.000000e+00> : vector<8xf32>
    %348 = vector.multi_reduction <add>, %347, %cst_150 [1] : vector<8x8xf32> to vector<8xf32>
    %349 = vector.shape_cast %348 : vector<8xf32> to vector<8x1xf32>
    %350 = tpu.reciprocal %349 {approx = true} : vector<8x1xf32> -> vector<8x1xf32>
    %351 = vector.broadcast %350 : vector<8x1xf32> to vector<8x8xf32>
    %352 = arith.mulf %347, %351 : vector<8x8xf32>
    %353 = vector.extract_strided_slice %314 {offsets = [0, 16], sizes = [8, 16], strides = [1, 1]} : vector<8x64xf32> to vector<8x16xf32>
    %cst_151 = arith.constant dense<0.000000e+00> : vector<8x16xf32>
    %354 = tpu.matmul %352, %353, %cst_151 {dimension_numbers = #tpu.dot_dimension_numbers<[1], [0], [0], [1], [0, 0, 1, 1], [], []>} : vector<8x8xf32>, vector<8x16xf32>, vector<8x16xf32> -> vector<8x16xf32>
    %355 = vector.extract_strided_slice %306 {offsets = [16, 0], sizes = [16, 64], strides = [1, 1]} : vector<64x64xf32> to vector<16x64xf32>
    %cst_152 = arith.constant dense<0.000000e+00> : vector<8x64xf32>
    %356 = tpu.matmul %354, %355, %cst_152 {dimension_numbers = #tpu.dot_dimension_numbers<[1], [0], [0], [1], [0, 0, 1, 1], [], []>} : vector<8x16xf32>, vector<16x64xf32>, vector<8x64xf32> -> vector<8x64xf32>
    %357 = arith.addf %336, %356 : vector<8x64xf32>
    %358 = vector.extract_strided_slice %312 {offsets = [0, 32], sizes = [8, 16], strides = [1, 1]} : vector<8x64xf32> to vector<8x16xf32>
    %359 = vector.extract_strided_slice %313 {offsets = [0, 32], sizes = [8, 16], strides = [1, 1]} : vector<8x64xf32> to vector<8x16xf32>
    %cst_153 = arith.constant dense<0.000000e+00> : vector<8x8xf32>
    %360 = tpu.matmul %358, %359, %cst_153 {dimension_numbers = #tpu.dot_dimension_numbers<[1], [1], [0], [0], [0, 0, 1, 0], [], []>} : vector<8x16xf32>, vector<8x16xf32>, vector<8x8xf32> -> vector<8x8xf32>
    %cst_154 = arith.constant 2.500000e-01 : f32
    %361 = vector.broadcast %cst_154 : f32 to vector<8x8xf32>
    %362 = arith.mulf %360, %361 : vector<8x8xf32>
    %363 = arith.addf %362, %9 : vector<8x8xf32>
    %cst_155 = arith.constant dense<0xFF800000> : vector<8xf32>
    %364 = vector.multi_reduction <maximumf>, %363, %cst_155 [1] : vector<8x8xf32> to vector<8xf32>
    %365 = vector.shape_cast %364 : vector<8xf32> to vector<8x1xf32>
    %366 = vector.broadcast %365 : vector<8x1xf32> to vector<8x8xf32>
    %367 = arith.subf %363, %366 : vector<8x8xf32>
    %368 = math.exp %367 : vector<8x8xf32>
    %cst_156 = arith.constant dense<0.000000e+00> : vector<8xf32>
    %369 = vector.multi_reduction <add>, %368, %cst_156 [1] : vector<8x8xf32> to vector<8xf32>
    %370 = vector.shape_cast %369 : vector<8xf32> to vector<8x1xf32>
    %371 = tpu.reciprocal %370 {approx = true} : vector<8x1xf32> -> vector<8x1xf32>
    %372 = vector.broadcast %371 : vector<8x1xf32> to vector<8x8xf32>
    %373 = arith.mulf %368, %372 : vector<8x8xf32>
    %374 = vector.extract_strided_slice %314 {offsets = [0, 32], sizes = [8, 16], strides = [1, 1]} : vector<8x64xf32> to vector<8x16xf32>
    %cst_157 = arith.constant dense<0.000000e+00> : vector<8x16xf32>
    %375 = tpu.matmul %373, %374, %cst_157 {dimension_numbers = #tpu.dot_dimension_numbers<[1], [0], [0], [1], [0, 0, 1, 1], [], []>} : vector<8x8xf32>, vector<8x16xf32>, vector<8x16xf32> -> vector<8x16xf32>
    %376 = vector.extract_strided_slice %306 {offsets = [32, 0], sizes = [16, 64], strides = [1, 1]} : vector<64x64xf32> to vector<16x64xf32>
    %cst_158 = arith.constant dense<0.000000e+00> : vector<8x64xf32>
    %377 = tpu.matmul %375, %376, %cst_158 {dimension_numbers = #tpu.dot_dimension_numbers<[1], [0], [0], [1], [0, 0, 1, 1], [], []>} : vector<8x16xf32>, vector<16x64xf32>, vector<8x64xf32> -> vector<8x64xf32>
    %378 = arith.addf %357, %377 : vector<8x64xf32>
    %379 = vector.extract_strided_slice %312 {offsets = [0, 48], sizes = [8, 16], strides = [1, 1]} : vector<8x64xf32> to vector<8x16xf32>
    %380 = vector.extract_strided_slice %313 {offsets = [0, 48], sizes = [8, 16], strides = [1, 1]} : vector<8x64xf32> to vector<8x16xf32>
    %cst_159 = arith.constant dense<0.000000e+00> : vector<8x8xf32>
    %381 = tpu.matmul %379, %380, %cst_159 {dimension_numbers = #tpu.dot_dimension_numbers<[1], [1], [0], [0], [0, 0, 1, 0], [], []>} : vector<8x16xf32>, vector<8x16xf32>, vector<8x8xf32> -> vector<8x8xf32>
    %cst_160 = arith.constant 2.500000e-01 : f32
    %382 = vector.broadcast %cst_160 : f32 to vector<8x8xf32>
    %383 = arith.mulf %381, %382 : vector<8x8xf32>
    %384 = arith.addf %383, %9 : vector<8x8xf32>
    %cst_161 = arith.constant dense<0xFF800000> : vector<8xf32>
    %385 = vector.multi_reduction <maximumf>, %384, %cst_161 [1] : vector<8x8xf32> to vector<8xf32>
    %386 = vector.shape_cast %385 : vector<8xf32> to vector<8x1xf32>
    %387 = vector.broadcast %386 : vector<8x1xf32> to vector<8x8xf32>
    %388 = arith.subf %384, %387 : vector<8x8xf32>
    %389 = math.exp %388 : vector<8x8xf32>
    %cst_162 = arith.constant dense<0.000000e+00> : vector<8xf32>
    %390 = vector.multi_reduction <add>, %389, %cst_162 [1] : vector<8x8xf32> to vector<8xf32>
    %391 = vector.shape_cast %390 : vector<8xf32> to vector<8x1xf32>
    %392 = tpu.reciprocal %391 {approx = true} : vector<8x1xf32> -> vector<8x1xf32>
    %393 = vector.broadcast %392 : vector<8x1xf32> to vector<8x8xf32>
    %394 = arith.mulf %389, %393 : vector<8x8xf32>
    %395 = vector.extract_strided_slice %314 {offsets = [0, 48], sizes = [8, 16], strides = [1, 1]} : vector<8x64xf32> to vector<8x16xf32>
    %cst_163 = arith.constant dense<0.000000e+00> : vector<8x16xf32>
    %396 = tpu.matmul %394, %395, %cst_163 {dimension_numbers = #tpu.dot_dimension_numbers<[1], [0], [0], [1], [0, 0, 1, 1], [], []>} : vector<8x8xf32>, vector<8x16xf32>, vector<8x16xf32> -> vector<8x16xf32>
    %397 = vector.extract_strided_slice %306 {offsets = [48, 0], sizes = [16, 64], strides = [1, 1]} : vector<64x64xf32> to vector<16x64xf32>
    %cst_164 = arith.constant dense<0.000000e+00> : vector<8x64xf32>
    %398 = tpu.matmul %396, %397, %cst_164 {dimension_numbers = #tpu.dot_dimension_numbers<[1], [0], [0], [1], [0, 0, 1, 1], [], []>} : vector<8x16xf32>, vector<16x64xf32>, vector<8x64xf32> -> vector<8x64xf32>
    %399 = arith.addf %378, %398 : vector<8x64xf32>
    %400 = arith.addf %300, %399 : vector<8x64xf32>
    %c1_165 = arith.constant 1 : index
    %c0_166 = arith.constant 0 : index
    %c0_167 = arith.constant 0 : index
    %401 = vector.load %arg15[%c1_165, %c0_166, %c0_167] : memref<2x1x64xf32, #tpu.memory_space<vmem>>, vector<1x1x64xf32>
    %402 = vector.shape_cast %401 : vector<1x1x64xf32> to vector<1x64xf32>
    %c1_168 = arith.constant 1 : index
    %c0_169 = arith.constant 0 : index
    %c0_170 = arith.constant 0 : index
    %403 = vector.load %arg16[%c1_168, %c0_169, %c0_170] : memref<2x1x64xf32, #tpu.memory_space<vmem>>, vector<1x1x64xf32>
    %404 = vector.shape_cast %403 : vector<1x1x64xf32> to vector<1x64xf32>
    %cst_171 = arith.constant dense<0.000000e+00> : vector<8xf32>
    %405 = vector.multi_reduction <add>, %400, %cst_171 [1] : vector<8x64xf32> to vector<8xf32>
    %406 = vector.shape_cast %405 : vector<8xf32> to vector<8x1xf32>
    %cst_172 = arith.constant 6.400000e+01 : f32
    %407 = vector.broadcast %cst_172 : f32 to vector<8x1xf32>
    %408 = arith.divf %406, %407 : vector<8x1xf32>
    %409 = vector.broadcast %408 : vector<8x1xf32> to vector<8x64xf32>
    %410 = arith.subf %400, %409 : vector<8x64xf32>
    %411 = arith.mulf %410, %410 : vector<8x64xf32>
    %cst_173 = arith.constant dense<0.000000e+00> : vector<8xf32>
    %412 = vector.multi_reduction <add>, %411, %cst_173 [1] : vector<8x64xf32> to vector<8xf32>
    %413 = vector.shape_cast %412 : vector<8xf32> to vector<8x1xf32>
    %cst_174 = arith.constant 6.400000e+01 : f32
    %414 = vector.broadcast %cst_174 : f32 to vector<8x1xf32>
    %415 = arith.divf %413, %414 : vector<8x1xf32>
    %cst_175 = arith.constant 9.99999974E-6 : f32
    %416 = vector.broadcast %cst_175 : f32 to vector<8x1xf32>
    %417 = arith.addf %415, %416 : vector<8x1xf32>
    %418 = math.rsqrt %417 : vector<8x1xf32>
    %419 = vector.broadcast %418 : vector<8x1xf32> to vector<8x64xf32>
    %420 = arith.mulf %410, %419 : vector<8x64xf32>
    %421 = vector.broadcast %402 : vector<1x64xf32> to vector<8x64xf32>
    %422 = arith.mulf %420, %421 : vector<8x64xf32>
    %423 = vector.broadcast %404 : vector<1x64xf32> to vector<8x64xf32>
    %424 = arith.addf %422, %423 : vector<8x64xf32>
    %c1_176 = arith.constant 1 : index
    %c0_177 = arith.constant 0 : index
    %c0_178 = arith.constant 0 : index
    %425 = vector.load %arg7[%c1_176, %c0_177, %c0_178] : memref<2x64x192xf32, #tpu.memory_space<vmem>>, vector<1x64x192xf32>
    %426 = vector.shape_cast %425 : vector<1x64x192xf32> to vector<64x192xf32>
    %c1_179 = arith.constant 1 : index
    %c0_180 = arith.constant 0 : index
    %c0_181 = arith.constant 0 : index
    %427 = vector.load %arg8[%c1_179, %c0_180, %c0_181] : memref<2x1x192xf32, #tpu.memory_space<vmem>>, vector<1x1x192xf32>
    %428 = vector.shape_cast %427 : vector<1x1x192xf32> to vector<1x192xf32>
    %c1_182 = arith.constant 1 : index
    %c0_183 = arith.constant 0 : index
    %c0_184 = arith.constant 0 : index
    %429 = vector.load %arg9[%c1_182, %c0_183, %c0_184] : memref<2x64x64xf32, #tpu.memory_space<vmem>>, vector<1x64x64xf32>
    %430 = vector.shape_cast %429 : vector<1x64x64xf32> to vector<64x64xf32>
    %c1_185 = arith.constant 1 : index
    %c0_186 = arith.constant 0 : index
    %c0_187 = arith.constant 0 : index
    %431 = vector.load %arg10[%c1_185, %c0_186, %c0_187] : memref<2x1x64xf32, #tpu.memory_space<vmem>>, vector<1x1x64xf32>
    %432 = vector.shape_cast %431 : vector<1x1x64xf32> to vector<1x64xf32>
    %433 = vector.extract_strided_slice %426 {offsets = [0, 0], sizes = [64, 64], strides = [1, 1]} : vector<64x192xf32> to vector<64x64xf32>
    %cst_188 = arith.constant dense<0.000000e+00> : vector<8x64xf32>
    %434 = tpu.matmul %424, %433, %cst_188 {dimension_numbers = #tpu.dot_dimension_numbers<[1], [0], [0], [1], [0, 0, 1, 1], [], []>} : vector<8x64xf32>, vector<64x64xf32>, vector<8x64xf32> -> vector<8x64xf32>
    %435 = vector.extract_strided_slice %428 {offsets = [0, 0], sizes = [1, 64], strides = [1, 1]} : vector<1x192xf32> to vector<1x64xf32>
    %436 = vector.broadcast %435 : vector<1x64xf32> to vector<8x64xf32>
    %437 = arith.addf %434, %436 : vector<8x64xf32>
    %438 = vector.extract_strided_slice %426 {offsets = [0, 64], sizes = [64, 128], strides = [1, 1]} : vector<64x192xf32> to vector<64x128xf32>
    %cst_189 = arith.constant dense<0.000000e+00> : vector<8x128xf32>
    %439 = tpu.matmul %3, %438, %cst_189 {dimension_numbers = #tpu.dot_dimension_numbers<[1], [0], [0], [1], [0, 0, 1, 1], [], []>} : vector<8x64xf32>, vector<64x128xf32>, vector<8x128xf32> -> vector<8x128xf32>
    %440 = vector.extract_strided_slice %428 {offsets = [0, 64], sizes = [1, 128], strides = [1, 1]} : vector<1x192xf32> to vector<1x128xf32>
    %441 = vector.broadcast %440 : vector<1x128xf32> to vector<8x128xf32>
    %442 = arith.addf %439, %441 : vector<8x128xf32>
    %443 = vector.extract_strided_slice %442 {offsets = [0, 0], sizes = [8, 64], strides = [1, 1]} : vector<8x128xf32> to vector<8x64xf32>
    %444 = vector.extract_strided_slice %442 {offsets = [0, 64], sizes = [8, 64], strides = [1, 1]} : vector<8x128xf32> to vector<8x64xf32>
    %445 = vector.extract_strided_slice %437 {offsets = [0, 0], sizes = [8, 16], strides = [1, 1]} : vector<8x64xf32> to vector<8x16xf32>
    %446 = vector.extract_strided_slice %443 {offsets = [0, 0], sizes = [8, 16], strides = [1, 1]} : vector<8x64xf32> to vector<8x16xf32>
    %cst_190 = arith.constant dense<0.000000e+00> : vector<8x8xf32>
    %447 = tpu.matmul %445, %446, %cst_190 {dimension_numbers = #tpu.dot_dimension_numbers<[1], [1], [0], [0], [0, 0, 1, 0], [], []>} : vector<8x16xf32>, vector<8x16xf32>, vector<8x8xf32> -> vector<8x8xf32>
    %cst_191 = arith.constant 2.500000e-01 : f32
    %448 = vector.broadcast %cst_191 : f32 to vector<8x8xf32>
    %449 = arith.mulf %447, %448 : vector<8x8xf32>
    %cst_192 = arith.constant dense<0xFF800000> : vector<8xf32>
    %450 = vector.multi_reduction <maximumf>, %449, %cst_192 [1] : vector<8x8xf32> to vector<8xf32>
    %451 = vector.shape_cast %450 : vector<8xf32> to vector<8x1xf32>
    %452 = vector.broadcast %451 : vector<8x1xf32> to vector<8x8xf32>
    %453 = arith.subf %449, %452 : vector<8x8xf32>
    %454 = math.exp %453 : vector<8x8xf32>
    %cst_193 = arith.constant dense<0.000000e+00> : vector<8xf32>
    %455 = vector.multi_reduction <add>, %454, %cst_193 [1] : vector<8x8xf32> to vector<8xf32>
    %456 = vector.shape_cast %455 : vector<8xf32> to vector<8x1xf32>
    %457 = tpu.reciprocal %456 {approx = true} : vector<8x1xf32> -> vector<8x1xf32>
    %458 = vector.broadcast %457 : vector<8x1xf32> to vector<8x8xf32>
    %459 = arith.mulf %454, %458 : vector<8x8xf32>
    %460 = vector.extract_strided_slice %444 {offsets = [0, 0], sizes = [8, 16], strides = [1, 1]} : vector<8x64xf32> to vector<8x16xf32>
    %cst_194 = arith.constant dense<0.000000e+00> : vector<8x16xf32>
    %461 = tpu.matmul %459, %460, %cst_194 {dimension_numbers = #tpu.dot_dimension_numbers<[1], [0], [0], [1], [0, 0, 1, 1], [], []>} : vector<8x8xf32>, vector<8x16xf32>, vector<8x16xf32> -> vector<8x16xf32>
    %462 = vector.extract_strided_slice %430 {offsets = [0, 0], sizes = [16, 64], strides = [1, 1]} : vector<64x64xf32> to vector<16x64xf32>
    %cst_195 = arith.constant dense<0.000000e+00> : vector<8x64xf32>
    %463 = tpu.matmul %461, %462, %cst_195 {dimension_numbers = #tpu.dot_dimension_numbers<[1], [0], [0], [1], [0, 0, 1, 1], [], []>} : vector<8x16xf32>, vector<16x64xf32>, vector<8x64xf32> -> vector<8x64xf32>
    %464 = vector.broadcast %432 : vector<1x64xf32> to vector<8x64xf32>
    %465 = arith.addf %464, %463 : vector<8x64xf32>
    %466 = vector.extract_strided_slice %437 {offsets = [0, 16], sizes = [8, 16], strides = [1, 1]} : vector<8x64xf32> to vector<8x16xf32>
    %467 = vector.extract_strided_slice %443 {offsets = [0, 16], sizes = [8, 16], strides = [1, 1]} : vector<8x64xf32> to vector<8x16xf32>
    %cst_196 = arith.constant dense<0.000000e+00> : vector<8x8xf32>
    %468 = tpu.matmul %466, %467, %cst_196 {dimension_numbers = #tpu.dot_dimension_numbers<[1], [1], [0], [0], [0, 0, 1, 0], [], []>} : vector<8x16xf32>, vector<8x16xf32>, vector<8x8xf32> -> vector<8x8xf32>
    %cst_197 = arith.constant 2.500000e-01 : f32
    %469 = vector.broadcast %cst_197 : f32 to vector<8x8xf32>
    %470 = arith.mulf %468, %469 : vector<8x8xf32>
    %cst_198 = arith.constant dense<0xFF800000> : vector<8xf32>
    %471 = vector.multi_reduction <maximumf>, %470, %cst_198 [1] : vector<8x8xf32> to vector<8xf32>
    %472 = vector.shape_cast %471 : vector<8xf32> to vector<8x1xf32>
    %473 = vector.broadcast %472 : vector<8x1xf32> to vector<8x8xf32>
    %474 = arith.subf %470, %473 : vector<8x8xf32>
    %475 = math.exp %474 : vector<8x8xf32>
    %cst_199 = arith.constant dense<0.000000e+00> : vector<8xf32>
    %476 = vector.multi_reduction <add>, %475, %cst_199 [1] : vector<8x8xf32> to vector<8xf32>
    %477 = vector.shape_cast %476 : vector<8xf32> to vector<8x1xf32>
    %478 = tpu.reciprocal %477 {approx = true} : vector<8x1xf32> -> vector<8x1xf32>
    %479 = vector.broadcast %478 : vector<8x1xf32> to vector<8x8xf32>
    %480 = arith.mulf %475, %479 : vector<8x8xf32>
    %481 = vector.extract_strided_slice %444 {offsets = [0, 16], sizes = [8, 16], strides = [1, 1]} : vector<8x64xf32> to vector<8x16xf32>
    %cst_200 = arith.constant dense<0.000000e+00> : vector<8x16xf32>
    %482 = tpu.matmul %480, %481, %cst_200 {dimension_numbers = #tpu.dot_dimension_numbers<[1], [0], [0], [1], [0, 0, 1, 1], [], []>} : vector<8x8xf32>, vector<8x16xf32>, vector<8x16xf32> -> vector<8x16xf32>
    %483 = vector.extract_strided_slice %430 {offsets = [16, 0], sizes = [16, 64], strides = [1, 1]} : vector<64x64xf32> to vector<16x64xf32>
    %cst_201 = arith.constant dense<0.000000e+00> : vector<8x64xf32>
    %484 = tpu.matmul %482, %483, %cst_201 {dimension_numbers = #tpu.dot_dimension_numbers<[1], [0], [0], [1], [0, 0, 1, 1], [], []>} : vector<8x16xf32>, vector<16x64xf32>, vector<8x64xf32> -> vector<8x64xf32>
    %485 = arith.addf %465, %484 : vector<8x64xf32>
    %486 = vector.extract_strided_slice %437 {offsets = [0, 32], sizes = [8, 16], strides = [1, 1]} : vector<8x64xf32> to vector<8x16xf32>
    %487 = vector.extract_strided_slice %443 {offsets = [0, 32], sizes = [8, 16], strides = [1, 1]} : vector<8x64xf32> to vector<8x16xf32>
    %cst_202 = arith.constant dense<0.000000e+00> : vector<8x8xf32>
    %488 = tpu.matmul %486, %487, %cst_202 {dimension_numbers = #tpu.dot_dimension_numbers<[1], [1], [0], [0], [0, 0, 1, 0], [], []>} : vector<8x16xf32>, vector<8x16xf32>, vector<8x8xf32> -> vector<8x8xf32>
    %cst_203 = arith.constant 2.500000e-01 : f32
    %489 = vector.broadcast %cst_203 : f32 to vector<8x8xf32>
    %490 = arith.mulf %488, %489 : vector<8x8xf32>
    %cst_204 = arith.constant dense<0xFF800000> : vector<8xf32>
    %491 = vector.multi_reduction <maximumf>, %490, %cst_204 [1] : vector<8x8xf32> to vector<8xf32>
    %492 = vector.shape_cast %491 : vector<8xf32> to vector<8x1xf32>
    %493 = vector.broadcast %492 : vector<8x1xf32> to vector<8x8xf32>
    %494 = arith.subf %490, %493 : vector<8x8xf32>
    %495 = math.exp %494 : vector<8x8xf32>
    %cst_205 = arith.constant dense<0.000000e+00> : vector<8xf32>
    %496 = vector.multi_reduction <add>, %495, %cst_205 [1] : vector<8x8xf32> to vector<8xf32>
    %497 = vector.shape_cast %496 : vector<8xf32> to vector<8x1xf32>
    %498 = tpu.reciprocal %497 {approx = true} : vector<8x1xf32> -> vector<8x1xf32>
    %499 = vector.broadcast %498 : vector<8x1xf32> to vector<8x8xf32>
    %500 = arith.mulf %495, %499 : vector<8x8xf32>
    %501 = vector.extract_strided_slice %444 {offsets = [0, 32], sizes = [8, 16], strides = [1, 1]} : vector<8x64xf32> to vector<8x16xf32>
    %cst_206 = arith.constant dense<0.000000e+00> : vector<8x16xf32>
    %502 = tpu.matmul %500, %501, %cst_206 {dimension_numbers = #tpu.dot_dimension_numbers<[1], [0], [0], [1], [0, 0, 1, 1], [], []>} : vector<8x8xf32>, vector<8x16xf32>, vector<8x16xf32> -> vector<8x16xf32>
    %503 = vector.extract_strided_slice %430 {offsets = [32, 0], sizes = [16, 64], strides = [1, 1]} : vector<64x64xf32> to vector<16x64xf32>
    %cst_207 = arith.constant dense<0.000000e+00> : vector<8x64xf32>
    %504 = tpu.matmul %502, %503, %cst_207 {dimension_numbers = #tpu.dot_dimension_numbers<[1], [0], [0], [1], [0, 0, 1, 1], [], []>} : vector<8x16xf32>, vector<16x64xf32>, vector<8x64xf32> -> vector<8x64xf32>
    %505 = arith.addf %485, %504 : vector<8x64xf32>
    %506 = vector.extract_strided_slice %437 {offsets = [0, 48], sizes = [8, 16], strides = [1, 1]} : vector<8x64xf32> to vector<8x16xf32>
    %507 = vector.extract_strided_slice %443 {offsets = [0, 48], sizes = [8, 16], strides = [1, 1]} : vector<8x64xf32> to vector<8x16xf32>
    %cst_208 = arith.constant dense<0.000000e+00> : vector<8x8xf32>
    %508 = tpu.matmul %506, %507, %cst_208 {dimension_numbers = #tpu.dot_dimension_numbers<[1], [1], [0], [0], [0, 0, 1, 0], [], []>} : vector<8x16xf32>, vector<8x16xf32>, vector<8x8xf32> -> vector<8x8xf32>
    %cst_209 = arith.constant 2.500000e-01 : f32
    %509 = vector.broadcast %cst_209 : f32 to vector<8x8xf32>
    %510 = arith.mulf %508, %509 : vector<8x8xf32>
    %cst_210 = arith.constant dense<0xFF800000> : vector<8xf32>
    %511 = vector.multi_reduction <maximumf>, %510, %cst_210 [1] : vector<8x8xf32> to vector<8xf32>
    %512 = vector.shape_cast %511 : vector<8xf32> to vector<8x1xf32>
    %513 = vector.broadcast %512 : vector<8x1xf32> to vector<8x8xf32>
    %514 = arith.subf %510, %513 : vector<8x8xf32>
    %515 = math.exp %514 : vector<8x8xf32>
    %cst_211 = arith.constant dense<0.000000e+00> : vector<8xf32>
    %516 = vector.multi_reduction <add>, %515, %cst_211 [1] : vector<8x8xf32> to vector<8xf32>
    %517 = vector.shape_cast %516 : vector<8xf32> to vector<8x1xf32>
    %518 = tpu.reciprocal %517 {approx = true} : vector<8x1xf32> -> vector<8x1xf32>
    %519 = vector.broadcast %518 : vector<8x1xf32> to vector<8x8xf32>
    %520 = arith.mulf %515, %519 : vector<8x8xf32>
    %521 = vector.extract_strided_slice %444 {offsets = [0, 48], sizes = [8, 16], strides = [1, 1]} : vector<8x64xf32> to vector<8x16xf32>
    %cst_212 = arith.constant dense<0.000000e+00> : vector<8x16xf32>
    %522 = tpu.matmul %520, %521, %cst_212 {dimension_numbers = #tpu.dot_dimension_numbers<[1], [0], [0], [1], [0, 0, 1, 1], [], []>} : vector<8x8xf32>, vector<8x16xf32>, vector<8x16xf32> -> vector<8x16xf32>
    %523 = vector.extract_strided_slice %430 {offsets = [48, 0], sizes = [16, 64], strides = [1, 1]} : vector<64x64xf32> to vector<16x64xf32>
    %cst_213 = arith.constant dense<0.000000e+00> : vector<8x64xf32>
    %524 = tpu.matmul %522, %523, %cst_213 {dimension_numbers = #tpu.dot_dimension_numbers<[1], [0], [0], [1], [0, 0, 1, 1], [], []>} : vector<8x16xf32>, vector<16x64xf32>, vector<8x64xf32> -> vector<8x64xf32>
    %525 = arith.addf %505, %524 : vector<8x64xf32>
    %526 = arith.addf %424, %525 : vector<8x64xf32>
    %c1_214 = arith.constant 1 : index
    %c0_215 = arith.constant 0 : index
    %c0_216 = arith.constant 0 : index
    %527 = vector.load %arg17[%c1_214, %c0_215, %c0_216] : memref<2x1x64xf32, #tpu.memory_space<vmem>>, vector<1x1x64xf32>
    %528 = vector.shape_cast %527 : vector<1x1x64xf32> to vector<1x64xf32>
    %c1_217 = arith.constant 1 : index
    %c0_218 = arith.constant 0 : index
    %c0_219 = arith.constant 0 : index
    %529 = vector.load %arg18[%c1_217, %c0_218, %c0_219] : memref<2x1x64xf32, #tpu.memory_space<vmem>>, vector<1x1x64xf32>
    %530 = vector.shape_cast %529 : vector<1x1x64xf32> to vector<1x64xf32>
    %cst_220 = arith.constant dense<0.000000e+00> : vector<8xf32>
    %531 = vector.multi_reduction <add>, %526, %cst_220 [1] : vector<8x64xf32> to vector<8xf32>
    %532 = vector.shape_cast %531 : vector<8xf32> to vector<8x1xf32>
    %cst_221 = arith.constant 6.400000e+01 : f32
    %533 = vector.broadcast %cst_221 : f32 to vector<8x1xf32>
    %534 = arith.divf %532, %533 : vector<8x1xf32>
    %535 = vector.broadcast %534 : vector<8x1xf32> to vector<8x64xf32>
    %536 = arith.subf %526, %535 : vector<8x64xf32>
    %537 = arith.mulf %536, %536 : vector<8x64xf32>
    %cst_222 = arith.constant dense<0.000000e+00> : vector<8xf32>
    %538 = vector.multi_reduction <add>, %537, %cst_222 [1] : vector<8x64xf32> to vector<8xf32>
    %539 = vector.shape_cast %538 : vector<8xf32> to vector<8x1xf32>
    %cst_223 = arith.constant 6.400000e+01 : f32
    %540 = vector.broadcast %cst_223 : f32 to vector<8x1xf32>
    %541 = arith.divf %539, %540 : vector<8x1xf32>
    %cst_224 = arith.constant 9.99999974E-6 : f32
    %542 = vector.broadcast %cst_224 : f32 to vector<8x1xf32>
    %543 = arith.addf %541, %542 : vector<8x1xf32>
    %544 = math.rsqrt %543 : vector<8x1xf32>
    %545 = vector.broadcast %544 : vector<8x1xf32> to vector<8x64xf32>
    %546 = arith.mulf %536, %545 : vector<8x64xf32>
    %547 = vector.broadcast %528 : vector<1x64xf32> to vector<8x64xf32>
    %548 = arith.mulf %546, %547 : vector<8x64xf32>
    %549 = vector.broadcast %530 : vector<1x64xf32> to vector<8x64xf32>
    %550 = arith.addf %548, %549 : vector<8x64xf32>
    %c1_225 = arith.constant 1 : index
    %c0_226 = arith.constant 0 : index
    %c0_227 = arith.constant 0 : index
    %551 = vector.load %arg11[%c1_225, %c0_226, %c0_227] : memref<2x64x128xf32, #tpu.memory_space<vmem>>, vector<1x64x128xf32>
    %552 = vector.shape_cast %551 : vector<1x64x128xf32> to vector<64x128xf32>
    %cst_228 = arith.constant dense<0.000000e+00> : vector<8x128xf32>
    %553 = tpu.matmul %550, %552, %cst_228 {dimension_numbers = #tpu.dot_dimension_numbers<[1], [0], [0], [1], [0, 0, 1, 1], [], []>} : vector<8x64xf32>, vector<64x128xf32>, vector<8x128xf32> -> vector<8x128xf32>
    %c1_229 = arith.constant 1 : index
    %c0_230 = arith.constant 0 : index
    %c0_231 = arith.constant 0 : index
    %554 = vector.load %arg12[%c1_229, %c0_230, %c0_231] : memref<2x1x128xf32, #tpu.memory_space<vmem>>, vector<1x1x128xf32>
    %555 = vector.shape_cast %554 : vector<1x1x128xf32> to vector<1x128xf32>
    %556 = vector.broadcast %555 : vector<1x128xf32> to vector<8x128xf32>
    %557 = arith.addf %553, %556 : vector<8x128xf32>
    %cst_232 = arith.constant 0.000000e+00 : f32
    %558 = vector.broadcast %cst_232 : f32 to vector<8x128xf32>
    %559 = arith.maximumf %557, %558 : vector<8x128xf32>
    %c1_233 = arith.constant 1 : index
    %c0_234 = arith.constant 0 : index
    %c0_235 = arith.constant 0 : index
    %560 = vector.load %arg13[%c1_233, %c0_234, %c0_235] : memref<2x128x64xf32, #tpu.memory_space<vmem>>, vector<1x128x64xf32>
    %561 = vector.shape_cast %560 : vector<1x128x64xf32> to vector<128x64xf32>
    %cst_236 = arith.constant dense<0.000000e+00> : vector<8x64xf32>
    %562 = tpu.matmul %559, %561, %cst_236 {dimension_numbers = #tpu.dot_dimension_numbers<[1], [0], [0], [1], [0, 0, 1, 1], [], []>} : vector<8x128xf32>, vector<128x64xf32>, vector<8x64xf32> -> vector<8x64xf32>
    %c1_237 = arith.constant 1 : index
    %c0_238 = arith.constant 0 : index
    %c0_239 = arith.constant 0 : index
    %563 = vector.load %arg14[%c1_237, %c0_238, %c0_239] : memref<2x1x64xf32, #tpu.memory_space<vmem>>, vector<1x1x64xf32>
    %564 = vector.shape_cast %563 : vector<1x1x64xf32> to vector<1x64xf32>
    %565 = vector.broadcast %564 : vector<1x64xf32> to vector<8x64xf32>
    %566 = arith.addf %562, %565 : vector<8x64xf32>
    %567 = arith.addf %550, %566 : vector<8x64xf32>
    %c1_240 = arith.constant 1 : index
    %c0_241 = arith.constant 0 : index
    %c0_242 = arith.constant 0 : index
    %568 = vector.load %arg19[%c1_240, %c0_241, %c0_242] : memref<2x1x64xf32, #tpu.memory_space<vmem>>, vector<1x1x64xf32>
    %569 = vector.shape_cast %568 : vector<1x1x64xf32> to vector<1x64xf32>
    %c1_243 = arith.constant 1 : index
    %c0_244 = arith.constant 0 : index
    %c0_245 = arith.constant 0 : index
    %570 = vector.load %arg20[%c1_243, %c0_244, %c0_245] : memref<2x1x64xf32, #tpu.memory_space<vmem>>, vector<1x1x64xf32>
    %571 = vector.shape_cast %570 : vector<1x1x64xf32> to vector<1x64xf32>
    %cst_246 = arith.constant dense<0.000000e+00> : vector<8xf32>
    %572 = vector.multi_reduction <add>, %567, %cst_246 [1] : vector<8x64xf32> to vector<8xf32>
    %573 = vector.shape_cast %572 : vector<8xf32> to vector<8x1xf32>
    %cst_247 = arith.constant 6.400000e+01 : f32
    %574 = vector.broadcast %cst_247 : f32 to vector<8x1xf32>
    %575 = arith.divf %573, %574 : vector<8x1xf32>
    %576 = vector.broadcast %575 : vector<8x1xf32> to vector<8x64xf32>
    %577 = arith.subf %567, %576 : vector<8x64xf32>
    %578 = arith.mulf %577, %577 : vector<8x64xf32>
    %cst_248 = arith.constant dense<0.000000e+00> : vector<8xf32>
    %579 = vector.multi_reduction <add>, %578, %cst_248 [1] : vector<8x64xf32> to vector<8xf32>
    %580 = vector.shape_cast %579 : vector<8xf32> to vector<8x1xf32>
    %cst_249 = arith.constant 6.400000e+01 : f32
    %581 = vector.broadcast %cst_249 : f32 to vector<8x1xf32>
    %582 = arith.divf %580, %581 : vector<8x1xf32>
    %cst_250 = arith.constant 9.99999974E-6 : f32
    %583 = vector.broadcast %cst_250 : f32 to vector<8x1xf32>
    %584 = arith.addf %582, %583 : vector<8x1xf32>
    %585 = math.rsqrt %584 : vector<8x1xf32>
    %586 = vector.broadcast %585 : vector<8x1xf32> to vector<8x64xf32>
    %587 = arith.mulf %577, %586 : vector<8x64xf32>
    %588 = vector.broadcast %569 : vector<1x64xf32> to vector<8x64xf32>
    %589 = arith.mulf %587, %588 : vector<8x64xf32>
    %590 = vector.broadcast %571 : vector<1x64xf32> to vector<8x64xf32>
    %591 = arith.addf %589, %590 : vector<8x64xf32>
    %c0_251 = arith.constant 0 : index
    %c0_252 = arith.constant 0 : index
    %592 = vector.load %arg21[%c0_251, %c0_252] : memref<1x64xf32, #tpu.memory_space<vmem>>, vector<1x64xf32>
    %c0_253 = arith.constant 0 : index
    %c0_254 = arith.constant 0 : index
    %593 = vector.load %arg22[%c0_253, %c0_254] : memref<1x64xf32, #tpu.memory_space<vmem>>, vector<1x64xf32>
    %cst_255 = arith.constant dense<0.000000e+00> : vector<8xf32>
    %594 = vector.multi_reduction <add>, %591, %cst_255 [1] : vector<8x64xf32> to vector<8xf32>
    %595 = vector.shape_cast %594 : vector<8xf32> to vector<8x1xf32>
    %cst_256 = arith.constant 6.400000e+01 : f32
    %596 = vector.broadcast %cst_256 : f32 to vector<8x1xf32>
    %597 = arith.divf %595, %596 : vector<8x1xf32>
    %598 = vector.broadcast %597 : vector<8x1xf32> to vector<8x64xf32>
    %599 = arith.subf %591, %598 : vector<8x64xf32>
    %600 = arith.mulf %599, %599 : vector<8x64xf32>
    %cst_257 = arith.constant dense<0.000000e+00> : vector<8xf32>
    %601 = vector.multi_reduction <add>, %600, %cst_257 [1] : vector<8x64xf32> to vector<8xf32>
    %602 = vector.shape_cast %601 : vector<8xf32> to vector<8x1xf32>
    %cst_258 = arith.constant 6.400000e+01 : f32
    %603 = vector.broadcast %cst_258 : f32 to vector<8x1xf32>
    %604 = arith.divf %602, %603 : vector<8x1xf32>
    %cst_259 = arith.constant 9.99999974E-6 : f32
    %605 = vector.broadcast %cst_259 : f32 to vector<8x1xf32>
    %606 = arith.addf %604, %605 : vector<8x1xf32>
    %607 = math.rsqrt %606 : vector<8x1xf32>
    %608 = vector.broadcast %607 : vector<8x1xf32> to vector<8x64xf32>
    %609 = arith.mulf %599, %608 : vector<8x64xf32>
    %610 = vector.broadcast %592 : vector<1x64xf32> to vector<8x64xf32>
    %611 = arith.mulf %609, %610 : vector<8x64xf32>
    %612 = vector.broadcast %593 : vector<1x64xf32> to vector<8x64xf32>
    %613 = arith.addf %611, %612 : vector<8x64xf32>
    %c0_260 = arith.constant 0 : index
    %c0_261 = arith.constant 0 : index
    %614 = vector.load %arg23[%c0_260, %c0_261] : memref<64x256xf32, #tpu.memory_space<vmem>>, vector<64x256xf32>
    %cst_262 = arith.constant dense<0.000000e+00> : vector<8x256xf32>
    %615 = tpu.matmul %613, %614, %cst_262 {dimension_numbers = #tpu.dot_dimension_numbers<[1], [0], [0], [1], [0, 0, 1, 1], [], []>} : vector<8x64xf32>, vector<64x256xf32>, vector<8x256xf32> -> vector<8x256xf32>
    %c0_263 = arith.constant 0 : index
    %c0_264 = arith.constant 0 : index
    %616 = vector.load %arg24[%c0_263, %c0_264] : memref<1x256xf32, #tpu.memory_space<vmem>>, vector<1x256xf32>
    %617 = vector.broadcast %616 : vector<1x256xf32> to vector<8x256xf32>
    %618 = arith.addf %615, %617 : vector<8x256xf32>
    %c0_265 = arith.constant 0 : index
    %c0_266 = arith.constant 0 : index
    %c0_267 = arith.constant 0 : index
    %619 = vector.load %arg25[%c0_265, %c0_266, %c0_267] : memref<1x8x256xf32, #tpu.memory_space<vmem>>, vector<1x8x256xf32>
    %620 = vector.shape_cast %619 : vector<1x8x256xf32> to vector<8x256xf32>
    %621 = vector.shape_cast %618 : vector<8x256xf32> to vector<1x8x256xf32>
    tpu.vector_store %arg25[%c0_265, %c0_266, %c0_267], %621 {strides = array<i32>} : memref<1x8x256xf32, #tpu.memory_space<vmem>>, vector<1x8x256xf32>,
    return
  }
  func.func @transform_0(%arg0: i32) -> (i32, i32, i32) {
    %c0_i32 = arith.constant 0 : i32
    %c0_i32_0 = arith.constant 0 : i32
    %c0_i32_1 = arith.constant 0 : i32
    return %arg0, %c0_i32, %c0_i32_0 : i32, i32, i32
  }
  func.func @transform_1(%arg0: i32) -> (i32, i32, i32) {
    %c0_i32 = arith.constant 0 : i32
    %c0_i32_0 = arith.constant 0 : i32
    %c0_i32_1 = arith.constant 0 : i32
    return %arg0, %c0_i32, %c0_i32_0 : i32, i32, i32
  }
  func.func @transform_2(%arg0: i32) -> (i32, i32, i32) {
    %c0_i32 = arith.constant 0 : i32
    %c0_i32_0 = arith.constant 0 : i32
    %c0_i32_1 = arith.constant 0 : i32
    %c0_i32_2 = arith.constant 0 : i32
    return %c0_i32, %c0_i32_0, %c0_i32_1 : i32, i32, i32
  }
  func.func @transform_3(%arg0: i32) -> (i32, i32, i32) {
    %c0_i32 = arith.constant 0 : i32
    %c0_i32_0 = arith.constant 0 : i32
    %c0_i32_1 = arith.constant 0 : i32
    %c0_i32_2 = arith.constant 0 : i32
    return %c0_i32, %c0_i32_0, %c0_i32_1 : i32, i32, i32
  }
  func.func @transform_4(%arg0: i32) -> (i32, i32, i32) {
    %c0_i32 = arith.constant 0 : i32
    %c0_i32_0 = arith.constant 0 : i32
    %c0_i32_1 = arith.constant 0 : i32
    %c0_i32_2 = arith.constant 0 : i32
    return %c0_i32, %c0_i32_0, %c0_i32_1 : i32, i32, i32
  }
  func.func @transform_5(%arg0: i32) -> (i32, i32, i32) {
    %c0_i32 = arith.constant 0 : i32
    %c0_i32_0 = arith.constant 0 : i32
    %c0_i32_1 = arith.constant 0 : i32
    %c0_i32_2 = arith.constant 0 : i32
    return %c0_i32, %c0_i32_0, %c0_i32_1 : i32, i32, i32
  }
  func.func @transform_6(%arg0: i32) -> (i32, i32, i32) {
    %c0_i32 = arith.constant 0 : i32
    %c0_i32_0 = arith.constant 0 : i32
    %c0_i32_1 = arith.constant 0 : i32
    %c0_i32_2 = arith.constant 0 : i32
    return %c0_i32, %c0_i32_0, %c0_i32_1 : i32, i32, i32
  }
  func.func @transform_7(%arg0: i32) -> (i32, i32, i32) {
    %c0_i32 = arith.constant 0 : i32
    %c0_i32_0 = arith.constant 0 : i32
    %c0_i32_1 = arith.constant 0 : i32
    %c0_i32_2 = arith.constant 0 : i32
    return %c0_i32, %c0_i32_0, %c0_i32_1 : i32, i32, i32
  }
  func.func @transform_8(%arg0: i32) -> (i32, i32, i32) {
    %c0_i32 = arith.constant 0 : i32
    %c0_i32_0 = arith.constant 0 : i32
    %c0_i32_1 = arith.constant 0 : i32
    %c0_i32_2 = arith.constant 0 : i32
    return %c0_i32, %c0_i32_0, %c0_i32_1 : i32, i32, i32
  }
  func.func @transform_9(%arg0: i32) -> (i32, i32, i32) {
    %c0_i32 = arith.constant 0 : i32
    %c0_i32_0 = arith.constant 0 : i32
    %c0_i32_1 = arith.constant 0 : i32
    %c0_i32_2 = arith.constant 0 : i32
    return %c0_i32, %c0_i32_0, %c0_i32_1 : i32, i32, i32
  }
  func.func @transform_10(%arg0: i32) -> (i32, i32, i32) {
    %c0_i32 = arith.constant 0 : i32
    %c0_i32_0 = arith.constant 0 : i32
    %c0_i32_1 = arith.constant 0 : i32
    %c0_i32_2 = arith.constant 0 : i32
    return %c0_i32, %c0_i32_0, %c0_i32_1 : i32, i32, i32
  }
  func.func @transform_11(%arg0: i32) -> (i32, i32, i32) {
    %c0_i32 = arith.constant 0 : i32
    %c0_i32_0 = arith.constant 0 : i32
    %c0_i32_1 = arith.constant 0 : i32
    %c0_i32_2 = arith.constant 0 : i32
    return %c0_i32, %c0_i32_0, %c0_i32_1 : i32, i32, i32
  }
  func.func @transform_12(%arg0: i32) -> (i32, i32, i32) {
    %c0_i32 = arith.constant 0 : i32
    %c0_i32_0 = arith.constant 0 : i32
    %c0_i32_1 = arith.constant 0 : i32
    %c0_i32_2 = arith.constant 0 : i32
    return %c0_i32, %c0_i32_0, %c0_i32_1 : i32, i32, i32
  }
  func.func @transform_13(%arg0: i32) -> (i32, i32, i32) {
    %c0_i32 = arith.constant 0 : i32
    %c0_i32_0 = arith.constant 0 : i32
    %c0_i32_1 = arith.constant 0 : i32
    %c0_i32_2 = arith.constant 0 : i32
    return %c0_i32, %c0_i32_0, %c0_i32_1 : i32, i32, i32
  }
  func.func @transform_14(%arg0: i32) -> (i32, i32, i32) {
    %c0_i32 = arith.constant 0 : i32
    %c0_i32_0 = arith.constant 0 : i32
    %c0_i32_1 = arith.constant 0 : i32
    %c0_i32_2 = arith.constant 0 : i32
    return %c0_i32, %c0_i32_0, %c0_i32_1 : i32, i32, i32
  }
  func.func @transform_15(%arg0: i32) -> (i32, i32, i32) {
    %c0_i32 = arith.constant 0 : i32
    %c0_i32_0 = arith.constant 0 : i32
    %c0_i32_1 = arith.constant 0 : i32
    %c0_i32_2 = arith.constant 0 : i32
    return %c0_i32, %c0_i32_0, %c0_i32_1 : i32, i32, i32
  }
  func.func @transform_16(%arg0: i32) -> (i32, i32, i32) {
    %c0_i32 = arith.constant 0 : i32
    %c0_i32_0 = arith.constant 0 : i32
    %c0_i32_1 = arith.constant 0 : i32
    %c0_i32_2 = arith.constant 0 : i32
    return %c0_i32, %c0_i32_0, %c0_i32_1 : i32, i32, i32
  }
  func.func @transform_17(%arg0: i32) -> (i32, i32, i32) {
    %c0_i32 = arith.constant 0 : i32
    %c0_i32_0 = arith.constant 0 : i32
    %c0_i32_1 = arith.constant 0 : i32
    %c0_i32_2 = arith.constant 0 : i32
    return %c0_i32, %c0_i32_0, %c0_i32_1 : i32, i32, i32
  }
  func.func @transform_18(%arg0: i32) -> (i32, i32, i32) {
    %c0_i32 = arith.constant 0 : i32
    %c0_i32_0 = arith.constant 0 : i32
    %c0_i32_1 = arith.constant 0 : i32
    %c0_i32_2 = arith.constant 0 : i32
    return %c0_i32, %c0_i32_0, %c0_i32_1 : i32, i32, i32
  }
  func.func @transform_19(%arg0: i32) -> (i32, i32, i32) {
    %c0_i32 = arith.constant 0 : i32
    %c0_i32_0 = arith.constant 0 : i32
    %c0_i32_1 = arith.constant 0 : i32
    %c0_i32_2 = arith.constant 0 : i32
    return %c0_i32, %c0_i32_0, %c0_i32_1 : i32, i32, i32
  }
  func.func @transform_20(%arg0: i32) -> (i32, i32) {
    %c0_i32 = arith.constant 0 : i32
    %c0_i32_0 = arith.constant 0 : i32
    %c0_i32_1 = arith.constant 0 : i32
    return %c0_i32, %c0_i32_0 : i32, i32
  }
  func.func @transform_21(%arg0: i32) -> (i32, i32) {
    %c0_i32 = arith.constant 0 : i32
    %c0_i32_0 = arith.constant 0 : i32
    %c0_i32_1 = arith.constant 0 : i32
    return %c0_i32, %c0_i32_0 : i32, i32
  }
  func.func @transform_22(%arg0: i32) -> (i32, i32) {
    %c0_i32 = arith.constant 0 : i32
    %c0_i32_0 = arith.constant 0 : i32
    %c0_i32_1 = arith.constant 0 : i32
    return %c0_i32, %c0_i32_0 : i32, i32
  }
  func.func @transform_23(%arg0: i32) -> (i32, i32) {
    %c0_i32 = arith.constant 0 : i32
    %c0_i32_0 = arith.constant 0 : i32
    %c0_i32_1 = arith.constant 0 : i32
    return %c0_i32, %c0_i32_0 : i32, i32
  }
  func.func @transform_24(%arg0: i32) -> (i32, i32, i32) {
    %c0_i32 = arith.constant 0 : i32
    %c0_i32_0 = arith.constant 0 : i32
    %c0_i32_1 = arith.constant 0 : i32
    return %arg0, %c0_i32, %c0_i32_0 : i32, i32, i32
  }
}

</mosaic_0001>

<llo_original>
// kernel: adversarial_decoder_forward.1
$region0: #{adversarial_decoder_forward.1}
  #allocation0 [shape = 'u32[]', space=smem, size = 0x4, offset = 0x4, fixed_abs, tag = 'smem constant byte address 0x4 - core index']
  #allocation1 [shape = 'u32[72,128]{1,0:T(1,128)}', space=vmem, size = 0x9000, scoped, tag = 'internal scratch']
  %s0 = inlined_call_operand.vmem [shape: f32[2,8,64], index: 0, kind: input, shape index: {}]
  %s1 = inlined_call_operand.hbm [shape: f32[2,8,64], index: 1, kind: input, shape index: {}]
  %s2 = inlined_call_operand.vmem [shape: f32[2,64,192], index: 2, kind: input, shape index: {}]
  %s3 = inlined_call_operand.vmem [shape: f32[2,1,192], index: 3, kind: input, shape index: {}]
  %s4 = inlined_call_operand.vmem [shape: f32[2,64,64], index: 4, kind: input, shape index: {}]
  %s5 = inlined_call_operand.vmem [shape: f32[2,1,64], index: 5, kind: input, shape index: {}]
  %s6 = inlined_call_operand.hbm [shape: f32[2,64,192], index: 6, kind: input, shape index: {}]
  %s7 = inlined_call_operand.hbm [shape: f32[2,1,192], index: 7, kind: input, shape index: {}]
  %s8 = inlined_call_operand.hbm [shape: f32[2,64,64], index: 8, kind: input, shape index: {}]
  %s9 = inlined_call_operand.hbm [shape: f32[2,1,64], index: 9, kind: input, shape index: {}]
  %s10 = inlined_call_operand.hbm [shape: f32[2,64,128], index: 10, kind: input, shape index: {}]
  %s11 = inlined_call_operand.hbm [shape: f32[2,1,128], index: 11, kind: input, shape index: {}]
  %s12 = inlined_call_operand.vmem [shape: f32[2,128,64], index: 12, kind: input, shape index: {}]
  %s13 = inlined_call_operand.hbm [shape: f32[2,1,64], index: 13, kind: input, shape index: {}]
  %s14 = inlined_call_operand.hbm [shape: f32[2,1,64], index: 14, kind: input, shape index: {}]
  %s15 = inlined_call_operand.hbm [shape: f32[2,1,64], index: 15, kind: input, shape index: {}]
  %s16 = inlined_call_operand.hbm [shape: f32[2,1,64], index: 16, kind: input, shape index: {}]
  %s17 = inlined_call_operand.hbm [shape: f32[2,1,64], index: 17, kind: input, shape index: {}]
  %s18 = inlined_call_operand.hbm [shape: f32[2,1,64], index: 18, kind: input, shape index: {}]
  %s19 = inlined_call_operand.hbm [shape: f32[2,1,64], index: 19, kind: input, shape index: {}]
  %s20 = inlined_call_operand.hbm [shape: f32[1,64], index: 20, kind: input, shape index: {}]
  %s21 = inlined_call_operand.hbm [shape: f32[1,64], index: 21, kind: input, shape index: {}]
  %s22 = inlined_call_operand.hbm [shape: f32[64,256], index: 22, kind: input, shape index: {}]
  %s23 = inlined_call_operand.hbm [shape: f32[1,256], index: 23, kind: input, shape index: {}]
  %s24 = inlined_call_operand.hbm [shape: f32[2,8,256], index: 24, kind: output, shape index: {}]
  %s25 = sld [smem:[#allocation0]]
  $region201: #{adversarial_decoder_forward.1} parent=0
    _
  %s27 = ssub.s32 1, %s25
  %s28 = scalar_select 0, %s27, %s25
  $region1: #{adversarial_decoder_forward.1} parent=0
    #allocation2 [shape = 'u8[8192]{0}', space=vmem, size = 0x2000, scoped, tag = 'input window, operand 1']
    #allocation3 [shape = 's32[2]{0}', space=sflag, size = 0x8, scoped, tag = 'scoped memory for adversarial_decoder_forward.1']
    #allocation4 [shape = 's32[2]{0}', space=sflag, size = 0x8, scoped, tag = 'scoped memory for adversarial_decoder_forward.1']
    #allocation5 [shape = 'u8[131072]{0}', space=vmem, size = 0x20000, scoped, tag = 'input window, operand 6, single buffered']
    #allocation6 [shape = 's32[1]{0}', space=sflag, size = 0x4, scoped, tag = 'scoped memory for adversarial_decoder_forward.1']
    #allocation7 [shape = 'u8[2048]{0}', space=vmem, size = 0x800, scoped, tag = 'input window, operand 7, single buffered']
    #allocation8 [shape = 'u8[65536]{0}', space=vmem, size = 0x10000, scoped, tag = 'input window, operand 8, single buffered']
    #allocation9 [shape = 's32[1]{0}', space=sflag, size = 0x4, scoped, tag = 'scoped memory for adversarial_decoder_forward.1']
    #allocation10 [shape = 'u8[1024]{0}', space=vmem, size = 0x400, scoped, tag = 'input window, operand 9, single buffered']
    #allocation11 [shape = 'u8[65536]{0}', space=vmem, size = 0x10000, scoped, tag = 'input window, operand 10, single buffered']
    #allocation12 [shape = 's32[1]{0}', space=sflag, size = 0x4, scoped, tag = 'scoped memory for adversarial_decoder_forward.1']
    #allocation13 [shape = 'u8[1024]{0}', space=vmem, size = 0x400, scoped, tag = 'input window, operand 11, single buffered']
    #allocation14 [shape = 'u8[1024]{0}', space=vmem, size = 0x400, scoped, tag = 'input window, operand 13, single buffered']
    #allocation15 [shape = 's32[1]{0}', space=sflag, size = 0x4, scoped, tag = 'scoped memory for adversarial_decoder_forward.1']
    #allocation16 [shape = 'u8[1024]{0}', space=vmem, size = 0x400, scoped, tag = 'input window, operand 14, single buffered']
    #allocation17 [shape = 'u8[1024]{0}', space=vmem, size = 0x400, scoped, tag = 'input window, operand 15, single buffered']
    #allocation18 [shape = 's32[1]{0}', space=sflag, size = 0x4, scoped, tag = 'scoped memory for adversarial_decoder_forward.1']
    #allocation19 [shape = 'u8[1024]{0}', space=vmem, size = 0x400, scoped, tag = 'input window, operand 16, single buffered']
    #allocation20 [shape = 'u8[1024]{0}', space=vmem, size = 0x400, scoped, tag = 'input window, operand 17, single buffered']
    #allocation21 [shape = 's32[1]{0}', space=sflag, size = 0x4, scoped, tag = 'scoped memory for adversarial_decoder_forward.1']
    #allocation22 [shape = 'u8[1024]{0}', space=vmem, size = 0x400, scoped, tag = 'input window, operand 18, single buffered']
    #allocation23 [shape = 'u8[1024]{0}', space=vmem, size = 0x400, scoped, tag = 'input window, operand 19, single buffered']
    #allocation24 [shape = 's32[1]{0}', space=sflag, size = 0x4, scoped, tag = 'scoped memory for adversarial_decoder_forward.1']
    #allocation25 [shape = 'u8[512]{0}', space=vmem, size = 0x400, scoped, tag = 'input window, operand 20, single buffered']
    #allocation26 [shape = 'u8[512]{0}', space=vmem, size = 0x400, scoped, tag = 'input window, operand 21, single buffered']
    #allocation27 [shape = 's32[1]{0}', space=sflag, size = 0x4, scoped, tag = 'scoped memory for adversarial_decoder_forward.1']
    #allocation28 [shape = 'u8[65536]{0}', space=vmem, size = 0x10000, scoped, tag = 'input window, operand 22, single buffered']
    #allocation29 [shape = 'u8[1024]{0}', space=vmem, size = 0x400, scoped, tag = 'input window, operand 23, single buffered']
    #allocation30 [shape = 's32[1]{0}', space=sflag, size = 0x4, scoped, tag = 'scoped memory for adversarial_decoder_forward.1']
    #allocation31 [shape = 'u8[16384]{0}', space=vmem, size = 0x4000, scoped, tag = 'output window, operand 0']
    %29 = vsyncpa [#allocation3], 0
    %s30 = scalar_lea.sflag [#allocation3], 1
    %31 = vsyncpa %s30, 0
    %32 = vsyncpa [#allocation6], 0
    %33 = vsyncpa [#allocation9], 0
    %34 = vsyncpa [#allocation12], 0
    %35 = vsyncpa [#allocation15], 0
    %36 = vsyncpa [#allocation18], 0
    %37 = vsyncpa [#allocation21], 0
    %38 = vsyncpa [#allocation24], 0
    %39 = vsyncpa [#allocation27], 0
    %40 = vsyncpa [#allocation30], 0
    %41 = vsyncpa [#allocation4], 0
    %s42 = scalar_lea.sflag [#allocation4], 1
    %43 = vsyncpa %s42, 0
    loop: start=0, step=1, limit=4
    $region2: #{adversarial_decoder_forward.1} parent=1 // loop_pre_header
      _
    $region3: #{adversarial_decoder_forward.1} parent=1 // loop_header
      %s45 = sphi 0, %s49
      %p46 = scmp.ge.s32.totalorder %s45, 4
      %s55 = sphi 0, %s57
      %s58 = sphi 0, %s55
      %s59 = sphi 0, %s58
      %s75 = sphi 0, %s59
      %s81 = sphi 0, %s83
      %s84 = sphi 0, %s81
      %s85 = sphi 0, %s84
      %s101 = sphi 0, %s85
      %s105 = sphi 0, %s105
      %s107 = sphi 0, %s105
      %s108 = sphi 0, %s107
      %s122 = sphi 0, %s108
      %s126 = sphi 0, %s126
      %s128 = sphi 0, %s126
      %s129 = sphi 0, %s128
      %s143 = sphi 0, %s129
      %s147 = sphi 0, %s147
      %s149 = sphi 0, %s147
      %s150 = sphi 0, %s149
      %s164 = sphi 0, %s150
      %s168 = sphi 0, %s168
      %s170 = sphi 0, %s168
      %s171 = sphi 0, %s170
      %s185 = sphi 0, %s171
      %s189 = sphi 0, %s189
      %s191 = sphi 0, %s189
      %s192 = sphi 0, %s191
      %s206 = sphi 0, %s192
      %s210 = sphi 0, %s210
      %s212 = sphi 0, %s210
      %s213 = sphi 0, %s212
      %s227 = sphi 0, %s213
      %s231 = sphi 0, %s231
      %s233 = sphi 0, %s231
      %s234 = sphi 0, %s233
      %s248 = sphi 0, %s234
      %s252 = sphi 0, %s252
      %s254 = sphi 0, %s252
      %s255 = sphi 0, %s254
      %s269 = sphi 0, %s255
      %s273 = sphi 0, %s273
      %s275 = sphi 0, %s273
      %s276 = sphi 0, %s275
      %s290 = sphi 0, %s276
      %s294 = sphi 0, %s294
      %s296 = sphi 0, %s294
      %s297 = sphi 0, %s296
      %s311 = sphi 0, %s297
      %s315 = sphi 0, %s315
      %s317 = sphi 0, %s315
      %s318 = sphi 0, %s317
      %s332 = sphi 0, %s318
      %s336 = sphi 0, %s336
      %s338 = sphi 0, %s336
      %s339 = sphi 0, %s338
      %s353 = sphi 0, %s339
      %s357 = sphi 0, %s357
      %s359 = sphi 0, %s357
      %s360 = sphi 0, %s359
      %s374 = sphi 0, %s360
      %s378 = sphi 0, %s378
      %s380 = sphi 0, %s378
      %s381 = sphi 0, %s380
      %s395 = sphi 0, %s381
      %s399 = sphi 0, %s399
      %s401 = sphi 0, %s399
      %s402 = sphi 0, %s401
      %s416 = sphi 0, %s402
      %s420 = sphi 0, %s420
      %s422 = sphi 0, %s420
      %s423 = sphi 0, %s422
      %s437 = sphi 0, %s423
      %s441 = sphi 0, %s441
      %s443 = sphi 0, %s441
      %s444 = sphi 0, %s443
      %s458 = sphi 0, %s444
      %s462 = sphi 0, %s462
      %s464 = sphi 0, %s462
      %s465 = sphi 0, %s464
      %s479 = sphi 0, %s465
      %s483 = sphi 0, %s483
      %s485 = sphi 0, %s483
      %s486 = sphi 0, %s485
      %s500 = sphi 0, %s486
      %s504 = sphi 0, %s504
      %s506 = sphi 0, %s504
      %s507 = sphi 0, %s506
      %s521 = sphi 0, %s507
      %s525 = sphi 0, %s525
      %s527 = sphi 0, %s525
      %s528 = sphi 0, %s527
      %s542 = sphi 0, %s528
      %s546 = sphi 0, %s546
      %s548 = sphi 0, %s546
      %s549 = sphi 0, %s548
      %s563 = sphi 0, %s549
      %s569 = sphi 0, %s571
      %s572 = sphi 0, %s569
      %s573 = sphi 0, %s572
      %s589 = sphi 0, %s573
    $region4: #{adversarial_decoder_forward.1} parent=1 // loop_header_branch
      %48 = sbr.rel (%p46) target = $region8
    $region5: #{adversarial_decoder_forward.1} parent=1 // loop_body
      %s50 = ssub.s32 %s45, 1
      %s51 = ssub.s32 %s45, 2
      %s52 = sadd.s32 %s45, 1
      %s53 = ssub.s32 %s45, %s52
      %p54 = scmp.eq.s32.totalorder %s53, 0
      %s56 = sadd.s32 %s55, 1
      %s57 = scalar_select %p54, %s55, %s56
      %p60 = pneg %p54
      %p61 = scmp.eq.s32.totalorder %s45, 1
      %p62 = por %p60, %p61
      %p63 = scmp.ne.s32.totalorder %s55, %s58
      %p64 = scmp.eq.s32.totalorder %s45, 0
      %p65 = por %p63, %p64
      %p66 = scmp.ne.s32.totalorder %s55, %s58
      %p67 = scmp.eq.s32.totalorder %s50, 1
      %p68 = por %p66, %p67
      %p69 = scmp.ne.s32.totalorder %s58, %s59
      %p70 = scmp.eq.s32.totalorder %s50, 0
      %p71 = por %p69, %p70
      %p72 = scmp.ne.s32.totalorder %s58, %s59
      %p73 = scmp.eq.s32.totalorder %s51, 1
      %p74 = por %p72, %p73
      %p76 = scmp.ne.s32.totalorder %s59, %s75
      %p77 = scmp.eq.s32.totalorder %s51, 0
      %p78 = por %p76, %p77
      %s79 = ssub.s32 %s45, %s52
      %p80 = scmp.eq.s32.totalorder %s79, 0
      %s82 = sadd.s32 %s81, 1
      %s83 = scalar_select %p80, %s81, %s82
      %p86 = pneg %p80
      %p87 = scmp.eq.s32.totalorder %s45, 1
      %p88 = por %p86, %p87
      %p89 = scmp.ne.s32.totalorder %s81, %s84
      %p90 = scmp.eq.s32.totalorder %s45, 0
      %p91 = por %p89, %p90
      %p92 = scmp.ne.s32.totalorder %s81, %s84
      %p93 = scmp.eq.s32.totalorder %s50, 1
      %p94 = por %p92, %p93
      %p95 = scmp.ne.s32.totalorder %s84, %s85
      %p96 = scmp.eq.s32.totalorder %s50, 0
      %p97 = por %p95, %p96
      %p98 = scmp.ne.s32.totalorder %s84, %s85
      %p99 = scmp.eq.s32.totalorder %s51, 1
      %p100 = por %p98, %p99
      %p102 = scmp.ne.s32.totalorder %s85, %s101
      %p103 = scmp.eq.s32.totalorder %s51, 0
      %p104 = por %p102, %p103
      %s106 = sadd.s32 %s105, 1
      %p109 = scmp.eq.s32.totalorder %s45, 1
      %p110 = scmp.ne.s32.totalorder %s105, %s107
      %p111 = scmp.eq.s32.totalorder %s45, 0
      %p112 = por %p110, %p111
      %p113 = scmp.ne.s32.totalorder %s105, %s107
      %p114 = scmp.eq.s32.totalorder %s50, 1
      %p115 = por %p113, %p114
      %p116 = scmp.ne.s32.totalorder %s107, %s108
      %p117 = scmp.eq.s32.totalorder %s50, 0
      %p118 = por %p116, %p117
      %p119 = scmp.ne.s32.totalorder %s107, %s108
      %p120 = scmp.eq.s32.totalorder %s51, 1
      %p121 = por %p119, %p120
      %p123 = scmp.ne.s32.totalorder %s108, %s122
      %p124 = scmp.eq.s32.totalorder %s51, 0
      %p125 = por %p123, %p124
      %s127 = sadd.s32 %s126, 1
      %p130 = scmp.eq.s32.totalorder %s45, 1
      %p131 = scmp.ne.s32.totalorder %s126, %s128
      %p132 = scmp.eq.s32.totalorder %s45, 0
      %p133 = por %p131, %p132
      %p134 = scmp.ne.s32.totalorder %s126, %s128
      %p135 = scmp.eq.s32.totalorder %s50, 1
      %p136 = por %p134, %p135
      %p137 = scmp.ne.s32.totalorder %s128, %s129
      %p138 = scmp.eq.s32.totalorder %s50, 0
      %p139 = por %p137, %p138
      %p140 = scmp.ne.s32.totalorder %s128, %s129
      %p141 = scmp.eq.s32.totalorder %s51, 1
      %p142 = por %p140, %p141
      %p144 = scmp.ne.s32.totalorder %s129, %s143
      %p145 = scmp.eq.s32.totalorder %s51, 0
      %p146 = por %p144, %p145
      %s148 = sadd.s32 %s147, 1
      %p151 = scmp.eq.s32.totalorder %s45, 1
      %p152 = scmp.ne.s32.totalorder %s147, %s149
      %p153 = scmp.eq.s32.totalorder %s45, 0
      %p154 = por %p152, %p153
      %p155 = scmp.ne.s32.totalorder %s147, %s149
      %p156 = scmp.eq.s32.totalorder %s50, 1
      %p157 = por %p155, %p156
      %p158 = scmp.ne.s32.totalorder %s149, %s150
      %p159 = scmp.eq.s32.totalorder %s50, 0
      %p160 = por %p158, %p159
      %p161 = scmp.ne.s32.totalorder %s149, %s150
      %p162 = scmp.eq.s32.totalorder %s51, 1
      %p163 = por %p161, %p162
      %p165 = scmp.ne.s32.totalorder %s150, %s164
      %p166 = scmp.eq.s32.totalorder %s51, 0
      %p167 = por %p165, %p166
      %s169 = sadd.s32 %s168, 1
      %p172 = scmp.eq.s32.totalorder %s45, 1
      %p173 = scmp.ne.s32.totalorder %s168, %s170
      %p174 = scmp.eq.s32.totalorder %s45, 0
      %p175 = por %p173, %p174
      %p176 = scmp.ne.s32.totalorder %s168, %s170
      %p177 = scmp.eq.s32.totalorder %s50, 1
      %p178 = por %p176, %p177
      %p179 = scmp.ne.s32.totalorder %s170, %s171
      %p180 = scmp.eq.s32.totalorder %s50, 0
      %p181 = por %p179, %p180
      %p182 = scmp.ne.s32.totalorder %s170, %s171
      %p183 = scmp.eq.s32.totalorder %s51, 1
      %p184 = por %p182, %p183
      %p186 = scmp.ne.s32.totalorder %s171, %s185
      %p187 = scmp.eq.s32.totalorder %s51, 0
      %p188 = por %p186, %p187
      %s190 = sadd.s32 %s189, 1
      %p193 = scmp.eq.s32.totalorder %s45, 1
      %p194 = scmp.ne.s32.totalorder %s189, %s191
      %p195 = scmp.eq.s32.totalorder %s45, 0
      %p196 = por %p194, %p195
      %p197 = scmp.ne.s32.totalorder %s189, %s191
      %p198 = scmp.eq.s32.totalorder %s50, 1
      %p199 = por %p197, %p198
      %p200 = scmp.ne.s32.totalorder %s191, %s192
      %p201 = scmp.eq.s32.totalorder %s50, 0
      %p202 = por %p200, %p201
      %p203 = scmp.ne.s32.totalorder %s191, %s192
      %p204 = scmp.eq.s32.totalorder %s51, 1
      %p205 = por %p203, %p204
      %p207 = scmp.ne.s32.totalorder %s192, %s206
      %p208 = scmp.eq.s32.totalorder %s51, 0
      %p209 = por %p207, %p208
      %s211 = sadd.s32 %s210, 1
      %p214 = scmp.eq.s32.totalorder %s45, 1
      %p215 = scmp.ne.s32.totalorder %s210, %s212
      %p216 = scmp.eq.s32.totalorder %s45, 0
      %p217 = por %p215, %p216
      %p218 = scmp.ne.s32.totalorder %s210, %s212
      %p219 = scmp.eq.s32.totalorder %s50, 1
      %p220 = por %p218, %p219
      %p221 = scmp.ne.s32.totalorder %s212, %s213
      %p222 = scmp.eq.s32.totalorder %s50, 0
      %p223 = por %p221, %p222
      %p224 = scmp.ne.s32.totalorder %s212, %s213
      %p225 = scmp.eq.s32.totalorder %s51, 1
      %p226 = por %p224, %p225
      %p228 = scmp.ne.s32.totalorder %s213, %s227
      %p229 = scmp.eq.s32.totalorder %s51, 0
      %p230 = por %p228, %p229
      %s232 = sadd.s32 %s231, 1
      %p235 = scmp.eq.s32.totalorder %s45, 1
      %p236 = scmp.ne.s32.totalorder %s231, %s233
      %p237 = scmp.eq.s32.totalorder %s45, 0
      %p238 = por %p236, %p237
      %p239 = scmp.ne.s32.totalorder %s231, %s233
      %p240 = scmp.eq.s32.totalorder %s50, 1
      %p241 = por %p239, %p240
      %p242 = scmp.ne.s32.totalorder %s233, %s234
      %p243 = scmp.eq.s32.totalorder %s50, 0
      %p244 = por %p242, %p243
      %p245 = scmp.ne.s32.totalorder %s233, %s234
      %p246 = scmp.eq.s32.totalorder %s51, 1
      %p247 = por %p245, %p246
      %p249 = scmp.ne.s32.totalorder %s234, %s248
      %p250 = scmp.eq.s32.totalorder %s51, 0
      %p251 = por %p249, %p250
      %s253 = sadd.s32 %s252, 1
      %p256 = scmp.eq.s32.totalorder %s45, 1
      %p257 = scmp.ne.s32.totalorder %s252, %s254
      %p258 = scmp.eq.s32.totalorder %s45, 0
      %p259 = por %p257, %p258
      %p260 = scmp.ne.s32.totalorder %s252, %s254
      %p261 = scmp.eq.s32.totalorder %s50, 1
      %p262 = por %p260, %p261
      %p263 = scmp.ne.s32.totalorder %s254, %s255
      %p264 = scmp.eq.s32.totalorder %s50, 0
      %p265 = por %p263, %p264
      %p266 = scmp.ne.s32.totalorder %s254, %s255
      %p267 = scmp.eq.s32.totalorder %s51, 1
      %p268 = por %p266, %p267
      %p270 = scmp.ne.s32.totalorder %s255, %s269
      %p271 = scmp.eq.s32.totalorder %s51, 0
      %p272 = por %p270, %p271
      %s274 = sadd.s32 %s273, 1
      %p277 = scmp.eq.s32.totalorder %s45, 1
      %p278 = scmp.ne.s32.totalorder %s273, %s275
      %p279 = scmp.eq.s32.totalorder %s45, 0
      %p280 = por %p278, %p279
      %p281 = scmp.ne.s32.totalorder %s273, %s275
      %p282 = scmp.eq.s32.totalorder %s50, 1
      %p283 = por %p281, %p282
      %p284 = scmp.ne.s32.totalorder %s275, %s276
      %p285 = scmp.eq.s32.totalorder %s50, 0
      %p286 = por %p284, %p285
      %p287 = scmp.ne.s32.totalorder %s275, %s276
      %p288 = scmp.eq.s32.totalorder %s51, 1
      %p289 = por %p287, %p288
      %p291 = scmp.ne.s32.totalorder %s276, %s290
      %p292 = scmp.eq.s32.totalorder %s51, 0
      %p293 = por %p291, %p292
      %s295 = sadd.s32 %s294, 1
      %p298 = scmp.eq.s32.totalorder %s45, 1
      %p299 = scmp.ne.s32.totalorder %s294, %s296
      %p300 = scmp.eq.s32.totalorder %s45, 0
      %p301 = por %p299, %p300
      %p302 = scmp.ne.s32.totalorder %s294, %s296
      %p303 = scmp.eq.s32.totalorder %s50, 1
      %p304 = por %p302, %p303
      %p305 = scmp.ne.s32.totalorder %s296, %s297
      %p306 = scmp.eq.s32.totalorder %s50, 0
      %p307 = por %p305, %p306
      %p308 = scmp.ne.s32.totalorder %s296, %s297
      %p309 = scmp.eq.s32.totalorder %s51, 1
      %p310 = por %p308, %p309
      %p312 = scmp.ne.s32.totalorder %s297, %s311
      %p313 = scmp.eq.s32.totalorder %s51, 0
      %p314 = por %p312, %p313
      %s316 = sadd.s32 %s315, 1
      %p319 = scmp.eq.s32.totalorder %s45, 1
      %p320 = scmp.ne.s32.totalorder %s315, %s317
      %p321 = scmp.eq.s32.totalorder %s45, 0
      %p322 = por %p320, %p321
      %p323 = scmp.ne.s32.totalorder %s315, %s317
      %p324 = scmp.eq.s32.totalorder %s50, 1
      %p325 = por %p323, %p324
      %p326 = scmp.ne.s32.totalorder %s317, %s318
      %p327 = scmp.eq.s32.totalorder %s50, 0
      %p328 = por %p326, %p327
      %p329 = scmp.ne.s32.totalorder %s317, %s318
      %p330 = scmp.eq.s32.totalorder %s51, 1
      %p331 = por %p329, %p330
      %p333 = scmp.ne.s32.totalorder %s318, %s332
      %p334 = scmp.eq.s32.totalorder %s51, 0
      %p335 = por %p333, %p334
      %s337 = sadd.s32 %s336, 1
      %p340 = scmp.eq.s32.totalorder %s45, 1
      %p341 = scmp.ne.s32.totalorder %s336, %s338
      %p342 = scmp.eq.s32.totalorder %s45, 0
      %p343 = por %p341, %p342
      %p344 = scmp.ne.s32.totalorder %s336, %s338
      %p345 = scmp.eq.s32.totalorder %s50, 1
      %p346 = por %p344, %p345
      %p347 = scmp.ne.s32.totalorder %s338, %s339
      %p348 = scmp.eq.s32.totalorder %s50, 0
      %p349 = por %p347, %p348
      %p350 = scmp.ne.s32.totalorder %s338, %s339
      %p351 = scmp.eq.s32.totalorder %s51, 1
      %p352 = por %p350, %p351
      %p354 = scmp.ne.s32.totalorder %s339, %s353
      %p355 = scmp.eq.s32.totalorder %s51, 0
      %p356 = por %p354, %p355
      %s358 = sadd.s32 %s357, 1
      %p361 = scmp.eq.s32.totalorder %s45, 1
      %p362 = scmp.ne.s32.totalorder %s357, %s359
      %p363 = scmp.eq.s32.totalorder %s45, 0
      %p364 = por %p362, %p363
      %p365 = scmp.ne.s32.totalorder %s357, %s359
      %p366 = scmp.eq.s32.totalorder %s50, 1
      %p367 = por %p365, %p366
      %p368 = scmp.ne.s32.totalorder %s359, %s360
      %p369 = scmp.eq.s32.totalorder %s50, 0
      %p370 = por %p368, %p369
      %p371 = scmp.ne.s32.totalorder %s359, %s360
      %p372 = scmp.eq.s32.totalorder %s51, 1
      %p373 = por %p371, %p372
      %p375 = scmp.ne.s32.totalorder %s360, %s374
      %p376 = scmp.eq.s32.totalorder %s51, 0
      %p377 = por %p375, %p376
      %s379 = sadd.s32 %s378, 1
      %p382 = scmp.eq.s32.totalorder %s45, 1
      %p383 = scmp.ne.s32.totalorder %s378, %s380
      %p384 = scmp.eq.s32.totalorder %s45, 0
      %p385 = por %p383, %p384
      %p386 = scmp.ne.s32.totalorder %s378, %s380
      %p387 = scmp.eq.s32.totalorder %s50, 1
      %p388 = por %p386, %p387
      %p389 = scmp.ne.s32.totalorder %s380, %s381
      %p390 = scmp.eq.s32.totalorder %s50, 0
      %p391 = por %p389, %p390
      %p392 = scmp.ne.s32.totalorder %s380, %s381
      %p393 = scmp.eq.s32.totalorder %s51, 1
      %p394 = por %p392, %p393
      %p396 = scmp.ne.s32.totalorder %s381, %s395
      %p397 = scmp.eq.s32.totalorder %s51, 0
      %p398 = por %p396, %p397
      %s400 = sadd.s32 %s399, 1
      %p403 = scmp.eq.s32.totalorder %s45, 1
      %p404 = scmp.ne.s32.totalorder %s399, %s401
      %p405 = scmp.eq.s32.totalorder %s45, 0
      %p406 = por %p404, %p405
      %p407 = scmp.ne.s32.totalorder %s399, %s401
      %p408 = scmp.eq.s32.totalorder %s50, 1
      %p409 = por %p407, %p408
      %p410 = scmp.ne.s32.totalorder %s401, %s402
      %p411 = scmp.eq.s32.totalorder %s50, 0
      %p412 = por %p410, %p411
      %p413 = scmp.ne.s32.totalorder %s401, %s402
      %p414 = scmp.eq.s32.totalorder %s51, 1
      %p415 = por %p413, %p414
      %p417 = scmp.ne.s32.totalorder %s402, %s416
      %p418 = scmp.eq.s32.totalorder %s51, 0
      %p419 = por %p417, %p418
      %s421 = sadd.s32 %s420, 1
      %p424 = scmp.eq.s32.totalorder %s45, 1
      %p425 = scmp.ne.s32.totalorder %s420, %s422
      %p426 = scmp.eq.s32.totalorder %s45, 0
      %p427 = por %p425, %p426
      %p428 = scmp.ne.s32.totalorder %s420, %s422
      %p429 = scmp.eq.s32.totalorder %s50, 1
      %p430 = por %p428, %p429
      %p431 = scmp.ne.s32.totalorder %s422, %s423
      %p432 = scmp.eq.s32.totalorder %s50, 0
      %p433 = por %p431, %p432
      %p434 = scmp.ne.s32.totalorder %s422, %s423
      %p435 = scmp.eq.s32.totalorder %s51, 1
      %p436 = por %p434, %p435
      %p438 = scmp.ne.s32.totalorder %s423, %s437
      %p439 = scmp.eq.s32.totalorder %s51, 0
      %p440 = por %p438, %p439
      %s442 = sadd.s32 %s441, 1
      %p445 = scmp.eq.s32.totalorder %s45, 1
      %p446 = scmp.ne.s32.totalorder %s441, %s443
      %p447 = scmp.eq.s32.totalorder %s45, 0
      %p448 = por %p446, %p447
      %p449 = scmp.ne.s32.totalorder %s441, %s443
      %p450 = scmp.eq.s32.totalorder %s50, 1
      %p451 = por %p449, %p450
      %p452 = scmp.ne.s32.totalorder %s443, %s444
      %p453 = scmp.eq.s32.totalorder %s50, 0
      %p454 = por %p452, %p453
      %p455 = scmp.ne.s32.totalorder %s443, %s444
      %p456 = scmp.eq.s32.totalorder %s51, 1
      %p457 = por %p455, %p456
      %p459 = scmp.ne.s32.totalorder %s444, %s458
      %p460 = scmp.eq.s32.totalorder %s51, 0
      %p461 = por %p459, %p460
      %s463 = sadd.s32 %s462, 1
      %p466 = scmp.eq.s32.totalorder %s45, 1
      %p467 = scmp.ne.s32.totalorder %s462, %s464
      %p468 = scmp.eq.s32.totalorder %s45, 0
      %p469 = por %p467, %p468
      %p470 = scmp.ne.s32.totalorder %s462, %s464
      %p471 = scmp.eq.s32.totalorder %s50, 1
      %p472 = por %p470, %p471
      %p473 = scmp.ne.s32.totalorder %s464, %s465
      %p474 = scmp.eq.s32.totalorder %s50, 0
      %p475 = por %p473, %p474
      %p476 = scmp.ne.s32.totalorder %s464, %s465
      %p477 = scmp.eq.s32.totalorder %s51, 1
      %p478 = por %p476, %p477
      %p480 = scmp.ne.s32.totalorder %s465, %s479
      %p481 = scmp.eq.s32.totalorder %s51, 0
      %p482 = por %p480, %p481
      %s484 = sadd.s32 %s483, 1
      %p487 = scmp.eq.s32.totalorder %s45, 1
      %p488 = scmp.ne.s32.totalorder %s483, %s485
      %p489 = scmp.eq.s32.totalorder %s45, 0
      %p490 = por %p488, %p489
      %p491 = scmp.ne.s32.totalorder %s483, %s485
      %p492 = scmp.eq.s32.totalorder %s50, 1
      %p493 = por %p491, %p492
      %p494 = scmp.ne.s32.totalorder %s485, %s486
      %p495 = scmp.eq.s32.totalorder %s50, 0
      %p496 = por %p494, %p495
      %p497 = scmp.ne.s32.totalorder %s485, %s486
      %p498 = scmp.eq.s32.totalorder %s51, 1
      %p499 = por %p497, %p498
      %p501 = scmp.ne.s32.totalorder %s486, %s500
      %p502 = scmp.eq.s32.totalorder %s51, 0
      %p503 = por %p501, %p502
      %s505 = sadd.s32 %s504, 1
      %p508 = scmp.eq.s32.totalorder %s45, 1
      %p509 = scmp.ne.s32.totalorder %s504, %s506
      %p510 = scmp.eq.s32.totalorder %s45, 0
      %p511 = por %p509, %p510
      %p512 = scmp.ne.s32.totalorder %s504, %s506
      %p513 = scmp.eq.s32.totalorder %s50, 1
      %p514 = por %p512, %p513
      %p515 = scmp.ne.s32.totalorder %s506, %s507
      %p516 = scmp.eq.s32.totalorder %s50, 0
      %p517 = por %p515, %p516
      %p518 = scmp.ne.s32.totalorder %s506, %s507
      %p519 = scmp.eq.s32.totalorder %s51, 1
      %p520 = por %p518, %p519
      %p522 = scmp.ne.s32.totalorder %s507, %s521
      %p523 = scmp.eq.s32.totalorder %s51, 0
      %p524 = por %p522, %p523
      %s526 = sadd.s32 %s525, 1
      %p529 = scmp.eq.s32.totalorder %s45, 1
      %p530 = scmp.ne.s32.totalorder %s525, %s527
      %p531 = scmp.eq.s32.totalorder %s45, 0
      %p532 = por %p530, %p531
      %p533 = scmp.ne.s32.totalorder %s525, %s527
      %p534 = scmp.eq.s32.totalorder %s50, 1
      %p535 = por %p533, %p534
      %p536 = scmp.ne.s32.totalorder %s527, %s528
      %p537 = scmp.eq.s32.totalorder %s50, 0
      %p538 = por %p536, %p537
      %p539 = scmp.ne.s32.totalorder %s527, %s528
      %p540 = scmp.eq.s32.totalorder %s51, 1
      %p541 = por %p539, %p540
      %p543 = scmp.ne.s32.totalorder %s528, %s542
      %p544 = scmp.eq.s32.totalorder %s51, 0
      %p545 = por %p543, %p544
      %s547 = sadd.s32 %s546, 1
      %p550 = scmp.eq.s32.totalorder %s45, 1
      %p551 = scmp.ne.s32.totalorder %s546, %s548
      %p552 = scmp.eq.s32.totalorder %s45, 0
      %p553 = por %p551, %p552
      %p554 = scmp.ne.s32.totalorder %s546, %s548
      %p555 = scmp.eq.s32.totalorder %s50, 1
      %p556 = por %p554, %p555
      %p557 = scmp.ne.s32.totalorder %s548, %s549
      %p558 = scmp.eq.s32.totalorder %s50, 0
      %p559 = por %p557, %p558
      %p560 = scmp.ne.s32.totalorder %s548, %s549
      %p561 = scmp.eq.s32.totalorder %s51, 1
      %p562 = por %p560, %p561
      %p564 = scmp.ne.s32.totalorder %s549, %s563
      %p565 = scmp.eq.s32.totalorder %s51, 0
      %p566 = por %p564, %p565
      %s567 = ssub.s32 %s45, %s52
      %p568 = scmp.eq.s32.totalorder %s567, 0
      %s570 = sadd.s32 %s569, 1
      %s571 = scalar_select %p568, %s569, %s570
      %p574 = pneg %p568
      %p575 = scmp.eq.s32.totalorder %s45, 1
      %p576 = por %p574, %p575
      %p577 = scmp.ne.s32.totalorder %s569, %s572
      %p578 = scmp.eq.s32.totalorder %s45, 0
      %p579 = por %p577, %p578
      %p580 = scmp.ne.s32.totalorder %s569, %s572
      %p581 = scmp.eq.s32.totalorder %s50, 1
      %p582 = por %p580, %p581
      %p583 = scmp.ne.s32.totalorder %s572, %s573
      %p584 = scmp.eq.s32.totalorder %s50, 0
      %p585 = por %p583, %p584
      %p586 = scmp.ne.s32.totalorder %s572, %s573
      %p587 = scmp.eq.s32.totalorder %s51, 1
      %p588 = por %p586, %p587
      %p590 = scmp.ne.s32.totalorder %s573, %s589
      %p591 = scmp.eq.s32.totalorder %s51, 0
      %p592 = por %p590, %p591
      %p593 = scmp.le.s32.totalorder 1, %s45
      %p594 = scmp.lt.s32.totalorder %s45, 3
      %p595 = pnand %p593, %p594
      %p596 = pneg %p595
      // Predicated region
      $region9: #{adversarial_decoder_forward.1} parent=5 // pred_check
        _
      $region10: #{adversarial_decoder_forward.1} parent=5 // pred_check_branch
        %598 = sbr.rel (%p595) target = $region12
      $region11: #{adversarial_decoder_forward.1} parent=5 // pred_region
        %s599 = ssub.s32 %s45, 1
        // Predicated region
        $region13: #{adversarial_decoder_forward.1} parent=11 // pred_check
          %p600 = pneg %p118
        $region14: #{adversarial_decoder_forward.1} parent=11 // pred_check_branch
          %602 = sbr.rel (%p600) target = $region16
        $region15: #{adversarial_decoder_forward.1} parent=11 // pred_region
          _
        $region16: #{adversarial_decoder_forward.1} parent=11 // pred_fallthru
          _
        // Predicated region
        $region17: #{adversarial_decoder_forward.1} parent=11 // pred_check
          %p603 = pneg %p139
        $region18: #{adversarial_decoder_forward.1} parent=11 // pred_check_branch
          %605 = sbr.rel (%p603) target = $region20
        $region19: #{adversarial_decoder_forward.1} parent=11 // pred_region
          _
        $region20: #{adversarial_decoder_forward.1} parent=11 // pred_fallthru
          _
        // Predicated region
        $region21: #{adversarial_decoder_forward.1} parent=11 // pred_check
          %p606 = pneg %p160
        $region22: #{adversarial_decoder_forward.1} parent=11 // pred_check_branch
          %608 = sbr.rel (%p606) target = $region24
        $region23: #{adversarial_decoder_forward.1} parent=11 // pred_region
          _
        $region24: #{adversarial_decoder_forward.1} parent=11 // pred_fallthru
          _
        // Predicated region
        $region25: #{adversarial_decoder_forward.1} parent=11 // pred_check
          %p609 = pneg %p181
        $region26: #{adversarial_decoder_forward.1} parent=11 // pred_check_branch
          %611 = sbr.rel (%p609) target = $region28
        $region27: #{adversarial_decoder_forward.1} parent=11 // pred_region
          _
        $region28: #{adversarial_decoder_forward.1} parent=11 // pred_fallthru
          _
        // Predicated region
        $region29: #{adversarial_decoder_forward.1} parent=11 // pred_check
          %p612 = pneg %p202
        $region30: #{adversarial_decoder_forward.1} parent=11 // pred_check_branch
          %614 = sbr.rel (%p612) target = $region32
        $region31: #{adversarial_decoder_forward.1} parent=11 // pred_region
          %616 = vsyncadd [#allocation6], 0
          %s617 = sshll.u32 %s6, 4
          %s618 = int_to_ptr.hbm [resolvable:$true] %s617
          %s619 = sshll.u32 [#allocation5], 4
          %s620 = int_to_ptr.vmem [resolvable:$true] %s619
          %625 = dma.hbm_to_vmem [thread:$0]  %s618, 4096, %s620, [#allocation6], 256, 256, 16
        $region32: #{adversarial_decoder_forward.1} parent=11 // pred_fallthru
          _
        // Predicated region
        $region33: #{adversarial_decoder_forward.1} parent=11 // pred_check
          %p626 = pneg %p223
        $region34: #{adversarial_decoder_forward.1} parent=11 // pred_check_branch
          %628 = sbr.rel (%p626) target = $region36
        $region35: #{adversarial_decoder_forward.1} parent=11 // pred_region
          %630 = vsyncadd [#allocation6], 0
          %s631 = sshll.u32 %s7, 4
          %s632 = int_to_ptr.hbm [resolvable:$true] %s631
          %s633 = sshll.u32 [#allocation7], 4
          %s634 = int_to_ptr.vmem [resolvable:$true] %s633
          %639 = dma.hbm_to_vmem [thread:$0]  %s632, 64, %s634, [#allocation6], 32, 32, 2
        $region36: #{adversarial_decoder_forward.1} parent=11 // pred_fallthru
          _
        // Predicated region
        $region37: #{adversarial_decoder_forward.1} parent=11 // pred_check
          %p640 = pneg %p244
        $region38: #{adversarial_decoder_forward.1} parent=11 // pred_check_branch
          %642 = sbr.rel (%p640) target = $region40
        $region39: #{adversarial_decoder_forward.1} parent=11 // pred_region
          %644 = vsyncadd [#allocation9], 0
          %s645 = sshll.u32 %s8, 4
          %s646 = int_to_ptr.hbm [resolvable:$true] %s645
          %s647 = sshll.u32 [#allocation8], 4
          %s648 = int_to_ptr.vmem [resolvable:$true] %s647
          %653 = dma.hbm_to_vmem [thread:$0]  %s646, 2048, %s648, [#allocation9], 128, 128, 8
        $region40: #{adversarial_decoder_forward.1} parent=11 // pred_fallthru
          _
        // Predicated region
        $region41: #{adversarial_decoder_forward.1} parent=11 // pred_check
          %p654 = pneg %p265
        $region42: #{adversarial_decoder_forward.1} parent=11 // pred_check_branch
          %656 = sbr.rel (%p654) target = $region44
        $region43: #{adversarial_decoder_forward.1} parent=11 // pred_region
          %658 = vsyncadd [#allocation9], 0
          %s659 = sshll.u32 %s9, 4
          %s660 = int_to_ptr.hbm [resolvable:$true] %s659
          %s661 = sshll.u32 [#allocation10], 4
          %s662 = int_to_ptr.vmem [resolvable:$true] %s661
          %667 = dma.hbm_to_vmem [thread:$0]  %s660, 32, %s662, [#allocation9], 16, 16, 1
        $region44: #{adversarial_decoder_forward.1} parent=11 // pred_fallthru
          _
        // Predicated region
        $region45: #{adversarial_decoder_forward.1} parent=11 // pred_check
          %p668 = pneg %p286
        $region46: #{adversarial_decoder_forward.1} parent=11 // pred_check_branch
          %670 = sbr.rel (%p668) target = $region48
        $region47: #{adversarial_decoder_forward.1} parent=11 // pred_region
          %672 = vsyncadd [#allocation12], 0
          %s673 = sshll.u32 %s10, 4
          %s674 = int_to_ptr.hbm [resolvable:$true] %s673
          %s675 = sshll.u32 [#allocation11], 4
          %s676 = int_to_ptr.vmem [resolvable:$true] %s675
          %681 = dma.hbm_to_vmem [thread:$0]  %s674, 2048, %s676, [#allocation12], 128, 128, 8
        $region48: #{adversarial_decoder_forward.1} parent=11 // pred_fallthru
          _
        // Predicated region
        $region49: #{adversarial_decoder_forward.1} parent=11 // pred_check
          %p682 = pneg %p307
        $region50: #{adversarial_decoder_forward.1} parent=11 // pred_check_branch
          %684 = sbr.rel (%p682) target = $region52
        $region51: #{adversarial_decoder_forward.1} parent=11 // pred_region
          %686 = vsyncadd [#allocation12], 0
          %s687 = sshll.u32 %s11, 4
          %s688 = int_to_ptr.hbm [resolvable:$true] %s687
          %s689 = sshll.u32 [#allocation13], 4
          %s690 = int_to_ptr.vmem [resolvable:$true] %s689
          %695 = dma.hbm_to_vmem [thread:$0]  %s688, 32, %s690, [#allocation12], 16, 16, 1
        $region52: #{adversarial_decoder_forward.1} parent=11 // pred_fallthru
          _
        // Predicated region
        $region53: #{adversarial_decoder_forward.1} parent=11 // pred_check
          %p696 = pneg %p328
        $region54: #{adversarial_decoder_forward.1} parent=11 // pred_check_branch
          %698 = sbr.rel (%p696) target = $region56
        $region55: #{adversarial_decoder_forward.1} parent=11 // pred_region
          _
        $region56: #{adversarial_decoder_forward.1} parent=11 // pred_fallthru
          _
        // Predicated region
        $region57: #{adversarial_decoder_forward.1} parent=11 // pred_check
          %p699 = pneg %p349
        $region58: #{adversarial_decoder_forward.1} parent=11 // pred_check_branch
          %701 = sbr.rel (%p699) target = $region60
        $region59: #{adversarial_decoder_forward.1} parent=11 // pred_region
          %703 = vsyncadd [#allocation15], 0
          %s704 = sshll.u32 %s13, 4
          %s705 = int_to_ptr.hbm [resolvable:$true] %s704
          %s706 = sshll.u32 [#allocation14], 4
          %s707 = int_to_ptr.vmem [resolvable:$true] %s706
          %712 = dma.hbm_to_vmem [thread:$0]  %s705, 32, %s707, [#allocation15], 16, 16, 1
        $region60: #{adversarial_decoder_forward.1} parent=11 // pred_fallthru
          _
        // Predicated region
        $region61: #{adversarial_decoder_forward.1} parent=11 // pred_check
          %p713 = pneg %p370
        $region62: #{adversarial_decoder_forward.1} parent=11 // pred_check_branch
          %715 = sbr.rel (%p713) target = $region64
        $region63: #{adversarial_decoder_forward.1} parent=11 // pred_region
          %717 = vsyncadd [#allocation15], 0
          %s718 = sshll.u32 %s14, 4
          %s719 = int_to_ptr.hbm [resolvable:$true] %s718
          %s720 = sshll.u32 [#allocation16], 4
          %s721 = int_to_ptr.vmem [resolvable:$true] %s720
          %726 = dma.hbm_to_vmem [thread:$0]  %s719, 32, %s721, [#allocation15], 16, 16, 1
        $region64: #{adversarial_decoder_forward.1} parent=11 // pred_fallthru
          _
        // Predicated region
        $region65: #{adversarial_decoder_forward.1} parent=11 // pred_check
          %p727 = pneg %p391
        $region66: #{adversarial_decoder_forward.1} parent=11 // pred_check_branch
          %729 = sbr.rel (%p727) target = $region68
        $region67: #{adversarial_decoder_forward.1} parent=11 // pred_region
          %731 = vsyncadd [#allocation18], 0
          %s732 = sshll.u32 %s15, 4
          %s733 = int_to_ptr.hbm [resolvable:$true] %s732
          %s734 = sshll.u32 [#allocation17], 4
          %s735 = int_to_ptr.vmem [resolvable:$true] %s734
          %740 = dma.hbm_to_vmem [thread:$0]  %s733, 32, %s735, [#allocation18], 16, 16, 1
        $region68: #{adversarial_decoder_forward.1} parent=11 // pred_fallthru
          _
        // Predicated region
        $region69: #{adversarial_decoder_forward.1} parent=11 // pred_check
          %p741 = pneg %p412
        $region70: #{adversarial_decoder_forward.1} parent=11 // pred_check_branch
          %743 = sbr.rel (%p741) target = $region72
        $region71: #{adversarial_decoder_forward.1} parent=11 // pred_region
          %745 = vsyncadd [#allocation18], 0
          %s746 = sshll.u32 %s16, 4
          %s747 = int_to_ptr.hbm [resolvable:$true] %s746
          %s748 = sshll.u32 [#allocation19], 4
          %s749 = int_to_ptr.vmem [resolvable:$true] %s748
          %754 = dma.hbm_to_vmem [thread:$0]  %s747, 32, %s749, [#allocation18], 16, 16, 1
        $region72: #{adversarial_decoder_forward.1} parent=11 // pred_fallthru
          _
        // Predicated region
        $region73: #{adversarial_decoder_forward.1} parent=11 // pred_check
          %p755 = pneg %p433
        $region74: #{adversarial_decoder_forward.1} parent=11 // pred_check_branch
          %757 = sbr.rel (%p755) target = $region76
        $region75: #{adversarial_decoder_forward.1} parent=11 // pred_region
          %759 = vsyncadd [#allocation21], 0
          %s760 = sshll.u32 %s17, 4
          %s761 = int_to_ptr.hbm [resolvable:$true] %s760
          %s762 = sshll.u32 [#allocation20], 4
          %s763 = int_to_ptr.vmem [resolvable:$true] %s762
          %768 = dma.hbm_to_vmem [thread:$0]  %s761, 32, %s763, [#allocation21], 16, 16, 1
        $region76: #{adversarial_decoder_forward.1} parent=11 // pred_fallthru
          _
        // Predicated region
        $region77: #{adversarial_decoder_forward.1} parent=11 // pred_check
          %p769 = pneg %p454
        $region78: #{adversarial_decoder_forward.1} parent=11 // pred_check_branch
          %771 = sbr.rel (%p769) target = $region80
        $region79: #{adversarial_decoder_forward.1} parent=11 // pred_region
          %773 = vsyncadd [#allocation21], 0
          %s774 = sshll.u32 %s18, 4
          %s775 = int_to_ptr.hbm [resolvable:$true] %s774
          %s776 = sshll.u32 [#allocation22], 4
          %s777 = int_to_ptr.vmem [resolvable:$true] %s776
          %782 = dma.hbm_to_vmem [thread:$0]  %s775, 32, %s777, [#allocation21], 16, 16, 1
        $region80: #{adversarial_decoder_forward.1} parent=11 // pred_fallthru
          _
        // Predicated region
        $region81: #{adversarial_decoder_forward.1} parent=11 // pred_check
          %p783 = pneg %p475
        $region82: #{adversarial_decoder_forward.1} parent=11 // pred_check_branch
          %785 = sbr.rel (%p783) target = $region84
        $region83: #{adversarial_decoder_forward.1} parent=11 // pred_region
          %787 = vsyncadd [#allocation24], 0
          %s788 = sshll.u32 %s19, 4
          %s789 = int_to_ptr.hbm [resolvable:$true] %s788
          %s790 = sshll.u32 [#allocation23], 4
          %s791 = int_to_ptr.vmem [resolvable:$true] %s790
          %796 = dma.hbm_to_vmem [thread:$0]  %s789, 32, %s791, [#allocation24], 16, 16, 1
        $region84: #{adversarial_decoder_forward.1} parent=11 // pred_fallthru
          _
        // Predicated region
        $region85: #{adversarial_decoder_forward.1} parent=11 // pred_check
          %p797 = pneg %p496
        $region86: #{adversarial_decoder_forward.1} parent=11 // pred_check_branch
          %799 = sbr.rel (%p797) target = $region88
        $region87: #{adversarial_decoder_forward.1} parent=11 // pred_region
          %801 = vsyncadd [#allocation24], 0
          %s803 = sshll.u32 %s20, 4
          %s804 = int_to_ptr.hbm [resolvable:$true] %s803
          %s805 = sshll.u32 [#allocation25], 4
          %s806 = int_to_ptr.vmem [resolvable:$true] %s805
          %808 = dma.hbm_to_vmem [thread:$0]  %s804, 16, %s806, [#allocation24]
        $region88: #{adversarial_decoder_forward.1} parent=11 // pred_fallthru
          _
        // Predicated region
        $region89: #{adversarial_decoder_forward.1} parent=11 // pred_check
          %p809 = pneg %p517
        $region90: #{adversarial_decoder_forward.1} parent=11 // pred_check_branch
          %811 = sbr.rel (%p809) target = $region92
        $region91: #{adversarial_decoder_forward.1} parent=11 // pred_region
          %813 = vsyncadd [#allocation27], 0
          %s815 = sshll.u32 %s21, 4
          %s816 = int_to_ptr.hbm [resolvable:$true] %s815
          %s817 = sshll.u32 [#allocation26], 4
          %s818 = int_to_ptr.vmem [resolvable:$true] %s817
          %820 = dma.hbm_to_vmem [thread:$0]  %s816, 16, %s818, [#allocation27]
        $region92: #{adversarial_decoder_forward.1} parent=11 // pred_fallthru
          _
        // Predicated region
        $region93: #{adversarial_decoder_forward.1} parent=11 // pred_check
          %p821 = pneg %p538
        $region94: #{adversarial_decoder_forward.1} parent=11 // pred_check_branch
          %823 = sbr.rel (%p821) target = $region96
        $region95: #{adversarial_decoder_forward.1} parent=11 // pred_region
          %825 = vsyncadd [#allocation27], 0
          %s826 = sshll.u32 %s22, 4
          %s827 = int_to_ptr.hbm [resolvable:$true] %s826
          %s828 = sshll.u32 [#allocation28], 4
          %s829 = int_to_ptr.vmem [resolvable:$true] %s828
          %834 = dma.hbm_to_vmem [thread:$0]  %s827, 2048, %s829, [#allocation27], 256, 256, 16
        $region96: #{adversarial_decoder_forward.1} parent=11 // pred_fallthru
          _
        // Predicated region
        $region97: #{adversarial_decoder_forward.1} parent=11 // pred_check
          %p835 = pneg %p559
        $region98: #{adversarial_decoder_forward.1} parent=11 // pred_check_branch
          %837 = sbr.rel (%p835) target = $region100
        $region99: #{adversarial_decoder_forward.1} parent=11 // pred_region
          %839 = vsyncadd [#allocation30], 0
          %s841 = sshll.u32 %s23, 4
          %s842 = int_to_ptr.hbm [resolvable:$true] %s841
          %s843 = sshll.u32 [#allocation29], 4
          %s844 = int_to_ptr.vmem [resolvable:$true] %s843
          %846 = dma.hbm_to_vmem [thread:$0]  %s842, 32, %s844, [#allocation30]
        $region100: #{adversarial_decoder_forward.1} parent=11 // pred_fallthru
          _
      $region12: #{adversarial_decoder_forward.1} parent=5 // pred_fallthru
        _
      %p847 = scmp.lt.s32.totalorder %s45, 2
      // Predicated region
      $region101: #{adversarial_decoder_forward.1} parent=5 // pred_check
        %p848 = pneg %p847
      $region102: #{adversarial_decoder_forward.1} parent=5 // pred_check_branch
        %850 = sbr.rel (%p848) target = $region104
      $region103: #{adversarial_decoder_forward.1} parent=5 // pred_region
        // Predicated region
        $region105: #{adversarial_decoder_forward.1} parent=103 // pred_check
          %p851 = pneg %p65
        $region106: #{adversarial_decoder_forward.1} parent=103 // pred_check_branch
          %853 = sbr.rel (%p851) target = $region108
        $region107: #{adversarial_decoder_forward.1} parent=103 // pred_region
          %p854 = scmp.lt.s32.totalorder %s45, 1
          %s855 = scalar_select %p854, %s45, 1
          %s856 = smul.addr %s855, 8
          %s857 = scalar_lea.vmem %s0, %s856
        $region108: #{adversarial_decoder_forward.1} parent=103 // pred_fallthru
          _
        // Predicated region
        $region109: #{adversarial_decoder_forward.1} parent=103 // pred_check
          %p858 = pneg %p91
        $region110: #{adversarial_decoder_forward.1} parent=103 // pred_check_branch
          %860 = sbr.rel (%p858) target = $region112
        $region111: #{adversarial_decoder_forward.1} parent=103 // pred_region
          %s861 = sand.u32 %s81, 1
          %s862 = scalar_lea.sflag [#allocation3], %s861
          %s863 = sand.u32 %s81, 1
          %s864 = smul.addr %s863, 8
          %s865 = scalar_lea.vmem [#allocation2], %s864
          %867 = vsyncadd %s862, 0
          %s868 = smul.addr %s45, 8
          %s869 = scalar_lea.hbm %s1, %s868
          %s871 = sshll.u32 %s869, 4
          %s872 = int_to_ptr.hbm [resolvable:$true] %s871
          %s873 = sshll.u32 %s865, 4
          %s874 = int_to_ptr.vmem [resolvable:$true] %s873
          %876 = dma.hbm_to_vmem [thread:$0]  %s872, 128, %s874, %s862
        $region112: #{adversarial_decoder_forward.1} parent=103 // pred_fallthru
          _
      $region104: #{adversarial_decoder_forward.1} parent=5 // pred_fallthru
        _
      %p877 = scmp.le.s32.totalorder 1, %s45
      %p878 = scmp.lt.s32.totalorder %s45, 3
      %p879 = pnand %p877, %p878
      %p880 = pneg %p879
      // Predicated region
      $region113: #{adversarial_decoder_forward.1} parent=5 // pred_check
        _
      $region114: #{adversarial_decoder_forward.1} parent=5 // pred_check_branch
        %882 = sbr.rel (%p879) target = $region116
      $region115: #{adversarial_decoder_forward.1} parent=5 // pred_region
        %s883 = ssub.s32 %s45, 1
        %s884 = sand.u32 %s84, 1
        %s885 = scalar_lea.sflag [#allocation3], %s884
        %s886 = sand.u32 %s84, 1
        %s887 = smul.addr %s886, 8
        %s888 = scalar_lea.vmem [#allocation2], %s887
        // Predicated region
        $region117: #{adversarial_decoder_forward.1} parent=115 // pred_check
          %p889 = pneg %p97
        $region118: #{adversarial_decoder_forward.1} parent=115 // pred_check_branch
          %891 = sbr.rel (%p889) target = $region120
        $region119: #{adversarial_decoder_forward.1} parent=115 // pred_region
          %893 = dma.done %s885, 128
        $region120: #{adversarial_decoder_forward.1} parent=115 // pred_fallthru
          _
        // Predicated region
        $region121: #{adversarial_decoder_forward.1} parent=115 // pred_check
          %p894 = pneg %p202
        $region122: #{adversarial_decoder_forward.1} parent=115 // pred_check_branch
          %896 = sbr.rel (%p894) target = $region124
        $region123: #{adversarial_decoder_forward.1} parent=115 // pred_region
          %898 = dma.done [#allocation6], 4096
        $region124: #{adversarial_decoder_forward.1} parent=115 // pred_fallthru
          _
        // Predicated region
        $region125: #{adversarial_decoder_forward.1} parent=115 // pred_check
          %p899 = pneg %p223
        $region126: #{adversarial_decoder_forward.1} parent=115 // pred_check_branch
          %901 = sbr.rel (%p899) target = $region128
        $region127: #{adversarial_decoder_forward.1} parent=115 // pred_region
          %903 = dma.done [#allocation6], 64
        $region128: #{adversarial_decoder_forward.1} parent=115 // pred_fallthru
          _
        // Predicated region
        $region129: #{adversarial_decoder_forward.1} parent=115 // pred_check
          %p904 = pneg %p244
        $region130: #{adversarial_decoder_forward.1} parent=115 // pred_check_branch
          %906 = sbr.rel (%p904) target = $region132
        $region131: #{adversarial_decoder_forward.1} parent=115 // pred_region
          %908 = dma.done [#allocation9], 2048
        $region132: #{adversarial_decoder_forward.1} parent=115 // pred_fallthru
          _
        // Predicated region
        $region133: #{adversarial_decoder_forward.1} parent=115 // pred_check
          %p909 = pneg %p265
        $region134: #{adversarial_decoder_forward.1} parent=115 // pred_check_branch
          %911 = sbr.rel (%p909) target = $region136
        $region135: #{adversarial_decoder_forward.1} parent=115 // pred_region
          %913 = dma.done [#allocation9], 32
        $region136: #{adversarial_decoder_forward.1} parent=115 // pred_fallthru
          _
        // Predicated region
        $region137: #{adversarial_decoder_forward.1} parent=115 // pred_check
          %p914 = pneg %p286
        $region138: #{adversarial_decoder_forward.1} parent=115 // pred_check_branch
          %916 = sbr.rel (%p914) target = $region140
        $region139: #{adversarial_decoder_forward.1} parent=115 // pred_region
          %918 = dma.done [#allocation12], 2048
        $region140: #{adversarial_decoder_forward.1} parent=115 // pred_fallthru
          _
        // Predicated region
        $region141: #{adversarial_decoder_forward.1} parent=115 // pred_check
          %p919 = pneg %p307
        $region142: #{adversarial_decoder_forward.1} parent=115 // pred_check_branch
          %921 = sbr.rel (%p919) target = $region144
        $region143: #{adversarial_decoder_forward.1} parent=115 // pred_region
          %923 = dma.done [#allocation12], 32
        $region144: #{adversarial_decoder_forward.1} parent=115 // pred_fallthru
          _
        // Predicated region
        $region145: #{adversarial_decoder_forward.1} parent=115 // pred_check
          %p924 = pneg %p349
        $region146: #{adversarial_decoder_forward.1} parent=115 // pred_check_branch
          %926 = sbr.rel (%p924) target = $region148
        $region147: #{adversarial_decoder_forward.1} parent=115 // pred_region
          %928 = dma.done [#allocation15], 32
        $region148: #{adversarial_decoder_forward.1} parent=115 // pred_fallthru
          _
        // Predicated region
        $region149: #{adversarial_decoder_forward.1} parent=115 // pred_check
          %p929 = pneg %p370
        $region150: #{adversarial_decoder_forward.1} parent=115 // pred_check_branch
          %931 = sbr.rel (%p929) target = $region152
        $region151: #{adversarial_decoder_forward.1} parent=115 // pred_region
          %933 = dma.done [#allocation15], 32
        $region152: #{adversarial_decoder_forward.1} parent=115 // pred_fallthru
          _
        // Predicated region
        $region153: #{adversarial_decoder_forward.1} parent=115 // pred_check
          %p934 = pneg %p391
        $region154: #{adversarial_decoder_forward.1} parent=115 // pred_check_branch
          %936 = sbr.rel (%p934) target = $region156
        $region155: #{adversarial_decoder_forward.1} parent=115 // pred_region
          %938 = dma.done [#allocation18], 32
        $region156: #{adversarial_decoder_forward.1} parent=115 // pred_fallthru
          _
        // Predicated region
        $region157: #{adversarial_decoder_forward.1} parent=115 // pred_check
          %p939 = pneg %p412
        $region158: #{adversarial_decoder_forward.1} parent=115 // pred_check_branch
          %941 = sbr.rel (%p939) target = $region160
        $region159: #{adversarial_decoder_forward.1} parent=115 // pred_region
          %943 = dma.done [#allocation18], 32
        $region160: #{adversarial_decoder_forward.1} parent=115 // pred_fallthru
          _
        // Predicated region
        $region161: #{adversarial_decoder_forward.1} parent=115 // pred_check
          %p944 = pneg %p433
        $region162: #{adversarial_decoder_forward.1} parent=115 // pred_check_branch
          %946 = sbr.rel (%p944) target = $region164
        $region163: #{adversarial_decoder_forward.1} parent=115 // pred_region
          %948 = dma.done [#allocation21], 32
        $region164: #{adversarial_decoder_forward.1} parent=115 // pred_fallthru
          _
        // Predicated region
        $region165: #{adversarial_decoder_forward.1} parent=115 // pred_check
          %p949 = pneg %p454
        $region166: #{adversarial_decoder_forward.1} parent=115 // pred_check_branch
          %951 = sbr.rel (%p949) target = $region168
        $region167: #{adversarial_decoder_forward.1} parent=115 // pred_region
          %953 = dma.done [#allocation21], 32
        $region168: #{adversarial_decoder_forward.1} parent=115 // pred_fallthru
          _
        // Predicated region
        $region169: #{adversarial_decoder_forward.1} parent=115 // pred_check
          %p954 = pneg %p475
        $region170: #{adversarial_decoder_forward.1} parent=115 // pred_check_branch
          %956 = sbr.rel (%p954) target = $region172
        $region171: #{adversarial_decoder_forward.1} parent=115 // pred_region
          %958 = dma.done [#allocation24], 32
        $region172: #{adversarial_decoder_forward.1} parent=115 // pred_fallthru
          _
        // Predicated region
        $region173: #{adversarial_decoder_forward.1} parent=115 // pred_check
          %p959 = pneg %p496
        $region174: #{adversarial_decoder_forward.1} parent=115 // pred_check_branch
          %961 = sbr.rel (%p959) target = $region176
        $region175: #{adversarial_decoder_forward.1} parent=115 // pred_region
          %963 = dma.done [#allocation24], 16
        $region176: #{adversarial_decoder_forward.1} parent=115 // pred_fallthru
          _
        // Predicated region
        $region177: #{adversarial_decoder_forward.1} parent=115 // pred_check
          %p964 = pneg %p517
        $region178: #{adversarial_decoder_forward.1} parent=115 // pred_check_branch
          %966 = sbr.rel (%p964) target = $region180
        $region179: #{adversarial_decoder_forward.1} parent=115 // pred_region
          %968 = dma.done [#allocation27], 16
        $region180: #{adversarial_decoder_forward.1} parent=115 // pred_fallthru
          _
        // Predicated region
        $region181: #{adversarial_decoder_forward.1} parent=115 // pred_check
          %p969 = pneg %p538
        $region182: #{adversarial_decoder_forward.1} parent=115 // pred_check_branch
          %971 = sbr.rel (%p969) target = $region184
        $region183: #{adversarial_decoder_forward.1} parent=115 // pred_region
          %973 = dma.done [#allocation27], 2048
        $region184: #{adversarial_decoder_forward.1} parent=115 // pred_fallthru
          _
        // Predicated region
        $region185: #{adversarial_decoder_forward.1} parent=115 // pred_check
          %p974 = pneg %p559
        $region186: #{adversarial_decoder_forward.1} parent=115 // pred_check_branch
          %976 = sbr.rel (%p974) target = $region188
        $region187: #{adversarial_decoder_forward.1} parent=115 // pred_region
          %978 = dma.done [#allocation30], 32
        $region188: #{adversarial_decoder_forward.1} parent=115 // pred_fallthru
          _
        %p979 = scmp.lt.s32.totalorder %s50, 1
        %s980 = scalar_select %p979, %s50, 1
        %s981 = smul.addr %s980, 8
        %s982 = scalar_lea.vmem %s0, %s981
        %p983 = pneg %p71
        %p984 = pneg %p68
        %s985 = sand.u32 %s84, 1
        %s986 = scalar_lea.sflag [#allocation3], %s985
        %s987 = sand.u32 %s84, 1
        %s988 = smul.addr %s987, 8
        %s989 = scalar_lea.vmem [#allocation2], %s988
        %p990 = pneg %p97
        %p991 = pneg %p94
        %p992 = pneg %p118
        %p993 = pneg %p115
        %p994 = pneg %p139
        %p995 = pneg %p136
        %p996 = pneg %p160
        %p997 = pneg %p157
        %p998 = pneg %p181
        %p999 = pneg %p178
        %p1000 = pneg %p202
        %p1001 = pneg %p199
        %p1002 = pneg %p223
        %p1003 = pneg %p220
        %p1004 = pneg %p244
        %p1005 = pneg %p241
        %p1006 = pneg %p265
        %p1007 = pneg %p262
        %p1008 = pneg %p286
        %p1009 = pneg %p283
        %p1010 = pneg %p307
        %p1011 = pneg %p304
        %p1012 = pneg %p328
        %p1013 = pneg %p325
        %p1014 = pneg %p349
        %p1015 = pneg %p346
        %p1016 = pneg %p370
        %p1017 = pneg %p367
        %p1018 = pneg %p391
        %p1019 = pneg %p388
        %p1020 = pneg %p412
        %p1021 = pneg %p409
        %p1022 = pneg %p433
        %p1023 = pneg %p430
        %p1024 = pneg %p454
        %p1025 = pneg %p451
        %p1026 = pneg %p475
        %p1027 = pneg %p472
        %p1028 = pneg %p496
        %p1029 = pneg %p493
        %p1030 = pneg %p517
        %p1031 = pneg %p514
        %p1032 = pneg %p538
        %p1033 = pneg %p535
        %p1034 = pneg %p559
        %p1035 = pneg %p556
        %p1036 = pneg %p585
        %p1037 = pneg %p582
        %s1038 = sand.u32 %s572, 1
        %s1039 = scalar_lea.sflag [#allocation4], %s1038
        %s1040 = sand.u32 %s572, 1
        %s1041 = smul.addr %s1040, 16
        %s1042 = scalar_lea.vmem [#allocation31], %s1041
        %p1043 = scmp.lt.s32.totalorder %s50, 1
        %s1044 = scalar_select %p1043, %s50, 1
        %s1045 = smul.addr %s1044, 8
        %s1046 = scalar_lea.vmem %s0, %s1045
        %v1047 = vld [vmem:[%s1046] sm:$0xff]
        %v1048 = vld [vmem:[%s888] sm:$0xff]
        %v1049 = vlaneseq
        %v1050 = vshrl.u32 %v1049, 7
        %v1051 = vlaneseq
        %v1052 = vand.u32 %v1051, 127
        %vm1053 = vcmp.le.s32.totalorder %v1052, %v1050
        %v1054 = vsel %vm1053, 0.0, -1e+30
        %v1055 = vld [vmem:[%s2] sm:$0xff]
        %v1056 = vld [vmem:[%s2 + $0x8] sm:$0xff]
        %v1057 = vld [vmem:[%s2 + $0x10] sm:$0xff]
        %v1058 = vld [vmem:[%s2 + $0x18] sm:$0xff]
        %v1059 = vld [vmem:[%s2 + $0x20] sm:$0xff]
        %v1060 = vld [vmem:[%s2 + $0x28] sm:$0xff]
        %v1061 = vld [vmem:[%s2 + $0x30] sm:$0xff]
        %v1062 = vld [vmem:[%s2 + $0x38] sm:$0xff]
        %v1063 = vld [vmem:[%s2 + $0x40] sm:$0xff]
        %v1064 = vld [vmem:[%s2 + $0x48] sm:$0xff]
        %v1065 = vld [vmem:[%s2 + $0x50] sm:$0xff]
        %v1066 = vld [vmem:[%s2 + $0x58] sm:$0xff]
        %v1067 = vld [vmem:[%s2 + $0x60] sm:$0xff]
        %v1068 = vld [vmem:[%s2 + $0x68] sm:$0xff]
        %v1069 = vld [vmem:[%s2 + $0x70] sm:$0xff]
        %v1070 = vld [vmem:[%s2 + $0x78] sm:$0xff]
        %v1071 = vld [vmem:[%s3] sm:$0x3]
        %v1072 = vld [vmem:[%s4] sm:$0xff]
        %v1073 = vld [vmem:[%s4 + $0x8] sm:$0xff]
        %v1074 = vld [vmem:[%s4 + $0x10] sm:$0xff]
        %v1075 = vld [vmem:[%s4 + $0x18] sm:$0xff]
        %v1076 = vld [vmem:[%s4 + $0x20] sm:$0xff]
        %v1077 = vld [vmem:[%s4 + $0x28] sm:$0xff]
        %v1078 = vld [vmem:[%s4 + $0x30] sm:$0xff]
        %v1079 = vld [vmem:[%s4 + $0x38] sm:$0xff]
        %v1080 = vld [vmem:[%s5] sm:$0x1]
        %v1082 = vperm.slane %v1071, 0
        %v1083 = vperm.slane %v1071, 1
        %vm1086 = vcmask 523264
        %v1088 = vsel %vm1086, %v1047, 0
        %1090 = vmatpush.msra.mxu0 0.0
        %1091 = vmatpush.msra.mxu0 0.0
        %1092 = vmatpush.msra.mxu0 0.0
        %1093 = vmatpush.msra.mxu0 0.0
        %1094 = vmatpush.msra.mxu0 0.0
        %1095 = vmatpush.msra.mxu0 0.0
        %1096 = vmatpush.msra.mxu0 0.0
        %1097 = vmatpush.msra.mxu0 0.0
        %1098 = vmatpush.msra.mxu0 %v1069
        %1099 = vmatpush.msra.mxu0 %v1067
        %1100 = vmatpush.msra.mxu0 %v1065
        %1101 = vmatpush.msra.mxu0 %v1063
        %1102 = vmatpush.msra.mxu0 %v1061
        %1103 = vmatpush.msra.mxu0 %v1059
        %1104 = vmatpush.msra.mxu0 %v1057
        %1105 = vmatpush.msra.mxu0 %v1055
        %1106 = vmatmul.f32.gmra.mxu0 %v1088
        %v1107 = vpop.f32.mrf.mxu0
        %v1108 = vadd.f32 %v1082, %v1107
        %1109 = vdwg.mxu0
        %1110 = vmatpush.msra.mxu0 0.0
        %1111 = vmatpush.msra.mxu0 0.0
        %1112 = vmatpush.msra.mxu0 0.0
        %1113 = vmatpush.msra.mxu0 0.0
        %1114 = vmatpush.msra.mxu0 0.0
        %1115 = vmatpush.msra.mxu0 0.0
        %1116 = vmatpush.msra.mxu0 0.0
        %1117 = vmatpush.msra.mxu0 0.0
        %1118 = vmatpush.msra.mxu0 %v1070
        %1119 = vmatpush.msra.mxu0 %v1068
        %1120 = vmatpush.msra.mxu0 %v1066
        %1121 = vmatpush.msra.mxu0 %v1064
        %1122 = vmatpush.msra.mxu0 %v1062
        %1123 = vmatpush.msra.mxu0 %v1060
        %1124 = vmatpush.msra.mxu0 %v1058
        %1125 = vmatpush.msra.mxu0 %v1056
        %1126 = vmatmul.f32.gmra.mxu0 %v1088
        %v1127 = vpop.f32.mrf.mxu0
        %v1128 = vadd.f32 %v1083, %v1127
        %1129 = vdwg.mxu0
        %1131 = vrot.lane.b32.xlu0 %v1108, 64
        %v1132 = vpop.permute.xlu0 %1131
        %vm1133 = vcmask 130048
        %v1134 = vsel %vm1133, %v1108, 0
        %v1136 = vsel %vm1133, %v1132, 0
        %1138 = vmatpush.xpose.msra.mxu0 0.0
        %1139 = vmatpush.xpose.msra.mxu0 0.0
        %1140 = vmatpush.xpose.msra.mxu0 0.0
        %1141 = vmatpush.xpose.msra.mxu0 0.0
        %1142 = vmatpush.xpose.msra.mxu0 0.0
        %1143 = vmatpush.xpose.msra.mxu0 0.0
        %1144 = vmatpush.xpose.msra.mxu0 0.0
        %1145 = vmatpush.xpose.msra.mxu0 0.0
        %1146 = vmatpush.xpose.msra.mxu0 0.0
        %1147 = vmatpush.xpose.msra.mxu0 0.0
        %1148 = vmatpush.xpose.msra.mxu0 0.0
        %1149 = vmatpush.xpose.msra.mxu0 0.0
        %1150 = vmatpush.xpose.msra.mxu0 0.0
        %1151 = vmatpush.xpose.msra.mxu0 0.0
        %1152 = vmatpush.xpose.msra.mxu0 0.0
        %1153 = vmatpush.xpose.msra.mxu0 %v1136
        %1154 = vmatmul.f32.gmra.mxu0 %v1134
        %v1155 = vpop.f32.mrf.mxu0
        %v1156 = vadd.f32 0.0, %v1155
        %1157 = vdwg.mxu0
        %v1158 = vmul.f32 %v1156, 0.25
        %v1159 = vadd.f32 %v1158, %v1054
        %vm1160 = vcmask 64512
        %v1161 = vsel %vm1160, %v1159, -inf
        %1162 = vmax.xlane.f32.xlu0 %v1161
        %v1163 = vpop.xlane.xlu0 %1162
        %v1164 = vsub.f32 %v1159, %v1163
        %v1165 = vmul.f32 %v1164, 1.442695
        %v1166 = vpow.pop %v1165
        %v1167 = vsel %vm1160, %v1166, 0.0
        %1168 = vadd.xlane.f32.xlu0 %v1167
        %v1169 = vpop.xlane.xlu0 %1168
        %v1170 = vrcp.pop %v1169
        %v1171 = vmul.f32 %v1166, %v1170
        %v1173 = vsel %vm1160, %v1171, 0
        %1175 = vmatpush.msra.mxu0 0.0
        %1176 = vmatpush.msra.mxu0 0.0
        %1177 = vmatpush.msra.mxu0 0.0
        %1178 = vmatpush.msra.mxu0 0.0
        %1179 = vmatpush.msra.mxu0 0.0
        %1180 = vmatpush.msra.mxu0 0.0
        %1181 = vmatpush.msra.mxu0 0.0
        %1182 = vmatpush.msra.mxu0 0.0
        %1183 = vmatpush.msra.mxu0 0.0
        %1184 = vmatpush.msra.mxu0 0.0
        %1185 = vmatpush.msra.mxu0 0.0
        %1186 = vmatpush.msra.mxu0 0.0
        %1187 = vmatpush.msra.mxu0 0.0
        %1188 = vmatpush.msra.mxu0 0.0
        %1189 = vmatpush.msra.mxu0 0.0
        %1190 = vmatpush.msra.mxu0 %v1128
        %1191 = vmatmul.f32.gmra.mxu0 %v1173
        %v1192 = vpop.f32.mrf.mxu0
        %v1193 = vadd.f32 0.0, %v1192
        %1194 = vdwg.mxu0
        %v1196 = vsel %vm1133, %v1193, 0
        %1198 = vmatpush.msra.mxu0 0.0
        %1199 = vmatpush.msra.mxu0 0.0
        %1200 = vmatpush.msra.mxu0 0.0
        %1201 = vmatpush.msra.mxu0 0.0
        %1202 = vmatpush.msra.mxu0 0.0
        %1203 = vmatpush.msra.mxu0 0.0
        %1204 = vmatpush.msra.mxu0 0.0
        %1205 = vmatpush.msra.mxu0 0.0
        %1206 = vmatpush.msra.mxu0 0.0
        %1207 = vmatpush.msra.mxu0 0.0
        %1208 = vmatpush.msra.mxu0 0.0
        %1209 = vmatpush.msra.mxu0 0.0
        %1210 = vmatpush.msra.mxu0 0.0
        %1211 = vmatpush.msra.mxu0 0.0
        %1212 = vmatpush.msra.mxu0 %v1073
        %1213 = vmatpush.msra.mxu0 %v1072
        %1214 = vmatmul.f32.gmra.mxu0 %v1196
        %v1215 = vpop.f32.mrf.mxu0
        %v1216 = vadd.f32 0.0, %v1215
        %1217 = vdwg.mxu0
        %v1219 = vperm.slane %v1080, 0
        %v1221 = vadd.f32 %v1219, %v1216
        %1222 = vrot.lane.b32.xlu0 %v1108, 112
        %v1223 = vpop.permute.xlu0 %1222
        %1224 = vrot.lane.b32.xlu0 %v1108, 48
        %v1225 = vpop.permute.xlu0 %1224
        %v1226 = vsel %vm1133, %v1223, 0
        %v1228 = vsel %vm1133, %v1225, 0
        %1230 = vmatpush.xpose.msra.mxu0 0.0
        %1231 = vmatpush.xpose.msra.mxu0 0.0
        %1232 = vmatpush.xpose.msra.mxu0 0.0
        %1233 = vmatpush.xpose.msra.mxu0 0.0
        %1234 = vmatpush.xpose.msra.mxu0 0.0
        %1235 = vmatpush.xpose.msra.mxu0 0.0
        %1236 = vmatpush.xpose.msra.mxu0 0.0
        %1237 = vmatpush.xpose.msra.mxu0 0.0
        %1238 = vmatpush.xpose.msra.mxu0 0.0
        %1239 = vmatpush.xpose.msra.mxu0 0.0
        %1240 = vmatpush.xpose.msra.mxu0 0.0
        %1241 = vmatpush.xpose.msra.mxu0 0.0
        %1242 = vmatpush.xpose.msra.mxu0 0.0
        %1243 = vmatpush.xpose.msra.mxu0 0.0
        %1244 = vmatpush.xpose.msra.mxu0 0.0
        %1245 = vmatpush.xpose.msra.mxu0 %v1228
        %1246 = vmatmul.f32.gmra.mxu0 %v1226
        %v1247 = vpop.f32.mrf.mxu0
        %v1248 = vadd.f32 0.0, %v1247
        %1249 = vdwg.mxu0
        %v1250 = vmul.f32 %v1248, 0.25
        %v1251 = vadd.f32 %v1250, %v1054
        %v1252 = vsel %vm1160, %v1251, -inf
        %1253 = vmax.xlane.f32.xlu0 %v1252
        %v1254 = vpop.xlane.xlu0 %1253
        %v1255 = vsub.f32 %v1251, %v1254
        %v1256 = vmul.f32 %v1255, 1.442695
        %v1257 = vpow.pop %v1256
        %v1258 = vsel %vm1160, %v1257, 0.0
        %1259 = vadd.xlane.f32.xlu0 %v1258
        %v1260 = vpop.xlane.xlu0 %1259
        %v1261 = vrcp.pop %v1260
        %v1262 = vmul.f32 %v1257, %v1261
        %1264 = vrot.lane.b32.xlu0 %v1128, 112
        %v1265 = vpop.permute.xlu0 %1264
        %v1268 = vsel %vm1160, %v1262, 0
        %1270 = vmatpush.msra.mxu0 0.0
        %1271 = vmatpush.msra.mxu0 0.0
        %1272 = vmatpush.msra.mxu0 0.0
        %1273 = vmatpush.msra.mxu0 0.0
        %1274 = vmatpush.msra.mxu0 0.0
        %1275 = vmatpush.msra.mxu0 0.0
        %1276 = vmatpush.msra.mxu0 0.0
        %1277 = vmatpush.msra.mxu0 0.0
        %1278 = vmatpush.msra.mxu0 0.0
        %1279 = vmatpush.msra.mxu0 0.0
        %1280 = vmatpush.msra.mxu0 0.0
        %1281 = vmatpush.msra.mxu0 0.0
        %1282 = vmatpush.msra.mxu0 0.0
        %1283 = vmatpush.msra.mxu0 0.0
        %1284 = vmatpush.msra.mxu0 0.0
        %1285 = vmatpush.msra.mxu0 %v1265
        %1286 = vmatmul.f32.gmra.mxu0 %v1268
        %v1287 = vpop.f32.mrf.mxu0
        %v1288 = vadd.f32 0.0, %v1287
        %1289 = vdwg.mxu0
        %v1291 = vsel %vm1133, %v1288, 0
        %1293 = vmatpush.msra.mxu0 0.0
        %1294 = vmatpush.msra.mxu0 0.0
        %1295 = vmatpush.msra.mxu0 0.0
        %1296 = vmatpush.msra.mxu0 0.0
        %1297 = vmatpush.msra.mxu0 0.0
        %1298 = vmatpush.msra.mxu0 0.0
        %1299 = vmatpush.msra.mxu0 0.0
        %1300 = vmatpush.msra.mxu0 0.0
        %1301 = vmatpush.msra.mxu0 0.0
        %1302 = vmatpush.msra.mxu0 0.0
        %1303 = vmatpush.msra.mxu0 0.0
        %1304 = vmatpush.msra.mxu0 0.0
        %1305 = vmatpush.msra.mxu0 0.0
        %1306 = vmatpush.msra.mxu0 0.0
        %1307 = vmatpush.msra.mxu0 %v1075
        %1308 = vmatpush.msra.mxu0 %v1074
        %1309 = vmatmul.f32.gmra.mxu0 %v1291
        %v1310 = vpop.f32.mrf.mxu0
        %v1311 = vadd.f32 0.0, %v1310
        %1312 = vdwg.mxu0
        %v1313 = vadd.f32 %v1221, %v1311
        %1314 = vrot.lane.b32.xlu0 %v1108, 96
        %v1315 = vpop.permute.xlu0 %1314
        %1316 = vrot.lane.b32.xlu0 %v1108, 32
        %v1317 = vpop.permute.xlu0 %1316
        %v1318 = vsel %vm1133, %v1315, 0
        %v1320 = vsel %vm1133, %v1317, 0
        %1322 = vmatpush.xpose.msra.mxu0 0.0
        %1323 = vmatpush.xpose.msra.mxu0 0.0
        %1324 = vmatpush.xpose.msra.mxu0 0.0
        %1325 = vmatpush.xpose.msra.mxu0 0.0
        %1326 = vmatpush.xpose.msra.mxu0 0.0
        %1327 = vmatpush.xpose.msra.mxu0 0.0
        %1328 = vmatpush.xpose.msra.mxu0 0.0
        %1329 = vmatpush.xpose.msra.mxu0 0.0
        %1330 = vmatpush.xpose.msra.mxu0 0.0
        %1331 = vmatpush.xpose.msra.mxu0 0.0
        %1332 = vmatpush.xpose.msra.mxu0 0.0
        %1333 = vmatpush.xpose.msra.mxu0 0.0
        %1334 = vmatpush.xpose.msra.mxu0 0.0
        %1335 = vmatpush.xpose.msra.mxu0 0.0
        %1336 = vmatpush.xpose.msra.mxu0 0.0
        %1337 = vmatpush.xpose.msra.mxu0 %v1320
        %1338 = vmatmul.f32.gmra.mxu0 %v1318
        %v1339 = vpop.f32.mrf.mxu0
        %v1340 = vadd.f32 0.0, %v1339
        %1341 = vdwg.mxu0
        %v1342 = vmul.f32 %v1340, 0.25
        %v1343 = vadd.f32 %v1342, %v1054
        %v1344 = vsel %vm1160, %v1343, -inf
        %1345 = vmax.xlane.f32.xlu0 %v1344
        %v1346 = vpop.xlane.xlu0 %1345
        %v1347 = vsub.f32 %v1343, %v1346
        %v1348 = vmul.f32 %v1347, 1.442695
        %v1349 = vpow.pop %v1348
        %v1350 = vsel %vm1160, %v1349, 0.0
        %1351 = vadd.xlane.f32.xlu0 %v1350
        %v1352 = vpop.xlane.xlu0 %1351
        %v1353 = vrcp.pop %v1352
        %v1354 = vmul.f32 %v1349, %v1353
        %1355 = vrot.lane.b32.xlu0 %v1128, 96
        %v1356 = vpop.permute.xlu0 %1355
        %v1359 = vsel %vm1160, %v1354, 0
        %1361 = vmatpush.msra.mxu0 0.0
        %1362 = vmatpush.msra.mxu0 0.0
        %1363 = vmatpush.msra.mxu0 0.0
        %1364 = vmatpush.msra.mxu0 0.0
        %1365 = vmatpush.msra.mxu0 0.0
        %1366 = vmatpush.msra.mxu0 0.0
        %1367 = vmatpush.msra.mxu0 0.0
        %1368 = vmatpush.msra.mxu0 0.0
        %1369 = vmatpush.msra.mxu0 0.0
        %1370 = vmatpush.msra.mxu0 0.0
        %1371 = vmatpush.msra.mxu0 0.0
        %1372 = vmatpush.msra.mxu0 0.0
        %1373 = vmatpush.msra.mxu0 0.0
        %1374 = vmatpush.msra.mxu0 0.0
        %1375 = vmatpush.msra.mxu0 0.0
        %1376 = vmatpush.msra.mxu0 %v1356
        %1377 = vmatmul.f32.gmra.mxu0 %v1359
        %v1378 = vpop.f32.mrf.mxu0
        %v1379 = vadd.f32 0.0, %v1378
        %1380 = vdwg.mxu0
        %v1382 = vsel %vm1133, %v1379, 0
        %1384 = vmatpush.msra.mxu0 0.0
        %1385 = vmatpush.msra.mxu0 0.0
        %1386 = vmatpush.msra.mxu0 0.0
        %1387 = vmatpush.msra.mxu0 0.0
        %1388 = vmatpush.msra.mxu0 0.0
        %1389 = vmatpush.msra.mxu0 0.0
        %1390 = vmatpush.msra.mxu0 0.0
        %1391 = vmatpush.msra.mxu0 0.0
        %1392 = vmatpush.msra.mxu0 0.0
        %1393 = vmatpush.msra.mxu0 0.0
        %1394 = vmatpush.msra.mxu0 0.0
        %1395 = vmatpush.msra.mxu0 0.0
        %1396 = vmatpush.msra.mxu0 0.0
        %1397 = vmatpush.msra.mxu0 0.0
        %1398 = vmatpush.msra.mxu0 %v1077
        %1399 = vmatpush.msra.mxu0 %v1076
        %1400 = vmatmul.f32.gmra.mxu0 %v1382
        %v1401 = vpop.f32.mrf.mxu0
        %v1402 = vadd.f32 0.0, %v1401
        %1403 = vdwg.mxu0
        %v1404 = vadd.f32 %v1313, %v1402
        %1405 = vrot.lane.b32.xlu0 %v1108, 80
        %v1406 = vpop.permute.xlu0 %1405
        %1407 = vrot.lane.b32.xlu0 %v1108, 16
        %v1408 = vpop.permute.xlu0 %1407
        %v1409 = vsel %vm1133, %v1406, 0
        %v1411 = vsel %vm1133, %v1408, 0
        %1413 = vmatpush.xpose.msra.mxu0 0.0
        %1414 = vmatpush.xpose.msra.mxu0 0.0
        %1415 = vmatpush.xpose.msra.mxu0 0.0
        %1416 = vmatpush.xpose.msra.mxu0 0.0
        %1417 = vmatpush.xpose.msra.mxu0 0.0
        %1418 = vmatpush.xpose.msra.mxu0 0.0
        %1419 = vmatpush.xpose.msra.mxu0 0.0
        %1420 = vmatpush.xpose.msra.mxu0 0.0
        %1421 = vmatpush.xpose.msra.mxu0 0.0
        %1422 = vmatpush.xpose.msra.mxu0 0.0
        %1423 = vmatpush.xpose.msra.mxu0 0.0
        %1424 = vmatpush.xpose.msra.mxu0 0.0
        %1425 = vmatpush.xpose.msra.mxu0 0.0
        %1426 = vmatpush.xpose.msra.mxu0 0.0
        %1427 = vmatpush.xpose.msra.mxu0 0.0
        %1428 = vmatpush.xpose.msra.mxu0 %v1411
        %1429 = vmatmul.f32.gmra.mxu0 %v1409
        %v1430 = vpop.f32.mrf.mxu0
        %v1431 = vadd.f32 0.0, %v1430
        %1432 = vdwg.mxu0
        %v1433 = vmul.f32 %v1431, 0.25
        %v1434 = vadd.f32 %v1433, %v1054
        %v1435 = vsel %vm1160, %v1434, -inf
        %1436 = vmax.xlane.f32.xlu0 %v1435
        %v1437 = vpop.xlane.xlu0 %1436
        %v1438 = vsub.f32 %v1434, %v1437
        %v1439 = vmul.f32 %v1438, 1.442695
        %v1440 = vpow.pop %v1439
        %v1441 = vsel %vm1160, %v1440, 0.0
        %1442 = vadd.xlane.f32.xlu0 %v1441
        %v1443 = vpop.xlane.xlu0 %1442
        %v1444 = vrcp.pop %v1443
        %v1445 = vmul.f32 %v1440, %v1444
        %1446 = vrot.lane.b32.xlu0 %v1128, 80
        %v1447 = vpop.permute.xlu0 %1446
        %v1450 = vsel %vm1160, %v1445, 0
        %1452 = vmatpush.msra.mxu0 0.0
        %1453 = vmatpush.msra.mxu0 0.0
        %1454 = vmatpush.msra.mxu0 0.0
        %1455 = vmatpush.msra.mxu0 0.0
        %1456 = vmatpush.msra.mxu0 0.0
        %1457 = vmatpush.msra.mxu0 0.0
        %1458 = vmatpush.msra.mxu0 0.0
        %1459 = vmatpush.msra.mxu0 0.0
        %1460 = vmatpush.msra.mxu0 0.0
        %1461 = vmatpush.msra.mxu0 0.0
        %1462 = vmatpush.msra.mxu0 0.0
        %1463 = vmatpush.msra.mxu0 0.0
        %1464 = vmatpush.msra.mxu0 0.0
        %1465 = vmatpush.msra.mxu0 0.0
        %1466 = vmatpush.msra.mxu0 0.0
        %1467 = vmatpush.msra.mxu0 %v1447
        %1468 = vmatmul.f32.gmra.mxu0 %v1450
        %v1469 = vpop.f32.mrf.mxu0
        %v1470 = vadd.f32 0.0, %v1469
        %1471 = vdwg.mxu0
        %v1473 = vsel %vm1133, %v1470, 0
        %1475 = vmatpush.msra.mxu0 0.0
        %1476 = vmatpush.msra.mxu0 0.0
        %1477 = vmatpush.msra.mxu0 0.0
        %1478 = vmatpush.msra.mxu0 0.0
        %1479 = vmatpush.msra.mxu0 0.0
        %1480 = vmatpush.msra.mxu0 0.0
        %1481 = vmatpush.msra.mxu0 0.0
        %1482 = vmatpush.msra.mxu0 0.0
        %1483 = vmatpush.msra.mxu0 0.0
        %1484 = vmatpush.msra.mxu0 0.0
        %1485 = vmatpush.msra.mxu0 0.0
        %1486 = vmatpush.msra.mxu0 0.0
        %1487 = vmatpush.msra.mxu0 0.0
        %1488 = vmatpush.msra.mxu0 0.0
        %1489 = vmatpush.msra.mxu0 %v1079
        %1490 = vmatpush.msra.mxu0 %v1078
        %1491 = vmatmul.f32.gmra.mxu0 %v1473
        %v1492 = vpop.f32.mrf.mxu0
        %v1493 = vadd.f32 0.0, %v1492
        %1494 = vdwg.mxu0
        %v1495 = vadd.f32 %v1404, %v1493
        %v1496 = vadd.f32 %v1047, %v1495
        %v1497 = vld [vmem:[#allocation16] sm:$0x1]
        %v1498 = vld [vmem:[#allocation17] sm:$0x1]
        %v1499 = vsel %vm1086, %v1496, 0.0
        %1500 = vadd.xlane.f32.xlu0 %v1499
        %v1501 = vpop.xlane.xlu0 %1500
        %v1502 = vrcp.pop 64.0
        %v1503 = vmul.f32 64.0, %v1502
        %v1504 = vsub.f32 1.0, %v1503
        %v1505 = vmul.f32 %v1502, %v1504
        %v1506 = vadd.f32 %v1502, %v1505
        %vm1507 = vweird.f32 %v1502
        %v1508 = vsel %vm1507, %v1502, %v1506
        %v1509 = vmul.f32 %v1501, %v1508
        %v1510 = vsub.f32 %v1496, %v1509
        %v1511 = vmul.f32 %v1510, %v1510
        %v1512 = vsel %vm1086, %v1511, 0.0
        %1513 = vadd.xlane.f32.xlu0 %v1512
        %v1514 = vpop.xlane.xlu0 %1513
        %v1515 = vmul.f32 %v1514, %v1508
        %v1516 = vadd.f32 %v1515, 1e-05
        %v1517 = vrsqrt.pop %v1516
        %v1518 = vmul.f32 %v1517, %v1516
        %v1519 = vmul.f32 %v1518, %v1517
        %v1520 = vmul.f32 0.5, %v1519
        %v1521 = vsub.f32 1.5, %v1520
        %v1522 = vmul.f32 %v1517, %v1521
        %vm1523 = vweird.f32 %v1516
        %vm1524 = vweird.f32 %v1517
        %vm1525 = vmor %vm1523, %vm1524
        %v1526 = vsel %vm1525, %v1517, %v1522
        %v1527 = vmul.f32 %v1510, %v1526
        %v1529 = vperm.slane %v1497, 0
        %v1531 = vmul.f32 %v1527, %v1529
        %v1533 = vperm.slane %v1498, 0
        %v1535 = vadd.f32 %v1531, %v1533
        %v1536 = vld [vmem:[#allocation5] sm:$0xff]
        %v1537 = vld [vmem:[#allocation5 + $0x8] sm:$0xff]
        %v1538 = vld [vmem:[#allocation5 + $0x10] sm:$0xff]
        %v1539 = vld [vmem:[#allocation5 + $0x18] sm:$0xff]
        %v1540 = vld [vmem:[#allocation5 + $0x20] sm:$0xff]
        %v1541 = vld [vmem:[#allocation5 + $0x28] sm:$0xff]
        %v1542 = vld [vmem:[#allocation5 + $0x30] sm:$0xff]
        %v1543 = vld [vmem:[#allocation5 + $0x38] sm:$0xff]
        %v1544 = vld [vmem:[#allocation5 + $0x40] sm:$0xff]
        %v1545 = vld [vmem:[#allocation5 + $0x48] sm:$0xff]
        %v1546 = vld [vmem:[#allocation5 + $0x50] sm:$0xff]
        %v1547 = vld [vmem:[#allocation5 + $0x58] sm:$0xff]
        %v1548 = vld [vmem:[#allocation5 + $0x60] sm:$0xff]
        %v1549 = vld [vmem:[#allocation5 + $0x68] sm:$0xff]
        %v1550 = vld [vmem:[#allocation5 + $0x70] sm:$0xff]
        %v1551 = vld [vmem:[#allocation5 + $0x78] sm:$0xff]
        %v1552 = vld [vmem:[#allocation7] sm:$0x3]
        %v1553 = vld [vmem:[#allocation8] sm:$0xff]
        %v1554 = vld [vmem:[#allocation8 + $0x8] sm:$0xff]
        %v1555 = vld [vmem:[#allocation8 + $0x10] sm:$0xff]
        %v1556 = vld [vmem:[#allocation8 + $0x18] sm:$0xff]
        %v1557 = vld [vmem:[#allocation8 + $0x20] sm:$0xff]
        %v1558 = vld [vmem:[#allocation8 + $0x28] sm:$0xff]
        %v1559 = vld [vmem:[#allocation8 + $0x30] sm:$0xff]
        %v1560 = vld [vmem:[#allocation8 + $0x38] sm:$0xff]
        %v1561 = vld [vmem:[#allocation10] sm:$0x1]
        %v1563 = vperm.slane %v1552, 0
        %v1566 = vsel %vm1086, %v1535, 0
        %1568 = vmatpush.msra.mxu0 0.0
        %1569 = vmatpush.msra.mxu0 0.0
        %1570 = vmatpush.msra.mxu0 0.0
        %1571 = vmatpush.msra.mxu0 0.0
        %1572 = vmatpush.msra.mxu0 0.0
        %1573 = vmatpush.msra.mxu0 0.0
        %1574 = vmatpush.msra.mxu0 0.0
        %1575 = vmatpush.msra.mxu0 0.0
        %1576 = vmatpush.msra.mxu0 %v1550
        %1577 = vmatpush.msra.mxu0 %v1548
        %1578 = vmatpush.msra.mxu0 %v1546
        %1579 = vmatpush.msra.mxu0 %v1544
        %1580 = vmatpush.msra.mxu0 %v1542
        %1581 = vmatpush.msra.mxu0 %v1540
        %1582 = vmatpush.msra.mxu0 %v1538
        %1583 = vmatpush.msra.mxu0 %v1536
        %1584 = vmatmul.f32.gmra.mxu0 %v1566
        %v1585 = vpop.f32.mrf.mxu0
        %v1586 = vadd.f32 %v1563, %v1585
        %1587 = vdwg.mxu0
        %v1588 = vperm.slane %v1552, 1
        %1605 = vrot.lane.b32.xlu0 %v1536, 64
        %v1606 = vpop.permute.xlu0 %1605
        %1607 = vrot.lane.b32.xlu0 %v1537, 64
        %v1608 = vpop.permute.xlu0 %1607
        %1609 = vrot.lane.b32.xlu0 %v1538, 64
        %v1610 = vpop.permute.xlu0 %1609
        %1611 = vrot.lane.b32.xlu0 %v1539, 64
        %v1612 = vpop.permute.xlu0 %1611
        %1613 = vrot.lane.b32.xlu0 %v1540, 64
        %v1614 = vpop.permute.xlu0 %1613
        %1615 = vrot.lane.b32.xlu0 %v1541, 64
        %v1616 = vpop.permute.xlu0 %1615
        %1617 = vrot.lane.b32.xlu0 %v1542, 64
        %v1618 = vpop.permute.xlu0 %1617
        %1619 = vrot.lane.b32.xlu0 %v1543, 64
        %v1620 = vpop.permute.xlu0 %1619
        %1621 = vrot.lane.b32.xlu0 %v1544, 64
        %v1622 = vpop.permute.xlu0 %1621
        %1623 = vrot.lane.b32.xlu0 %v1545, 64
        %v1624 = vpop.permute.xlu0 %1623
        %1625 = vrot.lane.b32.xlu0 %v1546, 64
        %v1626 = vpop.permute.xlu0 %1625
        %1627 = vrot.lane.b32.xlu0 %v1547, 64
        %v1628 = vpop.permute.xlu0 %1627
        %1629 = vrot.lane.b32.xlu0 %v1548, 64
        %v1630 = vpop.permute.xlu0 %1629
        %1631 = vrot.lane.b32.xlu0 %v1549, 64
        %v1632 = vpop.permute.xlu0 %1631
        %1633 = vrot.lane.b32.xlu0 %v1550, 64
        %v1634 = vpop.permute.xlu0 %1633
        %1635 = vrot.lane.b32.xlu0 %v1551, 64
        %v1636 = vpop.permute.xlu0 %1635
        %v1637 = vsel %vm1086, %v1606, %v1608
        %v1638 = vsel %vm1086, %v1610, %v1612
        %v1639 = vsel %vm1086, %v1614, %v1616
        %v1640 = vsel %vm1086, %v1618, %v1620
        %v1641 = vsel %vm1086, %v1622, %v1624
        %v1642 = vsel %vm1086, %v1626, %v1628
        %v1643 = vsel %vm1086, %v1630, %v1632
        %v1644 = vsel %vm1086, %v1634, %v1636
        %1653 = vrot.lane.b32.xlu0 %v1563, 64
        %v1654 = vpop.permute.xlu0 %1653
        %1655 = vrot.lane.b32.xlu0 %v1588, 64
        %v1656 = vpop.permute.xlu0 %1655
        %v1657 = vsel %vm1086, %v1654, %v1656
        %v1660 = vsel %vm1086, %v1048, 0
        %1662 = vmatpush.msra.mxu0 0.0
        %1663 = vmatpush.msra.mxu0 0.0
        %1664 = vmatpush.msra.mxu0 0.0
        %1665 = vmatpush.msra.mxu0 0.0
        %1666 = vmatpush.msra.mxu0 0.0
        %1667 = vmatpush.msra.mxu0 0.0
        %1668 = vmatpush.msra.mxu0 0.0
        %1669 = vmatpush.msra.mxu0 0.0
        %1670 = vmatpush.msra.mxu0 %v1644
        %1671 = vmatpush.msra.mxu0 %v1643
        %1672 = vmatpush.msra.mxu0 %v1642
        %1673 = vmatpush.msra.mxu0 %v1641
        %1674 = vmatpush.msra.mxu0 %v1640
        %1675 = vmatpush.msra.mxu0 %v1639
        %1676 = vmatpush.msra.mxu0 %v1638
        %1677 = vmatpush.msra.mxu0 %v1637
        %1678 = vmatmul.f32.gmra.mxu0 %v1660
        %v1679 = vpop.f32.mrf.mxu0
        %v1680 = vadd.f32 %v1657, %v1679
        %1681 = vdwg.mxu0
        %v1683 = vsel %vm1133, %v1586, 0
        %v1686 = vsel %vm1133, %v1680, 0
        %1688 = vmatpush.xpose.msra.mxu0 0.0
        %1689 = vmatpush.xpose.msra.mxu0 0.0
        %1690 = vmatpush.xpose.msra.mxu0 0.0
        %1691 = vmatpush.xpose.msra.mxu0 0.0
        %1692 = vmatpush.xpose.msra.mxu0 0.0
        %1693 = vmatpush.xpose.msra.mxu0 0.0
        %1694 = vmatpush.xpose.msra.mxu0 0.0
        %1695 = vmatpush.xpose.msra.mxu0 0.0
        %1696 = vmatpush.xpose.msra.mxu0 0.0
        %1697 = vmatpush.xpose.msra.mxu0 0.0
        %1698 = vmatpush.xpose.msra.mxu0 0.0
        %1699 = vmatpush.xpose.msra.mxu0 0.0
        %1700 = vmatpush.xpose.msra.mxu0 0.0
        %1701 = vmatpush.xpose.msra.mxu0 0.0
        %1702 = vmatpush.xpose.msra.mxu0 0.0
        %1703 = vmatpush.xpose.msra.mxu0 %v1686
        %1704 = vmatmul.f32.gmra.mxu0 %v1683
        %v1705 = vpop.f32.mrf.mxu0
        %v1706 = vadd.f32 0.0, %v1705
        %1707 = vdwg.mxu0
        %v1708 = vmul.f32 %v1706, 0.25
        %v1709 = vsel %vm1160, %v1708, -inf
        %1710 = vmax.xlane.f32.xlu0 %v1709
        %v1711 = vpop.xlane.xlu0 %1710
        %v1712 = vsub.f32 %v1708, %v1711
        %v1713 = vmul.f32 %v1712, 1.442695
        %v1714 = vpow.pop %v1713
        %v1715 = vsel %vm1160, %v1714, 0.0
        %1716 = vadd.xlane.f32.xlu0 %v1715
        %v1717 = vpop.xlane.xlu0 %1716
        %v1718 = vrcp.pop %v1717
        %v1719 = vmul.f32 %v1714, %v1718
        %1720 = vrot.lane.b32.xlu0 %v1680, 64
        %v1721 = vpop.permute.xlu0 %1720
        %v1724 = vsel %vm1160, %v1719, 0
        %1726 = vmatpush.msra.mxu0 0.0
        %1727 = vmatpush.msra.mxu0 0.0
        %1728 = vmatpush.msra.mxu0 0.0
        %1729 = vmatpush.msra.mxu0 0.0
        %1730 = vmatpush.msra.mxu0 0.0
        %1731 = vmatpush.msra.mxu0 0.0
        %1732 = vmatpush.msra.mxu0 0.0
        %1733 = vmatpush.msra.mxu0 0.0
        %1734 = vmatpush.msra.mxu0 0.0
        %1735 = vmatpush.msra.mxu0 0.0
        %1736 = vmatpush.msra.mxu0 0.0
        %1737 = vmatpush.msra.mxu0 0.0
        %1738 = vmatpush.msra.mxu0 0.0
        %1739 = vmatpush.msra.mxu0 0.0
        %1740 = vmatpush.msra.mxu0 0.0
        %1741 = vmatpush.msra.mxu0 %v1721
        %1742 = vmatmul.f32.gmra.mxu0 %v1724
        %v1743 = vpop.f32.mrf.mxu0
        %v1744 = vadd.f32 0.0, %v1743
        %1745 = vdwg.mxu0
        %v1747 = vsel %vm1133, %v1744, 0
        %1749 = vmatpush.msra.mxu0 0.0
        %1750 = vmatpush.msra.mxu0 0.0
        %1751 = vmatpush.msra.mxu0 0.0
        %1752 = vmatpush.msra.mxu0 0.0
        %1753 = vmatpush.msra.mxu0 0.0
        %1754 = vmatpush.msra.mxu0 0.0
        %1755 = vmatpush.msra.mxu0 0.0
        %1756 = vmatpush.msra.mxu0 0.0
        %1757 = vmatpush.msra.mxu0 0.0
        %1758 = vmatpush.msra.mxu0 0.0
        %1759 = vmatpush.msra.mxu0 0.0
        %1760 = vmatpush.msra.mxu0 0.0
        %1761 = vmatpush.msra.mxu0 0.0
        %1762 = vmatpush.msra.mxu0 0.0
        %1763 = vmatpush.msra.mxu0 %v1554
        %1764 = vmatpush.msra.mxu0 %v1553
        %1765 = vmatmul.f32.gmra.mxu0 %v1747
        %v1766 = vpop.f32.mrf.mxu0
        %v1767 = vadd.f32 0.0, %v1766
        %1768 = vdwg.mxu0
        %v1770 = vperm.slane %v1561, 0
        %v1772 = vadd.f32 %v1770, %v1767
        %1773 = vrot.lane.b32.xlu0 %v1586, 112
        %v1774 = vpop.permute.xlu0 %1773
        %1775 = vrot.lane.b32.xlu0 %v1680, 112
        %v1776 = vpop.permute.xlu0 %1775
        %v1777 = vsel %vm1133, %v1774, 0
        %v1779 = vsel %vm1133, %v1776, 0
        %1781 = vmatpush.xpose.msra.mxu0 0.0
        %1782 = vmatpush.xpose.msra.mxu0 0.0
        %1783 = vmatpush.xpose.msra.mxu0 0.0
        %1784 = vmatpush.xpose.msra.mxu0 0.0
        %1785 = vmatpush.xpose.msra.mxu0 0.0
        %1786 = vmatpush.xpose.msra.mxu0 0.0
        %1787 = vmatpush.xpose.msra.mxu0 0.0
        %1788 = vmatpush.xpose.msra.mxu0 0.0
        %1789 = vmatpush.xpose.msra.mxu0 0.0
        %1790 = vmatpush.xpose.msra.mxu0 0.0
        %1791 = vmatpush.xpose.msra.mxu0 0.0
        %1792 = vmatpush.xpose.msra.mxu0 0.0
        %1793 = vmatpush.xpose.msra.mxu0 0.0
        %1794 = vmatpush.xpose.msra.mxu0 0.0
        %1795 = vmatpush.xpose.msra.mxu0 0.0
        %1796 = vmatpush.xpose.msra.mxu0 %v1779
        %1797 = vmatmul.f32.gmra.mxu0 %v1777
        %v1798 = vpop.f32.mrf.mxu0
        %v1799 = vadd.f32 0.0, %v1798
        %1800 = vdwg.mxu0
        %v1801 = vmul.f32 %v1799, 0.25
        %v1802 = vsel %vm1160, %v1801, -inf
        %1803 = vmax.xlane.f32.xlu0 %v1802
        %v1804 = vpop.xlane.xlu0 %1803
        %v1805 = vsub.f32 %v1801, %v1804
        %v1806 = vmul.f32 %v1805, 1.442695
        %v1807 = vpow.pop %v1806
        %v1808 = vsel %vm1160, %v1807, 0.0
        %1809 = vadd.xlane.f32.xlu0 %v1808
        %v1810 = vpop.xlane.xlu0 %1809
        %v1811 = vrcp.pop %v1810
        %v1812 = vmul.f32 %v1807, %v1811
        %1813 = vrot.lane.b32.xlu0 %v1680, 48
        %v1814 = vpop.permute.xlu0 %1813
        %v1817 = vsel %vm1160, %v1812, 0
        %1819 = vmatpush.msra.mxu0 0.0
        %1820 = vmatpush.msra.mxu0 0.0
        %1821 = vmatpush.msra.mxu0 0.0
        %1822 = vmatpush.msra.mxu0 0.0
        %1823 = vmatpush.msra.mxu0 0.0
        %1824 = vmatpush.msra.mxu0 0.0
        %1825 = vmatpush.msra.mxu0 0.0
        %1826 = vmatpush.msra.mxu0 0.0
        %1827 = vmatpush.msra.mxu0 0.0
        %1828 = vmatpush.msra.mxu0 0.0
        %1829 = vmatpush.msra.mxu0 0.0
        %1830 = vmatpush.msra.mxu0 0.0
        %1831 = vmatpush.msra.mxu0 0.0
        %1832 = vmatpush.msra.mxu0 0.0
        %1833 = vmatpush.msra.mxu0 0.0
        %1834 = vmatpush.msra.mxu0 %v1814
        %1835 = vmatmul.f32.gmra.mxu0 %v1817
        %v1836 = vpop.f32.mrf.mxu0
        %v1837 = vadd.f32 0.0, %v1836
        %1838 = vdwg.mxu0
        %v1840 = vsel %vm1133, %v1837, 0
        %1842 = vmatpush.msra.mxu0 0.0
        %1843 = vmatpush.msra.mxu0 0.0
        %1844 = vmatpush.msra.mxu0 0.0
        %1845 = vmatpush.msra.mxu0 0.0
        %1846 = vmatpush.msra.mxu0 0.0
        %1847 = vmatpush.msra.mxu0 0.0
        %1848 = vmatpush.msra.mxu0 0.0
        %1849 = vmatpush.msra.mxu0 0.0
        %1850 = vmatpush.msra.mxu0 0.0
        %1851 = vmatpush.msra.mxu0 0.0
        %1852 = vmatpush.msra.mxu0 0.0
        %1853 = vmatpush.msra.mxu0 0.0
        %1854 = vmatpush.msra.mxu0 0.0
        %1855 = vmatpush.msra.mxu0 0.0
        %1856 = vmatpush.msra.mxu0 %v1556
        %1857 = vmatpush.msra.mxu0 %v1555
        %1858 = vmatmul.f32.gmra.mxu0 %v1840
        %v1859 = vpop.f32.mrf.mxu0
        %v1860 = vadd.f32 0.0, %v1859
        %1861 = vdwg.mxu0
        %v1862 = vadd.f32 %v1772, %v1860
        %1863 = vrot.lane.b32.xlu0 %v1586, 96
        %v1864 = vpop.permute.xlu0 %1863
        %1865 = vrot.lane.b32.xlu0 %v1680, 96
        %v1866 = vpop.permute.xlu0 %1865
        %v1867 = vsel %vm1133, %v1864, 0
        %v1869 = vsel %vm1133, %v1866, 0
        %1871 = vmatpush.xpose.msra.mxu0 0.0
        %1872 = vmatpush.xpose.msra.mxu0 0.0
        %1873 = vmatpush.xpose.msra.mxu0 0.0
        %1874 = vmatpush.xpose.msra.mxu0 0.0
        %1875 = vmatpush.xpose.msra.mxu0 0.0
        %1876 = vmatpush.xpose.msra.mxu0 0.0
        %1877 = vmatpush.xpose.msra.mxu0 0.0
        %1878 = vmatpush.xpose.msra.mxu0 0.0
        %1879 = vmatpush.xpose.msra.mxu0 0.0
        %1880 = vmatpush.xpose.msra.mxu0 0.0
        %1881 = vmatpush.xpose.msra.mxu0 0.0
        %1882 = vmatpush.xpose.msra.mxu0 0.0
        %1883 = vmatpush.xpose.msra.mxu0 0.0
        %1884 = vmatpush.xpose.msra.mxu0 0.0
        %1885 = vmatpush.xpose.msra.mxu0 0.0
        %1886 = vmatpush.xpose.msra.mxu0 %v1869
        %1887 = vmatmul.f32.gmra.mxu0 %v1867
        %v1888 = vpop.f32.mrf.mxu0
        %v1889 = vadd.f32 0.0, %v1888
        %1890 = vdwg.mxu0
        %v1891 = vmul.f32 %v1889, 0.25
        %v1892 = vsel %vm1160, %v1891, -inf
        %1893 = vmax.xlane.f32.xlu0 %v1892
        %v1894 = vpop.xlane.xlu0 %1893
        %v1895 = vsub.f32 %v1891, %v1894
        %v1896 = vmul.f32 %v1895, 1.442695
        %v1897 = vpow.pop %v1896
        %v1898 = vsel %vm1160, %v1897, 0.0
        %1899 = vadd.xlane.f32.xlu0 %v1898
        %v1900 = vpop.xlane.xlu0 %1899
        %v1901 = vrcp.pop %v1900
        %v1902 = vmul.f32 %v1897, %v1901
        %1903 = vrot.lane.b32.xlu0 %v1680, 32
        %v1904 = vpop.permute.xlu0 %1903
        %v1907 = vsel %vm1160, %v1902, 0
        %1909 = vmatpush.msra.mxu0 0.0
        %1910 = vmatpush.msra.mxu0 0.0
        %1911 = vmatpush.msra.mxu0 0.0
        %1912 = vmatpush.msra.mxu0 0.0
        %1913 = vmatpush.msra.mxu0 0.0
        %1914 = vmatpush.msra.mxu0 0.0
        %1915 = vmatpush.msra.mxu0 0.0
        %1916 = vmatpush.msra.mxu0 0.0
        %1917 = vmatpush.msra.mxu0 0.0
        %1918 = vmatpush.msra.mxu0 0.0
        %1919 = vmatpush.msra.mxu0 0.0
        %1920 = vmatpush.msra.mxu0 0.0
        %1921 = vmatpush.msra.mxu0 0.0
        %1922 = vmatpush.msra.mxu0 0.0
        %1923 = vmatpush.msra.mxu0 0.0
        %1924 = vmatpush.msra.mxu0 %v1904
        %1925 = vmatmul.f32.gmra.mxu0 %v1907
        %v1926 = vpop.f32.mrf.mxu0
        %v1927 = vadd.f32 0.0, %v1926
        %1928 = vdwg.mxu0
        %v1930 = vsel %vm1133, %v1927, 0
        %1932 = vmatpush.msra.mxu0 0.0
        %1933 = vmatpush.msra.mxu0 0.0
        %1934 = vmatpush.msra.mxu0 0.0
        %1935 = vmatpush.msra.mxu0 0.0
        %1936 = vmatpush.msra.mxu0 0.0
        %1937 = vmatpush.msra.mxu0 0.0
        %1938 = vmatpush.msra.mxu0 0.0
        %1939 = vmatpush.msra.mxu0 0.0
        %1940 = vmatpush.msra.mxu0 0.0
        %1941 = vmatpush.msra.mxu0 0.0
        %1942 = vmatpush.msra.mxu0 0.0
        %1943 = vmatpush.msra.mxu0 0.0
        %1944 = vmatpush.msra.mxu0 0.0
        %1945 = vmatpush.msra.mxu0 0.0
        %1946 = vmatpush.msra.mxu0 %v1558
        %1947 = vmatpush.msra.mxu0 %v1557
        %1948 = vmatmul.f32.gmra.mxu0 %v1930
        %v1949 = vpop.f32.mrf.mxu0
        %v1950 = vadd.f32 0.0, %v1949
        %1951 = vdwg.mxu0
        %v1952 = vadd.f32 %v1862, %v1950
        %1953 = vrot.lane.b32.xlu0 %v1586, 80
        %v1954 = vpop.permute.xlu0 %1953
        %1955 = vrot.lane.b32.xlu0 %v1680, 80
        %v1956 = vpop.permute.xlu0 %1955
        %v1957 = vsel %vm1133, %v1954, 0
        %v1959 = vsel %vm1133, %v1956, 0
        %1961 = vmatpush.xpose.msra.mxu0 0.0
        %1962 = vmatpush.xpose.msra.mxu0 0.0
        %1963 = vmatpush.xpose.msra.mxu0 0.0
        %1964 = vmatpush.xpose.msra.mxu0 0.0
        %1965 = vmatpush.xpose.msra.mxu0 0.0
        %1966 = vmatpush.xpose.msra.mxu0 0.0
        %1967 = vmatpush.xpose.msra.mxu0 0.0
        %1968 = vmatpush.xpose.msra.mxu0 0.0
        %1969 = vmatpush.xpose.msra.mxu0 0.0
        %1970 = vmatpush.xpose.msra.mxu0 0.0
        %1971 = vmatpush.xpose.msra.mxu0 0.0
        %1972 = vmatpush.xpose.msra.mxu0 0.0
        %1973 = vmatpush.xpose.msra.mxu0 0.0
        %1974 = vmatpush.xpose.msra.mxu0 0.0
        %1975 = vmatpush.xpose.msra.mxu0 0.0
        %1976 = vmatpush.xpose.msra.mxu0 %v1959
        %1977 = vmatmul.f32.gmra.mxu0 %v1957
        %v1978 = vpop.f32.mrf.mxu0
        %v1979 = vadd.f32 0.0, %v1978
        %1980 = vdwg.mxu0
        %v1981 = vmul.f32 %v1979, 0.25
        %v1982 = vsel %vm1160, %v1981, -inf
        %1983 = vmax.xlane.f32.xlu0 %v1982
        %v1984 = vpop.xlane.xlu0 %1983
        %v1985 = vsub.f32 %v1981, %v1984
        %v1986 = vmul.f32 %v1985, 1.442695
        %v1987 = vpow.pop %v1986
        %v1988 = vsel %vm1160, %v1987, 0.0
        %1989 = vadd.xlane.f32.xlu0 %v1988
        %v1990 = vpop.xlane.xlu0 %1989
        %v1991 = vrcp.pop %v1990
        %v1992 = vmul.f32 %v1987, %v1991
        %1993 = vrot.lane.b32.xlu0 %v1680, 16
        %v1994 = vpop.permute.xlu0 %1993
        %v1997 = vsel %vm1160, %v1992, 0
        %1999 = vmatpush.msra.mxu0 0.0
        %2000 = vmatpush.msra.mxu0 0.0
        %2001 = vmatpush.msra.mxu0 0.0
        %2002 = vmatpush.msra.mxu0 0.0
        %2003 = vmatpush.msra.mxu0 0.0
        %2004 = vmatpush.msra.mxu0 0.0
        %2005 = vmatpush.msra.mxu0 0.0
        %2006 = vmatpush.msra.mxu0 0.0
        %2007 = vmatpush.msra.mxu0 0.0
        %2008 = vmatpush.msra.mxu0 0.0
        %2009 = vmatpush.msra.mxu0 0.0
        %2010 = vmatpush.msra.mxu0 0.0
        %2011 = vmatpush.msra.mxu0 0.0
        %2012 = vmatpush.msra.mxu0 0.0
        %2013 = vmatpush.msra.mxu0 0.0
        %2014 = vmatpush.msra.mxu0 %v1994
        %2015 = vmatmul.f32.gmra.mxu0 %v1997
        %v2016 = vpop.f32.mrf.mxu0
        %v2017 = vadd.f32 0.0, %v2016
        %2018 = vdwg.mxu0
        %v2020 = vsel %vm1133, %v2017, 0
        %2022 = vmatpush.msra.mxu0 0.0
        %2023 = vmatpush.msra.mxu0 0.0
        %2024 = vmatpush.msra.mxu0 0.0
        %2025 = vmatpush.msra.mxu0 0.0
        %2026 = vmatpush.msra.mxu0 0.0
        %2027 = vmatpush.msra.mxu0 0.0
        %2028 = vmatpush.msra.mxu0 0.0
        %2029 = vmatpush.msra.mxu0 0.0
        %2030 = vmatpush.msra.mxu0 0.0
        %2031 = vmatpush.msra.mxu0 0.0
        %2032 = vmatpush.msra.mxu0 0.0
        %2033 = vmatpush.msra.mxu0 0.0
        %2034 = vmatpush.msra.mxu0 0.0
        %2035 = vmatpush.msra.mxu0 0.0
        %2036 = vmatpush.msra.mxu0 %v1560
        %2037 = vmatpush.msra.mxu0 %v1559
        %2038 = vmatmul.f32.gmra.mxu0 %v2020
        %v2039 = vpop.f32.mrf.mxu0
        %v2040 = vadd.f32 0.0, %v2039
        %2041 = vdwg.mxu0
        %v2042 = vadd.f32 %v1952, %v2040
        %v2043 = vadd.f32 %v1535, %v2042
        %v2044 = vld [vmem:[#allocation19] sm:$0x1]
        %v2045 = vld [vmem:[#allocation20] sm:$0x1]
        %v2046 = vsel %vm1086, %v2043, 0.0
        %2047 = vadd.xlane.f32.xlu0 %v2046
        %v2048 = vpop.xlane.xlu0 %2047
        %v2049 = vmul.f32 %v2048, %v1508
        %v2050 = vsub.f32 %v2043, %v2049
        %v2051 = vmul.f32 %v2050, %v2050
        %v2052 = vsel %vm1086, %v2051, 0.0
        %2053 = vadd.xlane.f32.xlu0 %v2052
        %v2054 = vpop.xlane.xlu0 %2053
        %v2055 = vmul.f32 %v2054, %v1508
        %v2056 = vadd.f32 %v2055, 1e-05
        %v2057 = vrsqrt.pop %v2056
        %v2058 = vmul.f32 %v2057, %v2056
        %v2059 = vmul.f32 %v2058, %v2057
        %v2060 = vmul.f32 0.5, %v2059
        %v2061 = vsub.f32 1.5, %v2060
        %v2062 = vmul.f32 %v2057, %v2061
        %vm2063 = vweird.f32 %v2056
        %vm2064 = vweird.f32 %v2057
        %vm2065 = vmor %vm2063, %vm2064
        %v2066 = vsel %vm2065, %v2057, %v2062
        %v2067 = vmul.f32 %v2050, %v2066
        %v2069 = vperm.slane %v2044, 0
        %v2071 = vmul.f32 %v2067, %v2069
        %v2073 = vperm.slane %v2045, 0
        %v2075 = vadd.f32 %v2071, %v2073
        %v2076 = vld [vmem:[#allocation11] sm:$0xff]
        %v2077 = vld [vmem:[#allocation11 + $0x8] sm:$0xff]
        %v2078 = vld [vmem:[#allocation11 + $0x10] sm:$0xff]
        %v2079 = vld [vmem:[#allocation11 + $0x18] sm:$0xff]
        %v2080 = vld [vmem:[#allocation11 + $0x20] sm:$0xff]
        %v2081 = vld [vmem:[#allocation11 + $0x28] sm:$0xff]
        %v2082 = vld [vmem:[#allocation11 + $0x30] sm:$0xff]
        %v2083 = vld [vmem:[#allocation11 + $0x38] sm:$0xff]
        %v2084 = vld [vmem:[#allocation13] sm:$0x1]
        %v2086 = vperm.slane %v2084, 0
        %v2089 = vsel %vm1086, %v2075, 0
        %2091 = vmatpush.msra.mxu0 0.0
        %2092 = vmatpush.msra.mxu0 0.0
        %2093 = vmatpush.msra.mxu0 0.0
        %2094 = vmatpush.msra.mxu0 0.0
        %2095 = vmatpush.msra.mxu0 0.0
        %2096 = vmatpush.msra.mxu0 0.0
        %2097 = vmatpush.msra.mxu0 0.0
        %2098 = vmatpush.msra.mxu0 0.0
        %2099 = vmatpush.msra.mxu0 %v2083
        %2100 = vmatpush.msra.mxu0 %v2082
        %2101 = vmatpush.msra.mxu0 %v2081
        %2102 = vmatpush.msra.mxu0 %v2080
        %2103 = vmatpush.msra.mxu0 %v2079
        %2104 = vmatpush.msra.mxu0 %v2078
        %2105 = vmatpush.msra.mxu0 %v2077
        %2106 = vmatpush.msra.mxu0 %v2076
        %2107 = vmatmul.f32.gmra.mxu0 %v2089
        %v2108 = vpop.f32.mrf.mxu0
        %v2109 = vadd.f32 %v2086, %v2108
        %2110 = vdwg.mxu0
        %v2111 = vmax.f32 %v2109, 0.0
        %v2112 = vld [vmem:[%s12] sm:$0xff]
        %v2113 = vld [vmem:[%s12 + $0x8] sm:$0xff]
        %v2114 = vld [vmem:[%s12 + $0x10] sm:$0xff]
        %v2115 = vld [vmem:[%s12 + $0x18] sm:$0xff]
        %v2116 = vld [vmem:[%s12 + $0x20] sm:$0xff]
        %v2117 = vld [vmem:[%s12 + $0x28] sm:$0xff]
        %v2118 = vld [vmem:[%s12 + $0x30] sm:$0xff]
        %v2119 = vld [vmem:[%s12 + $0x38] sm:$0xff]
        %v2120 = vld [vmem:[%s12 + $0x40] sm:$0xff]
        %v2121 = vld [vmem:[%s12 + $0x48] sm:$0xff]
        %v2122 = vld [vmem:[%s12 + $0x50] sm:$0xff]
        %v2123 = vld [vmem:[%s12 + $0x58] sm:$0xff]
        %v2124 = vld [vmem:[%s12 + $0x60] sm:$0xff]
        %v2125 = vld [vmem:[%s12 + $0x68] sm:$0xff]
        %v2126 = vld [vmem:[%s12 + $0x70] sm:$0xff]
        %v2127 = vld [vmem:[%s12 + $0x78] sm:$0xff]
        %v2128 = vld [vmem:[#allocation14] sm:$0x1]
        %v2130 = vperm.slane %v2128, 0
        %2132 = vmatpush.msra.mxu0 %v2127
        %2133 = vmatpush.msra.mxu0 %v2126
        %2134 = vmatpush.msra.mxu0 %v2125
        %2135 = vmatpush.msra.mxu0 %v2124
        %2136 = vmatpush.msra.mxu0 %v2123
        %2137 = vmatpush.msra.mxu0 %v2122
        %2138 = vmatpush.msra.mxu0 %v2121
        %2139 = vmatpush.msra.mxu0 %v2120
        %2140 = vmatpush.msra.mxu0 %v2119
        %2141 = vmatpush.msra.mxu0 %v2118
        %2142 = vmatpush.msra.mxu0 %v2117
        %2143 = vmatpush.msra.mxu0 %v2116
        %2144 = vmatpush.msra.mxu0 %v2115
        %2145 = vmatpush.msra.mxu0 %v2114
        %2146 = vmatpush.msra.mxu0 %v2113
        %2147 = vmatpush.msra.mxu0 %v2112
        %2148 = vmatmul.f32.gmra.mxu0 %v2111
        %v2149 = vpop.f32.mrf.mxu0
        %v2150 = vadd.f32 %v2130, %v2149
        %2151 = vdwg.mxu0
        %v2152 = vadd.f32 %v2075, %v2150
        %v2153 = vld [vmem:[#allocation22] sm:$0x1]
        %v2154 = vld [vmem:[#allocation23] sm:$0x1]
        %v2155 = vsel %vm1086, %v2152, 0.0
        %2156 = vadd.xlane.f32.xlu0 %v2155
        %v2157 = vpop.xlane.xlu0 %2156
        %v2158 = vmul.f32 %v2157, %v1508
        %v2159 = vsub.f32 %v2152, %v2158
        %v2160 = vmul.f32 %v2159, %v2159
        %v2161 = vsel %vm1086, %v2160, 0.0
        %2162 = vadd.xlane.f32.xlu0 %v2161
        %v2163 = vpop.xlane.xlu0 %2162
        %v2164 = vmul.f32 %v2163, %v1508
        %v2165 = vadd.f32 %v2164, 1e-05
        %v2166 = vrsqrt.pop %v2165
        %v2167 = vmul.f32 %v2166, %v2165
        %v2168 = vmul.f32 %v2167, %v2166
        %v2169 = vmul.f32 0.5, %v2168
        %v2170 = vsub.f32 1.5, %v2169
        %v2171 = vmul.f32 %v2166, %v2170
        %vm2172 = vweird.f32 %v2165
        %vm2173 = vweird.f32 %v2166
        %vm2174 = vmor %vm2172, %vm2173
        %v2175 = vsel %vm2174, %v2166, %v2171
        %v2176 = vmul.f32 %v2159, %v2175
        %v2178 = vperm.slane %v2153, 0
        %v2180 = vmul.f32 %v2176, %v2178
        %v2182 = vperm.slane %v2154, 0
        %v2184 = vadd.f32 %v2180, %v2182
        %s2185 = scalar_lea.vmem %s2, 128
        %v2186 = vld [vmem:[%s2185] sm:$0xff]
        %v2187 = vld [vmem:[%s2185 + $0x8] sm:$0xff]
        %v2188 = vld [vmem:[%s2185 + $0x10] sm:$0xff]
        %v2189 = vld [vmem:[%s2185 + $0x18] sm:$0xff]
        %v2190 = vld [vmem:[%s2185 + $0x20] sm:$0xff]
        %v2191 = vld [vmem:[%s2185 + $0x28] sm:$0xff]
        %v2192 = vld [vmem:[%s2185 + $0x30] sm:$0xff]
        %v2193 = vld [vmem:[%s2185 + $0x38] sm:$0xff]
        %v2194 = vld [vmem:[%s2185 + $0x40] sm:$0xff]
        %v2195 = vld [vmem:[%s2185 + $0x48] sm:$0xff]
        %v2196 = vld [vmem:[%s2185 + $0x50] sm:$0xff]
        %v2197 = vld [vmem:[%s2185 + $0x58] sm:$0xff]
        %v2198 = vld [vmem:[%s2185 + $0x60] sm:$0xff]
        %v2199 = vld [vmem:[%s2185 + $0x68] sm:$0xff]
        %v2200 = vld [vmem:[%s2185 + $0x70] sm:$0xff]
        %v2201 = vld [vmem:[%s2185 + $0x78] sm:$0xff]
        %s2202 = scalar_lea.vmem %s3, 2
        %v2203 = vld [vmem:[%s2202] sm:$0x3]
        %s2204 = scalar_lea.vmem %s4, 64
        %v2205 = vld [vmem:[%s2204] sm:$0xff]
        %v2206 = vld [vmem:[%s2204 + $0x8] sm:$0xff]
        %v2207 = vld [vmem:[%s2204 + $0x10] sm:$0xff]
        %v2208 = vld [vmem:[%s2204 + $0x18] sm:$0xff]
        %v2209 = vld [vmem:[%s2204 + $0x20] sm:$0xff]
        %v2210 = vld [vmem:[%s2204 + $0x28] sm:$0xff]
        %v2211 = vld [vmem:[%s2204 + $0x30] sm:$0xff]
        %v2212 = vld [vmem:[%s2204 + $0x38] sm:$0xff]
        %s2213 = scalar_lea.vmem %s5, 1
        %v2214 = vld [vmem:[%s2213] sm:$0x1]
        %v2216 = vperm.slane %v2203, 0
        %v2217 = vperm.slane %v2203, 1
        %v2221 = vsel %vm1086, %v2184, 0
        %2223 = vmatpush.msra.mxu0 0.0
        %2224 = vmatpush.msra.mxu0 0.0
        %2225 = vmatpush.msra.mxu0 0.0
        %2226 = vmatpush.msra.mxu0 0.0
        %2227 = vmatpush.msra.mxu0 0.0
        %2228 = vmatpush.msra.mxu0 0.0
        %2229 = vmatpush.msra.mxu0 0.0
        %2230 = vmatpush.msra.mxu0 0.0
        %2231 = vmatpush.msra.mxu0 %v2200
        %2232 = vmatpush.msra.mxu0 %v2198
        %2233 = vmatpush.msra.mxu0 %v2196
        %2234 = vmatpush.msra.mxu0 %v2194
        %2235 = vmatpush.msra.mxu0 %v2192
        %2236 = vmatpush.msra.mxu0 %v2190
        %2237 = vmatpush.msra.mxu0 %v2188
        %2238 = vmatpush.msra.mxu0 %v2186
        %2239 = vmatmul.f32.gmra.mxu0 %v2221
        %v2240 = vpop.f32.mrf.mxu0
        %v2241 = vadd.f32 %v2216, %v2240
        %2242 = vdwg.mxu0
        %2243 = vmatpush.msra.mxu0 0.0
        %2244 = vmatpush.msra.mxu0 0.0
        %2245 = vmatpush.msra.mxu0 0.0
        %2246 = vmatpush.msra.mxu0 0.0
        %2247 = vmatpush.msra.mxu0 0.0
        %2248 = vmatpush.msra.mxu0 0.0
        %2249 = vmatpush.msra.mxu0 0.0
        %2250 = vmatpush.msra.mxu0 0.0
        %2251 = vmatpush.msra.mxu0 %v2201
        %2252 = vmatpush.msra.mxu0 %v2199
        %2253 = vmatpush.msra.mxu0 %v2197
        %2254 = vmatpush.msra.mxu0 %v2195
        %2255 = vmatpush.msra.mxu0 %v2193
        %2256 = vmatpush.msra.mxu0 %v2191
        %2257 = vmatpush.msra.mxu0 %v2189
        %2258 = vmatpush.msra.mxu0 %v2187
        %2259 = vmatmul.f32.gmra.mxu0 %v2221
        %v2260 = vpop.f32.mrf.mxu0
        %v2261 = vadd.f32 %v2217, %v2260
        %2262 = vdwg.mxu0
        %2264 = vrot.lane.b32.xlu0 %v2241, 64
        %v2265 = vpop.permute.xlu0 %2264
        %v2266 = vsel %vm1133, %v2241, 0
        %v2268 = vsel %vm1133, %v2265, 0
        %2270 = vmatpush.xpose.msra.mxu0 0.0
        %2271 = vmatpush.xpose.msra.mxu0 0.0
        %2272 = vmatpush.xpose.msra.mxu0 0.0
        %2273 = vmatpush.xpose.msra.mxu0 0.0
        %2274 = vmatpush.xpose.msra.mxu0 0.0
        %2275 = vmatpush.xpose.msra.mxu0 0.0
        %2276 = vmatpush.xpose.msra.mxu0 0.0
        %2277 = vmatpush.xpose.msra.mxu0 0.0
        %2278 = vmatpush.xpose.msra.mxu0 0.0
        %2279 = vmatpush.xpose.msra.mxu0 0.0
        %2280 = vmatpush.xpose.msra.mxu0 0.0
        %2281 = vmatpush.xpose.msra.mxu0 0.0
        %2282 = vmatpush.xpose.msra.mxu0 0.0
        %2283 = vmatpush.xpose.msra.mxu0 0.0
        %2284 = vmatpush.xpose.msra.mxu0 0.0
        %2285 = vmatpush.xpose.msra.mxu0 %v2268
        %2286 = vmatmul.f32.gmra.mxu0 %v2266
        %v2287 = vpop.f32.mrf.mxu0
        %v2288 = vadd.f32 0.0, %v2287
        %2289 = vdwg.mxu0
        %v2290 = vmul.f32 %v2288, 0.25
        %v2291 = vadd.f32 %v2290, %v1054
        %v2292 = vsel %vm1160, %v2291, -inf
        %2293 = vmax.xlane.f32.xlu0 %v2292
        %v2294 = vpop.xlane.xlu0 %2293
        %v2295 = vsub.f32 %v2291, %v2294
        %v2296 = vmul.f32 %v2295, 1.442695
        %v2297 = vpow.pop %v2296
        %v2298 = vsel %vm1160, %v2297, 0.0
        %2299 = vadd.xlane.f32.xlu0 %v2298
        %v2300 = vpop.xlane.xlu0 %2299
        %v2301 = vrcp.pop %v2300
        %v2302 = vmul.f32 %v2297, %v2301
        %v2304 = vsel %vm1160, %v2302, 0
        %2306 = vmatpush.msra.mxu0 0.0
        %2307 = vmatpush.msra.mxu0 0.0
        %2308 = vmatpush.msra.mxu0 0.0
        %2309 = vmatpush.msra.mxu0 0.0
        %2310 = vmatpush.msra.mxu0 0.0
        %2311 = vmatpush.msra.mxu0 0.0
        %2312 = vmatpush.msra.mxu0 0.0
        %2313 = vmatpush.msra.mxu0 0.0
        %2314 = vmatpush.msra.mxu0 0.0
        %2315 = vmatpush.msra.mxu0 0.0
        %2316 = vmatpush.msra.mxu0 0.0
        %2317 = vmatpush.msra.mxu0 0.0
        %2318 = vmatpush.msra.mxu0 0.0
        %2319 = vmatpush.msra.mxu0 0.0
        %2320 = vmatpush.msra.mxu0 0.0
        %2321 = vmatpush.msra.mxu0 %v2261
        %2322 = vmatmul.f32.gmra.mxu0 %v2304
        %v2323 = vpop.f32.mrf.mxu0
        %v2324 = vadd.f32 0.0, %v2323
        %2325 = vdwg.mxu0
        %v2327 = vsel %vm1133, %v2324, 0
        %2329 = vmatpush.msra.mxu0 0.0
        %2330 = vmatpush.msra.mxu0 0.0
        %2331 = vmatpush.msra.mxu0 0.0
        %2332 = vmatpush.msra.mxu0 0.0
        %2333 = vmatpush.msra.mxu0 0.0
        %2334 = vmatpush.msra.mxu0 0.0
        %2335 = vmatpush.msra.mxu0 0.0
        %2336 = vmatpush.msra.mxu0 0.0
        %2337 = vmatpush.msra.mxu0 0.0
        %2338 = vmatpush.msra.mxu0 0.0
        %2339 = vmatpush.msra.mxu0 0.0
        %2340 = vmatpush.msra.mxu0 0.0
        %2341 = vmatpush.msra.mxu0 0.0
        %2342 = vmatpush.msra.mxu0 0.0
        %2343 = vmatpush.msra.mxu0 %v2206
        %2344 = vmatpush.msra.mxu0 %v2205
        %2345 = vmatmul.f32.gmra.mxu0 %v2327
        %v2346 = vpop.f32.mrf.mxu0
        %v2347 = vadd.f32 0.0, %v2346
        %2348 = vdwg.mxu0
        %v2350 = vperm.slane %v2214, 0
        %v2352 = vadd.f32 %v2350, %v2347
        %2353 = vrot.lane.b32.xlu0 %v2241, 112
        %v2354 = vpop.permute.xlu0 %2353
        %2355 = vrot.lane.b32.xlu0 %v2241, 48
        %v2356 = vpop.permute.xlu0 %2355
        %v2357 = vsel %vm1133, %v2354, 0
        %v2359 = vsel %vm1133, %v2356, 0
        %2361 = vmatpush.xpose.msra.mxu0 0.0
        %2362 = vmatpush.xpose.msra.mxu0 0.0
        %2363 = vmatpush.xpose.msra.mxu0 0.0
        %2364 = vmatpush.xpose.msra.mxu0 0.0
        %2365 = vmatpush.xpose.msra.mxu0 0.0
        %2366 = vmatpush.xpose.msra.mxu0 0.0
        %2367 = vmatpush.xpose.msra.mxu0 0.0
        %2368 = vmatpush.xpose.msra.mxu0 0.0
        %2369 = vmatpush.xpose.msra.mxu0 0.0
        %2370 = vmatpush.xpose.msra.mxu0 0.0
        %2371 = vmatpush.xpose.msra.mxu0 0.0
        %2372 = vmatpush.xpose.msra.mxu0 0.0
        %2373 = vmatpush.xpose.msra.mxu0 0.0
        %2374 = vmatpush.xpose.msra.mxu0 0.0
        %2375 = vmatpush.xpose.msra.mxu0 0.0
        %2376 = vmatpush.xpose.msra.mxu0 %v2359
        %2377 = vmatmul.f32.gmra.mxu0 %v2357
        %v2378 = vpop.f32.mrf.mxu0
        %v2379 = vadd.f32 0.0, %v2378
        %2380 = vdwg.mxu0
        %v2381 = vmul.f32 %v2379, 0.25
        %v2382 = vadd.f32 %v2381, %v1054
        %v2383 = vsel %vm1160, %v2382, -inf
        %2384 = vmax.xlane.f32.xlu0 %v2383
        %v2385 = vpop.xlane.xlu0 %2384
        %v2386 = vsub.f32 %v2382, %v2385
        %v2387 = vmul.f32 %v2386, 1.442695
        %v2388 = vpow.pop %v2387
        %v2389 = vsel %vm1160, %v2388, 0.0
        %2390 = vadd.xlane.f32.xlu0 %v2389
        %v2391 = vpop.xlane.xlu0 %2390
        %v2392 = vrcp.pop %v2391
        %v2393 = vmul.f32 %v2388, %v2392
        %2395 = vrot.lane.b32.xlu0 %v2261, 112
        %v2396 = vpop.permute.xlu0 %2395
        %v2399 = vsel %vm1160, %v2393, 0
        %2401 = vmatpush.msra.mxu0 0.0
        %2402 = vmatpush.msra.mxu0 0.0
        %2403 = vmatpush.msra.mxu0 0.0
        %2404 = vmatpush.msra.mxu0 0.0
        %2405 = vmatpush.msra.mxu0 0.0
        %2406 = vmatpush.msra.mxu0 0.0
        %2407 = vmatpush.msra.mxu0 0.0
        %2408 = vmatpush.msra.mxu0 0.0
        %2409 = vmatpush.msra.mxu0 0.0
        %2410 = vmatpush.msra.mxu0 0.0
        %2411 = vmatpush.msra.mxu0 0.0
        %2412 = vmatpush.msra.mxu0 0.0
        %2413 = vmatpush.msra.mxu0 0.0
        %2414 = vmatpush.msra.mxu0 0.0
        %2415 = vmatpush.msra.mxu0 0.0
        %2416 = vmatpush.msra.mxu0 %v2396
        %2417 = vmatmul.f32.gmra.mxu0 %v2399
        %v2418 = vpop.f32.mrf.mxu0
        %v2419 = vadd.f32 0.0, %v2418
        %2420 = vdwg.mxu0
        %v2422 = vsel %vm1133, %v2419, 0
        %2424 = vmatpush.msra.mxu0 0.0
        %2425 = vmatpush.msra.mxu0 0.0
        %2426 = vmatpush.msra.mxu0 0.0
        %2427 = vmatpush.msra.mxu0 0.0
        %2428 = vmatpush.msra.mxu0 0.0
        %2429 = vmatpush.msra.mxu0 0.0
        %2430 = vmatpush.msra.mxu0 0.0
        %2431 = vmatpush.msra.mxu0 0.0
        %2432 = vmatpush.msra.mxu0 0.0
        %2433 = vmatpush.msra.mxu0 0.0
        %2434 = vmatpush.msra.mxu0 0.0
        %2435 = vmatpush.msra.mxu0 0.0
        %2436 = vmatpush.msra.mxu0 0.0
        %2437 = vmatpush.msra.mxu0 0.0
        %2438 = vmatpush.msra.mxu0 %v2208
        %2439 = vmatpush.msra.mxu0 %v2207
        %2440 = vmatmul.f32.gmra.mxu0 %v2422
        %v2441 = vpop.f32.mrf.mxu0
        %v2442 = vadd.f32 0.0, %v2441
        %2443 = vdwg.mxu0
        %v2444 = vadd.f32 %v2352, %v2442
        %2445 = vrot.lane.b32.xlu0 %v2241, 96
        %v2446 = vpop.permute.xlu0 %2445
        %2447 = vrot.lane.b32.xlu0 %v2241, 32
        %v2448 = vpop.permute.xlu0 %2447
        %v2449 = vsel %vm1133, %v2446, 0
        %v2451 = vsel %vm1133, %v2448, 0
        %2453 = vmatpush.xpose.msra.mxu0 0.0
        %2454 = vmatpush.xpose.msra.mxu0 0.0
        %2455 = vmatpush.xpose.msra.mxu0 0.0
        %2456 = vmatpush.xpose.msra.mxu0 0.0
        %2457 = vmatpush.xpose.msra.mxu0 0.0
        %2458 = vmatpush.xpose.msra.mxu0 0.0
        %2459 = vmatpush.xpose.msra.mxu0 0.0
        %2460 = vmatpush.xpose.msra.mxu0 0.0
        %2461 = vmatpush.xpose.msra.mxu0 0.0
        %2462 = vmatpush.xpose.msra.mxu0 0.0
        %2463 = vmatpush.xpose.msra.mxu0 0.0
        %2464 = vmatpush.xpose.msra.mxu0 0.0
        %2465 = vmatpush.xpose.msra.mxu0 0.0
        %2466 = vmatpush.xpose.msra.mxu0 0.0
        %2467 = vmatpush.xpose.msra.mxu0 0.0
        %2468 = vmatpush.xpose.msra.mxu0 %v2451
        %2469 = vmatmul.f32.gmra.mxu0 %v2449
        %v2470 = vpop.f32.mrf.mxu0
        %v2471 = vadd.f32 0.0, %v2470
        %2472 = vdwg.mxu0
        %v2473 = vmul.f32 %v2471, 0.25
        %v2474 = vadd.f32 %v2473, %v1054
        %v2475 = vsel %vm1160, %v2474, -inf
        %2476 = vmax.xlane.f32.xlu0 %v2475
        %v2477 = vpop.xlane.xlu0 %2476
        %v2478 = vsub.f32 %v2474, %v2477
        %v2479 = vmul.f32 %v2478, 1.442695
        %v2480 = vpow.pop %v2479
        %v2481 = vsel %vm1160, %v2480, 0.0
        %2482 = vadd.xlane.f32.xlu0 %v2481
        %v2483 = vpop.xlane.xlu0 %2482
        %v2484 = vrcp.pop %v2483
        %v2485 = vmul.f32 %v2480, %v2484
        %2486 = vrot.lane.b32.xlu0 %v2261, 96
        %v2487 = vpop.permute.xlu0 %2486
        %v2490 = vsel %vm1160, %v2485, 0
        %2492 = vmatpush.msra.mxu0 0.0
        %2493 = vmatpush.msra.mxu0 0.0
        %2494 = vmatpush.msra.mxu0 0.0
        %2495 = vmatpush.msra.mxu0 0.0
        %2496 = vmatpush.msra.mxu0 0.0
        %2497 = vmatpush.msra.mxu0 0.0
        %2498 = vmatpush.msra.mxu0 0.0
        %2499 = vmatpush.msra.mxu0 0.0
        %2500 = vmatpush.msra.mxu0 0.0
        %2501 = vmatpush.msra.mxu0 0.0
        %2502 = vmatpush.msra.mxu0 0.0
        %2503 = vmatpush.msra.mxu0 0.0
        %2504 = vmatpush.msra.mxu0 0.0
        %2505 = vmatpush.msra.mxu0 0.0
        %2506 = vmatpush.msra.mxu0 0.0
        %2507 = vmatpush.msra.mxu0 %v2487
        %2508 = vmatmul.f32.gmra.mxu0 %v2490
        %v2509 = vpop.f32.mrf.mxu0
        %v2510 = vadd.f32 0.0, %v2509
        %2511 = vdwg.mxu0
        %v2513 = vsel %vm1133, %v2510, 0
        %2515 = vmatpush.msra.mxu0 0.0
        %2516 = vmatpush.msra.mxu0 0.0
        %2517 = vmatpush.msra.mxu0 0.0
        %2518 = vmatpush.msra.mxu0 0.0
        %2519 = vmatpush.msra.mxu0 0.0
        %2520 = vmatpush.msra.mxu0 0.0
        %2521 = vmatpush.msra.mxu0 0.0
        %2522 = vmatpush.msra.mxu0 0.0
        %2523 = vmatpush.msra.mxu0 0.0
        %2524 = vmatpush.msra.mxu0 0.0
        %2525 = vmatpush.msra.mxu0 0.0
        %2526 = vmatpush.msra.mxu0 0.0
        %2527 = vmatpush.msra.mxu0 0.0
        %2528 = vmatpush.msra.mxu0 0.0
        %2529 = vmatpush.msra.mxu0 %v2210
        %2530 = vmatpush.msra.mxu0 %v2209
        %2531 = vmatmul.f32.gmra.mxu0 %v2513
        %v2532 = vpop.f32.mrf.mxu0
        %v2533 = vadd.f32 0.0, %v2532
        %2534 = vdwg.mxu0
        %v2535 = vadd.f32 %v2444, %v2533
        %2536 = vrot.lane.b32.xlu0 %v2241, 80
        %v2537 = vpop.permute.xlu0 %2536
        %2538 = vrot.lane.b32.xlu0 %v2241, 16
        %v2539 = vpop.permute.xlu0 %2538
        %v2540 = vsel %vm1133, %v2537, 0
        %v2542 = vsel %vm1133, %v2539, 0
        %2544 = vmatpush.xpose.msra.mxu0 0.0
        %2545 = vmatpush.xpose.msra.mxu0 0.0
        %2546 = vmatpush.xpose.msra.mxu0 0.0
        %2547 = vmatpush.xpose.msra.mxu0 0.0
        %2548 = vmatpush.xpose.msra.mxu0 0.0
        %2549 = vmatpush.xpose.msra.mxu0 0.0
        %2550 = vmatpush.xpose.msra.mxu0 0.0
        %2551 = vmatpush.xpose.msra.mxu0 0.0
        %2552 = vmatpush.xpose.msra.mxu0 0.0
        %2553 = vmatpush.xpose.msra.mxu0 0.0
        %2554 = vmatpush.xpose.msra.mxu0 0.0
        %2555 = vmatpush.xpose.msra.mxu0 0.0
        %2556 = vmatpush.xpose.msra.mxu0 0.0
        %2557 = vmatpush.xpose.msra.mxu0 0.0
        %2558 = vmatpush.xpose.msra.mxu0 0.0
        %2559 = vmatpush.xpose.msra.mxu0 %v2542
        %2560 = vmatmul.f32.gmra.mxu0 %v2540
        %v2561 = vpop.f32.mrf.mxu0
        %v2562 = vadd.f32 0.0, %v2561
        %2563 = vdwg.mxu0
        %v2564 = vmul.f32 %v2562, 0.25
        %v2565 = vadd.f32 %v2564, %v1054
        %v2566 = vsel %vm1160, %v2565, -inf
        %2567 = vmax.xlane.f32.xlu0 %v2566
        %v2568 = vpop.xlane.xlu0 %2567
        %v2569 = vsub.f32 %v2565, %v2568
        %v2570 = vmul.f32 %v2569, 1.442695
        %v2571 = vpow.pop %v2570
        %v2572 = vsel %vm1160, %v2571, 0.0
        %2573 = vadd.xlane.f32.xlu0 %v2572
        %v2574 = vpop.xlane.xlu0 %2573
        %v2575 = vrcp.pop %v2574
        %v2576 = vmul.f32 %v2571, %v2575
        %2577 = vrot.lane.b32.xlu0 %v2261, 80
        %v2578 = vpop.permute.xlu0 %2577
        %v2581 = vsel %vm1160, %v2576, 0
        %2583 = vmatpush.msra.mxu0 0.0
        %2584 = vmatpush.msra.mxu0 0.0
        %2585 = vmatpush.msra.mxu0 0.0
        %2586 = vmatpush.msra.mxu0 0.0
        %2587 = vmatpush.msra.mxu0 0.0
        %2588 = vmatpush.msra.mxu0 0.0
        %2589 = vmatpush.msra.mxu0 0.0
        %2590 = vmatpush.msra.mxu0 0.0
        %2591 = vmatpush.msra.mxu0 0.0
        %2592 = vmatpush.msra.mxu0 0.0
        %2593 = vmatpush.msra.mxu0 0.0
        %2594 = vmatpush.msra.mxu0 0.0
        %2595 = vmatpush.msra.mxu0 0.0
        %2596 = vmatpush.msra.mxu0 0.0
        %2597 = vmatpush.msra.mxu0 0.0
        %2598 = vmatpush.msra.mxu0 %v2578
        %2599 = vmatmul.f32.gmra.mxu0 %v2581
        %v2600 = vpop.f32.mrf.mxu0
        %v2601 = vadd.f32 0.0, %v2600
        %2602 = vdwg.mxu0
        %v2604 = vsel %vm1133, %v2601, 0
        %2606 = vmatpush.msra.mxu0 0.0
        %2607 = vmatpush.msra.mxu0 0.0
        %2608 = vmatpush.msra.mxu0 0.0
        %2609 = vmatpush.msra.mxu0 0.0
        %2610 = vmatpush.msra.mxu0 0.0
        %2611 = vmatpush.msra.mxu0 0.0
        %2612 = vmatpush.msra.mxu0 0.0
        %2613 = vmatpush.msra.mxu0 0.0
        %2614 = vmatpush.msra.mxu0 0.0
        %2615 = vmatpush.msra.mxu0 0.0
        %2616 = vmatpush.msra.mxu0 0.0
        %2617 = vmatpush.msra.mxu0 0.0
        %2618 = vmatpush.msra.mxu0 0.0
        %2619 = vmatpush.msra.mxu0 0.0
        %2620 = vmatpush.msra.mxu0 %v2212
        %2621 = vmatpush.msra.mxu0 %v2211
        %2622 = vmatmul.f32.gmra.mxu0 %v2604
        %v2623 = vpop.f32.mrf.mxu0
        %v2624 = vadd.f32 0.0, %v2623
        %2625 = vdwg.mxu0
        %v2626 = vadd.f32 %v2535, %v2624
        %v2627 = vadd.f32 %v2184, %v2626
        %s2628 = scalar_lea.vmem [#allocation16], 1
        %v2629 = vld [vmem:[%s2628] sm:$0x1]
        %s2630 = scalar_lea.vmem [#allocation17], 1
        %v2631 = vld [vmem:[%s2630] sm:$0x1]
        %v2632 = vsel %vm1086, %v2627, 0.0
        %2633 = vadd.xlane.f32.xlu0 %v2632
        %v2634 = vpop.xlane.xlu0 %2633
        %v2635 = vmul.f32 %v2634, %v1508
        %v2636 = vsub.f32 %v2627, %v2635
        %v2637 = vmul.f32 %v2636, %v2636
        %v2638 = vsel %vm1086, %v2637, 0.0
        %2639 = vadd.xlane.f32.xlu0 %v2638
        %v2640 = vpop.xlane.xlu0 %2639
        %v2641 = vmul.f32 %v2640, %v1508
        %v2642 = vadd.f32 %v2641, 1e-05
        %v2643 = vrsqrt.pop %v2642
        %v2644 = vmul.f32 %v2643, %v2642
        %v2645 = vmul.f32 %v2644, %v2643
        %v2646 = vmul.f32 0.5, %v2645
        %v2647 = vsub.f32 1.5, %v2646
        %v2648 = vmul.f32 %v2643, %v2647
        %vm2649 = vweird.f32 %v2642
        %vm2650 = vweird.f32 %v2643
        %vm2651 = vmor %vm2649, %vm2650
        %v2652 = vsel %vm2651, %v2643, %v2648
        %v2653 = vmul.f32 %v2636, %v2652
        %v2655 = vperm.slane %v2629, 0
        %v2657 = vmul.f32 %v2653, %v2655
        %v2659 = vperm.slane %v2631, 0
        %v2661 = vadd.f32 %v2657, %v2659
        %s2662 = scalar_lea.vmem [#allocation5], 128
        %v2663 = vld [vmem:[%s2662] sm:$0xff]
        %v2664 = vld [vmem:[%s2662 + $0x8] sm:$0xff]
        %v2665 = vld [vmem:[%s2662 + $0x10] sm:$0xff]
        %v2666 = vld [vmem:[%s2662 + $0x18] sm:$0xff]
        %v2667 = vld [vmem:[%s2662 + $0x20] sm:$0xff]
        %v2668 = vld [vmem:[%s2662 + $0x28] sm:$0xff]
        %v2669 = vld [vmem:[%s2662 + $0x30] sm:$0xff]
        %v2670 = vld [vmem:[%s2662 + $0x38] sm:$0xff]
        %v2671 = vld [vmem:[%s2662 + $0x40] sm:$0xff]
        %v2672 = vld [vmem:[%s2662 + $0x48] sm:$0xff]
        %v2673 = vld [vmem:[%s2662 + $0x50] sm:$0xff]
        %v2674 = vld [vmem:[%s2662 + $0x58] sm:$0xff]
        %v2675 = vld [vmem:[%s2662 + $0x60] sm:$0xff]
        %v2676 = vld [vmem:[%s2662 + $0x68] sm:$0xff]
        %v2677 = vld [vmem:[%s2662 + $0x70] sm:$0xff]
        %v2678 = vld [vmem:[%s2662 + $0x78] sm:$0xff]
        %s2679 = scalar_lea.vmem [#allocation7], 2
        %v2680 = vld [vmem:[%s2679] sm:$0x3]
        %s2681 = scalar_lea.vmem [#allocation8], 64
        %v2682 = vld [vmem:[%s2681] sm:$0xff]
        %v2683 = vld [vmem:[%s2681 + $0x8] sm:$0xff]
        %v2684 = vld [vmem:[%s2681 + $0x10] sm:$0xff]
        %v2685 = vld [vmem:[%s2681 + $0x18] sm:$0xff]
        %v2686 = vld [vmem:[%s2681 + $0x20] sm:$0xff]
        %v2687 = vld [vmem:[%s2681 + $0x28] sm:$0xff]
        %v2688 = vld [vmem:[%s2681 + $0x30] sm:$0xff]
        %v2689 = vld [vmem:[%s2681 + $0x38] sm:$0xff]
        %s2690 = scalar_lea.vmem [#allocation10], 1
        %v2691 = vld [vmem:[%s2690] sm:$0x1]
        %v2693 = vperm.slane %v2680, 0
        %v2696 = vsel %vm1086, %v2661, 0
        %2698 = vmatpush.msra.mxu0 0.0
        %2699 = vmatpush.msra.mxu0 0.0
        %2700 = vmatpush.msra.mxu0 0.0
        %2701 = vmatpush.msra.mxu0 0.0
        %2702 = vmatpush.msra.mxu0 0.0
        %2703 = vmatpush.msra.mxu0 0.0
        %2704 = vmatpush.msra.mxu0 0.0
        %2705 = vmatpush.msra.mxu0 0.0
        %2706 = vmatpush.msra.mxu0 %v2677
        %2707 = vmatpush.msra.mxu0 %v2675
        %2708 = vmatpush.msra.mxu0 %v2673
        %2709 = vmatpush.msra.mxu0 %v2671
        %2710 = vmatpush.msra.mxu0 %v2669
        %2711 = vmatpush.msra.mxu0 %v2667
        %2712 = vmatpush.msra.mxu0 %v2665
        %2713 = vmatpush.msra.mxu0 %v2663
        %2714 = vmatmul.f32.gmra.mxu0 %v2696
        %v2715 = vpop.f32.mrf.mxu0
        %v2716 = vadd.f32 %v2693, %v2715
        %2717 = vdwg.mxu0
        %v2718 = vperm.slane %v2680, 1
        %2735 = vrot.lane.b32.xlu0 %v2663, 64
        %v2736 = vpop.permute.xlu0 %2735
        %2737 = vrot.lane.b32.xlu0 %v2664, 64
        %v2738 = vpop.permute.xlu0 %2737
        %2739 = vrot.lane.b32.xlu0 %v2665, 64
        %v2740 = vpop.permute.xlu0 %2739
        %2741 = vrot.lane.b32.xlu0 %v2666, 64
        %v2742 = vpop.permute.xlu0 %2741
        %2743 = vrot.lane.b32.xlu0 %v2667, 64
        %v2744 = vpop.permute.xlu0 %2743
        %2745 = vrot.lane.b32.xlu0 %v2668, 64
        %v2746 = vpop.permute.xlu0 %2745
        %2747 = vrot.lane.b32.xlu0 %v2669, 64
        %v2748 = vpop.permute.xlu0 %2747
        %2749 = vrot.lane.b32.xlu0 %v2670, 64
        %v2750 = vpop.permute.xlu0 %2749
        %2751 = vrot.lane.b32.xlu0 %v2671, 64
        %v2752 = vpop.permute.xlu0 %2751
        %2753 = vrot.lane.b32.xlu0 %v2672, 64
        %v2754 = vpop.permute.xlu0 %2753
        %2755 = vrot.lane.b32.xlu0 %v2673, 64
        %v2756 = vpop.permute.xlu0 %2755
        %2757 = vrot.lane.b32.xlu0 %v2674, 64
        %v2758 = vpop.permute.xlu0 %2757
        %2759 = vrot.lane.b32.xlu0 %v2675, 64
        %v2760 = vpop.permute.xlu0 %2759
        %2761 = vrot.lane.b32.xlu0 %v2676, 64
        %v2762 = vpop.permute.xlu0 %2761
        %2763 = vrot.lane.b32.xlu0 %v2677, 64
        %v2764 = vpop.permute.xlu0 %2763
        %2765 = vrot.lane.b32.xlu0 %v2678, 64
        %v2766 = vpop.permute.xlu0 %2765
        %v2767 = vsel %vm1086, %v2736, %v2738
        %v2768 = vsel %vm1086, %v2740, %v2742
        %v2769 = vsel %vm1086, %v2744, %v2746
        %v2770 = vsel %vm1086, %v2748, %v2750
        %v2771 = vsel %vm1086, %v2752, %v2754
        %v2772 = vsel %vm1086, %v2756, %v2758
        %v2773 = vsel %vm1086, %v2760, %v2762
        %v2774 = vsel %vm1086, %v2764, %v2766
        %2783 = vrot.lane.b32.xlu0 %v2693, 64
        %v2784 = vpop.permute.xlu0 %2783
        %2785 = vrot.lane.b32.xlu0 %v2718, 64
        %v2786 = vpop.permute.xlu0 %2785
        %v2787 = vsel %vm1086, %v2784, %v2786
        %2789 = vmatpush.msra.mxu0 0.0
        %2790 = vmatpush.msra.mxu0 0.0
        %2791 = vmatpush.msra.mxu0 0.0
        %2792 = vmatpush.msra.mxu0 0.0
        %2793 = vmatpush.msra.mxu0 0.0
        %2794 = vmatpush.msra.mxu0 0.0
        %2795 = vmatpush.msra.mxu0 0.0
        %2796 = vmatpush.msra.mxu0 0.0
        %2797 = vmatpush.msra.mxu0 %v2774
        %2798 = vmatpush.msra.mxu0 %v2773
        %2799 = vmatpush.msra.mxu0 %v2772
        %2800 = vmatpush.msra.mxu0 %v2771
        %2801 = vmatpush.msra.mxu0 %v2770
        %2802 = vmatpush.msra.mxu0 %v2769
        %2803 = vmatpush.msra.mxu0 %v2768
        %2804 = vmatpush.msra.mxu0 %v2767
        %2805 = vmatmul.f32.gmra.mxu0 %v1660
        %v2806 = vpop.f32.mrf.mxu0
        %v2807 = vadd.f32 %v2787, %v2806
        %2808 = vdwg.mxu0
        %v2810 = vsel %vm1133, %v2716, 0
        %v2813 = vsel %vm1133, %v2807, 0
        %2815 = vmatpush.xpose.msra.mxu0 0.0
        %2816 = vmatpush.xpose.msra.mxu0 0.0
        %2817 = vmatpush.xpose.msra.mxu0 0.0
        %2818 = vmatpush.xpose.msra.mxu0 0.0
        %2819 = vmatpush.xpose.msra.mxu0 0.0
        %2820 = vmatpush.xpose.msra.mxu0 0.0
        %2821 = vmatpush.xpose.msra.mxu0 0.0
        %2822 = vmatpush.xpose.msra.mxu0 0.0
        %2823 = vmatpush.xpose.msra.mxu0 0.0
        %2824 = vmatpush.xpose.msra.mxu0 0.0
        %2825 = vmatpush.xpose.msra.mxu0 0.0
        %2826 = vmatpush.xpose.msra.mxu0 0.0
        %2827 = vmatpush.xpose.msra.mxu0 0.0
        %2828 = vmatpush.xpose.msra.mxu0 0.0
        %2829 = vmatpush.xpose.msra.mxu0 0.0
        %2830 = vmatpush.xpose.msra.mxu0 %v2813
        %2831 = vmatmul.f32.gmra.mxu0 %v2810
        %v2832 = vpop.f32.mrf.mxu0
        %v2833 = vadd.f32 0.0, %v2832
        %2834 = vdwg.mxu0
        %v2835 = vmul.f32 %v2833, 0.25
        %v2836 = vsel %vm1160, %v2835, -inf
        %2837 = vmax.xlane.f32.xlu0 %v2836
        %v2838 = vpop.xlane.xlu0 %2837
        %v2839 = vsub.f32 %v2835, %v2838
        %v2840 = vmul.f32 %v2839, 1.442695
        %v2841 = vpow.pop %v2840
        %v2842 = vsel %vm1160, %v2841, 0.0
        %2843 = vadd.xlane.f32.xlu0 %v2842
        %v2844 = vpop.xlane.xlu0 %2843
        %v2845 = vrcp.pop %v2844
        %v2846 = vmul.f32 %v2841, %v2845
        %2847 = vrot.lane.b32.xlu0 %v2807, 64
        %v2848 = vpop.permute.xlu0 %2847
        %v2851 = vsel %vm1160, %v2846, 0
        %2853 = vmatpush.msra.mxu0 0.0
        %2854 = vmatpush.msra.mxu0 0.0
        %2855 = vmatpush.msra.mxu0 0.0
        %2856 = vmatpush.msra.mxu0 0.0
        %2857 = vmatpush.msra.mxu0 0.0
        %2858 = vmatpush.msra.mxu0 0.0
        %2859 = vmatpush.msra.mxu0 0.0
        %2860 = vmatpush.msra.mxu0 0.0
        %2861 = vmatpush.msra.mxu0 0.0
        %2862 = vmatpush.msra.mxu0 0.0
        %2863 = vmatpush.msra.mxu0 0.0
        %2864 = vmatpush.msra.mxu0 0.0
        %2865 = vmatpush.msra.mxu0 0.0
        %2866 = vmatpush.msra.mxu0 0.0
        %2867 = vmatpush.msra.mxu0 0.0
        %2868 = vmatpush.msra.mxu0 %v2848
        %2869 = vmatmul.f32.gmra.mxu0 %v2851
        %v2870 = vpop.f32.mrf.mxu0
        %v2871 = vadd.f32 0.0, %v2870
        %2872 = vdwg.mxu0
        %v2874 = vsel %vm1133, %v2871, 0
        %2876 = vmatpush.msra.mxu0 0.0
        %2877 = vmatpush.msra.mxu0 0.0
        %2878 = vmatpush.msra.mxu0 0.0
        %2879 = vmatpush.msra.mxu0 0.0
        %2880 = vmatpush.msra.mxu0 0.0
        %2881 = vmatpush.msra.mxu0 0.0
        %2882 = vmatpush.msra.mxu0 0.0
        %2883 = vmatpush.msra.mxu0 0.0
        %2884 = vmatpush.msra.mxu0 0.0
        %2885 = vmatpush.msra.mxu0 0.0
        %2886 = vmatpush.msra.mxu0 0.0
        %2887 = vmatpush.msra.mxu0 0.0
        %2888 = vmatpush.msra.mxu0 0.0
        %2889 = vmatpush.msra.mxu0 0.0
        %2890 = vmatpush.msra.mxu0 %v2683
        %2891 = vmatpush.msra.mxu0 %v2682
        %2892 = vmatmul.f32.gmra.mxu0 %v2874
        %v2893 = vpop.f32.mrf.mxu0
        %v2894 = vadd.f32 0.0, %v2893
        %2895 = vdwg.mxu0
        %v2897 = vperm.slane %v2691, 0
        %v2899 = vadd.f32 %v2897, %v2894
        %2900 = vrot.lane.b32.xlu0 %v2716, 112
        %v2901 = vpop.permute.xlu0 %2900
        %2902 = vrot.lane.b32.xlu0 %v2807, 112
        %v2903 = vpop.permute.xlu0 %2902
        %v2904 = vsel %vm1133, %v2901, 0
        %v2906 = vsel %vm1133, %v2903, 0
        %2908 = vmatpush.xpose.msra.mxu0 0.0
        %2909 = vmatpush.xpose.msra.mxu0 0.0
        %2910 = vmatpush.xpose.msra.mxu0 0.0
        %2911 = vmatpush.xpose.msra.mxu0 0.0
        %2912 = vmatpush.xpose.msra.mxu0 0.0
        %2913 = vmatpush.xpose.msra.mxu0 0.0
        %2914 = vmatpush.xpose.msra.mxu0 0.0
        %2915 = vmatpush.xpose.msra.mxu0 0.0
        %2916 = vmatpush.xpose.msra.mxu0 0.0
        %2917 = vmatpush.xpose.msra.mxu0 0.0
        %2918 = vmatpush.xpose.msra.mxu0 0.0
        %2919 = vmatpush.xpose.msra.mxu0 0.0
        %2920 = vmatpush.xpose.msra.mxu0 0.0
        %2921 = vmatpush.xpose.msra.mxu0 0.0
        %2922 = vmatpush.xpose.msra.mxu0 0.0
        %2923 = vmatpush.xpose.msra.mxu0 %v2906
        %2924 = vmatmul.f32.gmra.mxu0 %v2904
        %v2925 = vpop.f32.mrf.mxu0
        %v2926 = vadd.f32 0.0, %v2925
        %2927 = vdwg.mxu0
        %v2928 = vmul.f32 %v2926, 0.25
        %v2929 = vsel %vm1160, %v2928, -inf
        %2930 = vmax.xlane.f32.xlu0 %v2929
        %v2931 = vpop.xlane.xlu0 %2930
        %v2932 = vsub.f32 %v2928, %v2931
        %v2933 = vmul.f32 %v2932, 1.442695
        %v2934 = vpow.pop %v2933
        %v2935 = vsel %vm1160, %v2934, 0.0
        %2936 = vadd.xlane.f32.xlu0 %v2935
        %v2937 = vpop.xlane.xlu0 %2936
        %v2938 = vrcp.pop %v2937
        %v2939 = vmul.f32 %v2934, %v2938
        %2940 = vrot.lane.b32.xlu0 %v2807, 48
        %v2941 = vpop.permute.xlu0 %2940
        %v2944 = vsel %vm1160, %v2939, 0
        %2946 = vmatpush.msra.mxu0 0.0
        %2947 = vmatpush.msra.mxu0 0.0
        %2948 = vmatpush.msra.mxu0 0.0
        %2949 = vmatpush.msra.mxu0 0.0
        %2950 = vmatpush.msra.mxu0 0.0
        %2951 = vmatpush.msra.mxu0 0.0
        %2952 = vmatpush.msra.mxu0 0.0
        %2953 = vmatpush.msra.mxu0 0.0
        %2954 = vmatpush.msra.mxu0 0.0
        %2955 = vmatpush.msra.mxu0 0.0
        %2956 = vmatpush.msra.mxu0 0.0
        %2957 = vmatpush.msra.mxu0 0.0
        %2958 = vmatpush.msra.mxu0 0.0
        %2959 = vmatpush.msra.mxu0 0.0
        %2960 = vmatpush.msra.mxu0 0.0
        %2961 = vmatpush.msra.mxu0 %v2941
        %2962 = vmatmul.f32.gmra.mxu0 %v2944
        %v2963 = vpop.f32.mrf.mxu0
        %v2964 = vadd.f32 0.0, %v2963
        %2965 = vdwg.mxu0
        %v2967 = vsel %vm1133, %v2964, 0
        %2969 = vmatpush.msra.mxu0 0.0
        %2970 = vmatpush.msra.mxu0 0.0
        %2971 = vmatpush.msra.mxu0 0.0
        %2972 = vmatpush.msra.mxu0 0.0
        %2973 = vmatpush.msra.mxu0 0.0
        %2974 = vmatpush.msra.mxu0 0.0
        %2975 = vmatpush.msra.mxu0 0.0
        %2976 = vmatpush.msra.mxu0 0.0
        %2977 = vmatpush.msra.mxu0 0.0
        %2978 = vmatpush.msra.mxu0 0.0
        %2979 = vmatpush.msra.mxu0 0.0
        %2980 = vmatpush.msra.mxu0 0.0
        %2981 = vmatpush.msra.mxu0 0.0
        %2982 = vmatpush.msra.mxu0 0.0
        %2983 = vmatpush.msra.mxu0 %v2685
        %2984 = vmatpush.msra.mxu0 %v2684
        %2985 = vmatmul.f32.gmra.mxu0 %v2967
        %v2986 = vpop.f32.mrf.mxu0
        %v2987 = vadd.f32 0.0, %v2986
        %2988 = vdwg.mxu0
        %v2989 = vadd.f32 %v2899, %v2987
        %2990 = vrot.lane.b32.xlu0 %v2716, 96
        %v2991 = vpop.permute.xlu0 %2990
        %2992 = vrot.lane.b32.xlu0 %v2807, 96
        %v2993 = vpop.permute.xlu0 %2992
        %v2994 = vsel %vm1133, %v2991, 0
        %v2996 = vsel %vm1133, %v2993, 0
        %2998 = vmatpush.xpose.msra.mxu0 0.0
        %2999 = vmatpush.xpose.msra.mxu0 0.0
        %3000 = vmatpush.xpose.msra.mxu0 0.0
        %3001 = vmatpush.xpose.msra.mxu0 0.0
        %3002 = vmatpush.xpose.msra.mxu0 0.0
        %3003 = vmatpush.xpose.msra.mxu0 0.0
        %3004 = vmatpush.xpose.msra.mxu0 0.0
        %3005 = vmatpush.xpose.msra.mxu0 0.0
        %3006 = vmatpush.xpose.msra.mxu0 0.0
        %3007 = vmatpush.xpose.msra.mxu0 0.0
        %3008 = vmatpush.xpose.msra.mxu0 0.0
        %3009 = vmatpush.xpose.msra.mxu0 0.0
        %3010 = vmatpush.xpose.msra.mxu0 0.0
        %3011 = vmatpush.xpose.msra.mxu0 0.0
        %3012 = vmatpush.xpose.msra.mxu0 0.0
        %3013 = vmatpush.xpose.msra.mxu0 %v2996
        %3014 = vmatmul.f32.gmra.mxu0 %v2994
        %v3015 = vpop.f32.mrf.mxu0
        %v3016 = vadd.f32 0.0, %v3015
        %3017 = vdwg.mxu0
        %v3018 = vmul.f32 %v3016, 0.25
        %v3019 = vsel %vm1160, %v3018, -inf
        %3020 = vmax.xlane.f32.xlu0 %v3019
        %v3021 = vpop.xlane.xlu0 %3020
        %v3022 = vsub.f32 %v3018, %v3021
        %v3023 = vmul.f32 %v3022, 1.442695
        %v3024 = vpow.pop %v3023
        %v3025 = vsel %vm1160, %v3024, 0.0
        %3026 = vadd.xlane.f32.xlu0 %v3025
        %v3027 = vpop.xlane.xlu0 %3026
        %v3028 = vrcp.pop %v3027
        %v3029 = vmul.f32 %v3024, %v3028
        %3030 = vrot.lane.b32.xlu0 %v2807, 32
        %v3031 = vpop.permute.xlu0 %3030
        %v3034 = vsel %vm1160, %v3029, 0
        %3036 = vmatpush.msra.mxu0 0.0
        %3037 = vmatpush.msra.mxu0 0.0
        %3038 = vmatpush.msra.mxu0 0.0
        %3039 = vmatpush.msra.mxu0 0.0
        %3040 = vmatpush.msra.mxu0 0.0
        %3041 = vmatpush.msra.mxu0 0.0
        %3042 = vmatpush.msra.mxu0 0.0
        %3043 = vmatpush.msra.mxu0 0.0
        %3044 = vmatpush.msra.mxu0 0.0
        %3045 = vmatpush.msra.mxu0 0.0
        %3046 = vmatpush.msra.mxu0 0.0
        %3047 = vmatpush.msra.mxu0 0.0
        %3048 = vmatpush.msra.mxu0 0.0
        %3049 = vmatpush.msra.mxu0 0.0
        %3050 = vmatpush.msra.mxu0 0.0
        %3051 = vmatpush.msra.mxu0 %v3031
        %3052 = vmatmul.f32.gmra.mxu0 %v3034
        %v3053 = vpop.f32.mrf.mxu0
        %v3054 = vadd.f32 0.0, %v3053
        %3055 = vdwg.mxu0
        %v3057 = vsel %vm1133, %v3054, 0
        %3059 = vmatpush.msra.mxu0 0.0
        %3060 = vmatpush.msra.mxu0 0.0
        %3061 = vmatpush.msra.mxu0 0.0
        %3062 = vmatpush.msra.mxu0 0.0
        %3063 = vmatpush.msra.mxu0 0.0
        %3064 = vmatpush.msra.mxu0 0.0
        %3065 = vmatpush.msra.mxu0 0.0
        %3066 = vmatpush.msra.mxu0 0.0
        %3067 = vmatpush.msra.mxu0 0.0
        %3068 = vmatpush.msra.mxu0 0.0
        %3069 = vmatpush.msra.mxu0 0.0
        %3070 = vmatpush.msra.mxu0 0.0
        %3071 = vmatpush.msra.mxu0 0.0
        %3072 = vmatpush.msra.mxu0 0.0
        %3073 = vmatpush.msra.mxu0 %v2687
        %3074 = vmatpush.msra.mxu0 %v2686
        %3075 = vmatmul.f32.gmra.mxu0 %v3057
        %v3076 = vpop.f32.mrf.mxu0
        %v3077 = vadd.f32 0.0, %v3076
        %3078 = vdwg.mxu0
        %v3079 = vadd.f32 %v2989, %v3077
        %3080 = vrot.lane.b32.xlu0 %v2716, 80
        %v3081 = vpop.permute.xlu0 %3080
        %3082 = vrot.lane.b32.xlu0 %v2807, 80
        %v3083 = vpop.permute.xlu0 %3082
        %v3084 = vsel %vm1133, %v3081, 0
        %v3086 = vsel %vm1133, %v3083, 0
        %3088 = vmatpush.xpose.msra.mxu0 0.0
        %3089 = vmatpush.xpose.msra.mxu0 0.0
        %3090 = vmatpush.xpose.msra.mxu0 0.0
        %3091 = vmatpush.xpose.msra.mxu0 0.0
        %3092 = vmatpush.xpose.msra.mxu0 0.0
        %3093 = vmatpush.xpose.msra.mxu0 0.0
        %3094 = vmatpush.xpose.msra.mxu0 0.0
        %3095 = vmatpush.xpose.msra.mxu0 0.0
        %3096 = vmatpush.xpose.msra.mxu0 0.0
        %3097 = vmatpush.xpose.msra.mxu0 0.0
        %3098 = vmatpush.xpose.msra.mxu0 0.0
        %3099 = vmatpush.xpose.msra.mxu0 0.0
        %3100 = vmatpush.xpose.msra.mxu0 0.0
        %3101 = vmatpush.xpose.msra.mxu0 0.0
        %3102 = vmatpush.xpose.msra.mxu0 0.0
        %3103 = vmatpush.xpose.msra.mxu0 %v3086
        %3104 = vmatmul.f32.gmra.mxu0 %v3084
        %v3105 = vpop.f32.mrf.mxu0
        %v3106 = vadd.f32 0.0, %v3105
        %3107 = vdwg.mxu0
        %v3108 = vmul.f32 %v3106, 0.25
        %v3109 = vsel %vm1160, %v3108, -inf
        %3110 = vmax.xlane.f32.xlu0 %v3109
        %v3111 = vpop.xlane.xlu0 %3110
        %v3112 = vsub.f32 %v3108, %v3111
        %v3113 = vmul.f32 %v3112, 1.442695
        %v3114 = vpow.pop %v3113
        %v3115 = vsel %vm1160, %v3114, 0.0
        %3116 = vadd.xlane.f32.xlu0 %v3115
        %v3117 = vpop.xlane.xlu0 %3116
        %v3118 = vrcp.pop %v3117
        %v3119 = vmul.f32 %v3114, %v3118
        %3120 = vrot.lane.b32.xlu0 %v2807, 16
        %v3121 = vpop.permute.xlu0 %3120
        %v3124 = vsel %vm1160, %v3119, 0
        %3126 = vmatpush.msra.mxu0 0.0
        %3127 = vmatpush.msra.mxu0 0.0
        %3128 = vmatpush.msra.mxu0 0.0
        %3129 = vmatpush.msra.mxu0 0.0
        %3130 = vmatpush.msra.mxu0 0.0
        %3131 = vmatpush.msra.mxu0 0.0
        %3132 = vmatpush.msra.mxu0 0.0
        %3133 = vmatpush.msra.mxu0 0.0
        %3134 = vmatpush.msra.mxu0 0.0
        %3135 = vmatpush.msra.mxu0 0.0
        %3136 = vmatpush.msra.mxu0 0.0
        %3137 = vmatpush.msra.mxu0 0.0
        %3138 = vmatpush.msra.mxu0 0.0
        %3139 = vmatpush.msra.mxu0 0.0
        %3140 = vmatpush.msra.mxu0 0.0
        %3141 = vmatpush.msra.mxu0 %v3121
        %3142 = vmatmul.f32.gmra.mxu0 %v3124
        %v3143 = vpop.f32.mrf.mxu0
        %v3144 = vadd.f32 0.0, %v3143
        %3145 = vdwg.mxu0
        %v3147 = vsel %vm1133, %v3144, 0
        %3149 = vmatpush.msra.mxu0 0.0
        %3150 = vmatpush.msra.mxu0 0.0
        %3151 = vmatpush.msra.mxu0 0.0
        %3152 = vmatpush.msra.mxu0 0.0
        %3153 = vmatpush.msra.mxu0 0.0
        %3154 = vmatpush.msra.mxu0 0.0
        %3155 = vmatpush.msra.mxu0 0.0
        %3156 = vmatpush.msra.mxu0 0.0
        %3157 = vmatpush.msra.mxu0 0.0
        %3158 = vmatpush.msra.mxu0 0.0
        %3159 = vmatpush.msra.mxu0 0.0
        %3160 = vmatpush.msra.mxu0 0.0
        %3161 = vmatpush.msra.mxu0 0.0
        %3162 = vmatpush.msra.mxu0 0.0
        %3163 = vmatpush.msra.mxu0 %v2689
        %3164 = vmatpush.msra.mxu0 %v2688
        %3165 = vmatmul.f32.gmra.mxu0 %v3147
        %v3166 = vpop.f32.mrf.mxu0
        %v3167 = vadd.f32 0.0, %v3166
        %3168 = vdwg.mxu0
        %v3169 = vadd.f32 %v3079, %v3167
        %v3170 = vadd.f32 %v2661, %v3169
        %s3171 = scalar_lea.vmem [#allocation19], 1
        %v3172 = vld [vmem:[%s3171] sm:$0x1]
        %s3173 = scalar_lea.vmem [#allocation20], 1
        %v3174 = vld [vmem:[%s3173] sm:$0x1]
        %v3175 = vsel %vm1086, %v3170, 0.0
        %3176 = vadd.xlane.f32.xlu0 %v3175
        %v3177 = vpop.xlane.xlu0 %3176
        %v3178 = vmul.f32 %v3177, %v1508
        %v3179 = vsub.f32 %v3170, %v3178
        %v3180 = vmul.f32 %v3179, %v3179
        %v3181 = vsel %vm1086, %v3180, 0.0
        %3182 = vadd.xlane.f32.xlu0 %v3181
        %v3183 = vpop.xlane.xlu0 %3182
        %v3184 = vmul.f32 %v3183, %v1508
        %v3185 = vadd.f32 %v3184, 1e-05
        %v3186 = vrsqrt.pop %v3185
        %v3187 = vmul.f32 %v3186, %v3185
        %v3188 = vmul.f32 %v3187, %v3186
        %v3189 = vmul.f32 0.5, %v3188
        %v3190 = vsub.f32 1.5, %v3189
        %v3191 = vmul.f32 %v3186, %v3190
        %vm3192 = vweird.f32 %v3185
        %vm3193 = vweird.f32 %v3186
        %vm3194 = vmor %vm3192, %vm3193
        %v3195 = vsel %vm3194, %v3186, %v3191
        %v3196 = vmul.f32 %v3179, %v3195
        %v3198 = vperm.slane %v3172, 0
        %v3200 = vmul.f32 %v3196, %v3198
        %v3202 = vperm.slane %v3174, 0
        %v3204 = vadd.f32 %v3200, %v3202
        %s3205 = scalar_lea.vmem [#allocation11], 64
        %v3206 = vld [vmem:[%s3205] sm:$0xff]
        %v3207 = vld [vmem:[%s3205 + $0x8] sm:$0xff]
        %v3208 = vld [vmem:[%s3205 + $0x10] sm:$0xff]
        %v3209 = vld [vmem:[%s3205 + $0x18] sm:$0xff]
        %v3210 = vld [vmem:[%s3205 + $0x20] sm:$0xff]
        %v3211 = vld [vmem:[%s3205 + $0x28] sm:$0xff]
        %v3212 = vld [vmem:[%s3205 + $0x30] sm:$0xff]
        %v3213 = vld [vmem:[%s3205 + $0x38] sm:$0xff]
        %s3214 = scalar_lea.vmem [#allocation13], 1
        %v3215 = vld [vmem:[%s3214] sm:$0x1]
        %v3217 = vperm.slane %v3215, 0
        %v3220 = vsel %vm1086, %v3204, 0
        %3222 = vmatpush.msra.mxu0 0.0
        %3223 = vmatpush.msra.mxu0 0.0
        %3224 = vmatpush.msra.mxu0 0.0
        %3225 = vmatpush.msra.mxu0 0.0
        %3226 = vmatpush.msra.mxu0 0.0
        %3227 = vmatpush.msra.mxu0 0.0
        %3228 = vmatpush.msra.mxu0 0.0
        %3229 = vmatpush.msra.mxu0 0.0
        %3230 = vmatpush.msra.mxu0 %v3213
        %3231 = vmatpush.msra.mxu0 %v3212
        %3232 = vmatpush.msra.mxu0 %v3211
        %3233 = vmatpush.msra.mxu0 %v3210
        %3234 = vmatpush.msra.mxu0 %v3209
        %3235 = vmatpush.msra.mxu0 %v3208
        %3236 = vmatpush.msra.mxu0 %v3207
        %3237 = vmatpush.msra.mxu0 %v3206
        %3238 = vmatmul.f32.gmra.mxu0 %v3220
        %v3239 = vpop.f32.mrf.mxu0
        %v3240 = vadd.f32 %v3217, %v3239
        %3241 = vdwg.mxu0
        %v3242 = vmax.f32 %v3240, 0.0
        %s3243 = scalar_lea.vmem %s12, 128
        %v3244 = vld [vmem:[%s3243] sm:$0xff]
        %v3245 = vld [vmem:[%s3243 + $0x8] sm:$0xff]
        %v3246 = vld [vmem:[%s3243 + $0x10] sm:$0xff]
        %v3247 = vld [vmem:[%s3243 + $0x18] sm:$0xff]
        %v3248 = vld [vmem:[%s3243 + $0x20] sm:$0xff]
        %v3249 = vld [vmem:[%s3243 + $0x28] sm:$0xff]
        %v3250 = vld [vmem:[%s3243 + $0x30] sm:$0xff]
        %v3251 = vld [vmem:[%s3243 + $0x38] sm:$0xff]
        %v3252 = vld [vmem:[%s3243 + $0x40] sm:$0xff]
        %v3253 = vld [vmem:[%s3243 + $0x48] sm:$0xff]
        %v3254 = vld [vmem:[%s3243 + $0x50] sm:$0xff]
        %v3255 = vld [vmem:[%s3243 + $0x58] sm:$0xff]
        %v3256 = vld [vmem:[%s3243 + $0x60] sm:$0xff]
        %v3257 = vld [vmem:[%s3243 + $0x68] sm:$0xff]
        %v3258 = vld [vmem:[%s3243 + $0x70] sm:$0xff]
        %v3259 = vld [vmem:[%s3243 + $0x78] sm:$0xff]
        %s3260 = scalar_lea.vmem [#allocation14], 1
        %v3261 = vld [vmem:[%s3260] sm:$0x1]
        %v3263 = vperm.slane %v3261, 0
        %3265 = vmatpush.msra.mxu0 %v3259
        %3266 = vmatpush.msra.mxu0 %v3258
        %3267 = vmatpush.msra.mxu0 %v3257
        %3268 = vmatpush.msra.mxu0 %v3256
        %3269 = vmatpush.msra.mxu0 %v3255
        %3270 = vmatpush.msra.mxu0 %v3254
        %3271 = vmatpush.msra.mxu0 %v3253
        %3272 = vmatpush.msra.mxu0 %v3252
        %3273 = vmatpush.msra.mxu0 %v3251
        %3274 = vmatpush.msra.mxu0 %v3250
        %3275 = vmatpush.msra.mxu0 %v3249
        %3276 = vmatpush.msra.mxu0 %v3248
        %3277 = vmatpush.msra.mxu0 %v3247
        %3278 = vmatpush.msra.mxu0 %v3246
        %3279 = vmatpush.msra.mxu0 %v3245
        %3280 = vmatpush.msra.mxu0 %v3244
        %3281 = vmatmul.f32.gmra.mxu0 %v3242
        %v3282 = vpop.f32.mrf.mxu0
        %v3283 = vadd.f32 %v3263, %v3282
        %3284 = vdwg.mxu0
        %v3285 = vadd.f32 %v3204, %v3283
        %s3286 = scalar_lea.vmem [#allocation22], 1
        %v3287 = vld [vmem:[%s3286] sm:$0x1]
        %s3288 = scalar_lea.vmem [#allocation23], 1
        %v3289 = vld [vmem:[%s3288] sm:$0x1]
        %v3290 = vsel %vm1086, %v3285, 0.0
        %3291 = vadd.xlane.f32.xlu0 %v3290
        %v3292 = vpop.xlane.xlu0 %3291
        %v3293 = vmul.f32 %v3292, %v1508
        %v3294 = vsub.f32 %v3285, %v3293
        %v3295 = vmul.f32 %v3294, %v3294
        %v3296 = vsel %vm1086, %v3295, 0.0
        %3297 = vadd.xlane.f32.xlu0 %v3296
        %v3298 = vpop.xlane.xlu0 %3297
        %v3299 = vmul.f32 %v3298, %v1508
        %v3300 = vadd.f32 %v3299, 1e-05
        %v3301 = vrsqrt.pop %v3300
        %v3302 = vmul.f32 %v3301, %v3300
        %v3303 = vmul.f32 %v3302, %v3301
        %v3304 = vmul.f32 0.5, %v3303
        %v3305 = vsub.f32 1.5, %v3304
        %v3306 = vmul.f32 %v3301, %v3305
        %vm3307 = vweird.f32 %v3300
        %vm3308 = vweird.f32 %v3301
        %vm3309 = vmor %vm3307, %vm3308
        %v3310 = vsel %vm3309, %v3301, %v3306
        %v3311 = vmul.f32 %v3294, %v3310
        %v3313 = vperm.slane %v3287, 0
        %v3315 = vmul.f32 %v3311, %v3313
        %v3317 = vperm.slane %v3289, 0
        %v3319 = vadd.f32 %v3315, %v3317
        %v3320 = vld [vmem:[#allocation25] sm:$0x1]
        %v3321 = vld [vmem:[#allocation26] sm:$0x1]
        %v3322 = vsel %vm1086, %v3319, 0.0
        %3323 = vadd.xlane.f32.xlu0 %v3322
        %v3324 = vpop.xlane.xlu0 %3323
        %v3325 = vmul.f32 %v3324, %v1508
        %v3326 = vsub.f32 %v3319, %v3325
        %v3327 = vmul.f32 %v3326, %v3326
        %v3328 = vsel %vm1086, %v3327, 0.0
        %3329 = vadd.xlane.f32.xlu0 %v3328
        %v3330 = vpop.xlane.xlu0 %3329
        %v3331 = vmul.f32 %v3330, %v1508
        %v3332 = vadd.f32 %v3331, 1e-05
        %v3333 = vrsqrt.pop %v3332
        %v3334 = vmul.f32 %v3333, %v3332
        %v3335 = vmul.f32 %v3334, %v3333
        %v3336 = vmul.f32 0.5, %v3335
        %v3337 = vsub.f32 1.5, %v3336
        %v3338 = vmul.f32 %v3333, %v3337
        %vm3339 = vweird.f32 %v3332
        %vm3340 = vweird.f32 %v3333
        %vm3341 = vmor %vm3339, %vm3340
        %v3342 = vsel %vm3341, %v3333, %v3338
        %v3343 = vmul.f32 %v3326, %v3342
        %v3345 = vperm.slane %v3320, 0
        %v3347 = vmul.f32 %v3343, %v3345
        %v3349 = vperm.slane %v3321, 0
        %v3351 = vadd.f32 %v3347, %v3349
        %v3352 = vld [vmem:[#allocation28] sm:$0xff]
        %v3353 = vld [vmem:[#allocation28 + $0x8] sm:$0xff]
        %v3354 = vld [vmem:[#allocation28 + $0x10] sm:$0xff]
        %v3355 = vld [vmem:[#allocation28 + $0x18] sm:$0xff]
        %v3356 = vld [vmem:[#allocation28 + $0x20] sm:$0xff]
        %v3357 = vld [vmem:[#allocation28 + $0x28] sm:$0xff]
        %v3358 = vld [vmem:[#allocation28 + $0x30] sm:$0xff]
        %v3359 = vld [vmem:[#allocation28 + $0x38] sm:$0xff]
        %v3360 = vld [vmem:[#allocation28 + $0x40] sm:$0xff]
        %v3361 = vld [vmem:[#allocation28 + $0x48] sm:$0xff]
        %v3362 = vld [vmem:[#allocation28 + $0x50] sm:$0xff]
        %v3363 = vld [vmem:[#allocation28 + $0x58] sm:$0xff]
        %v3364 = vld [vmem:[#allocation28 + $0x60] sm:$0xff]
        %v3365 = vld [vmem:[#allocation28 + $0x68] sm:$0xff]
        %v3366 = vld [vmem:[#allocation28 + $0x70] sm:$0xff]
        %v3367 = vld [vmem:[#allocation28 + $0x78] sm:$0xff]
        %v3368 = vld [vmem:[#allocation29] sm:$0x3]
        %v3370 = vperm.slane %v3368, 0
        %v3371 = vperm.slane %v3368, 1
        %v3375 = vsel %vm1086, %v3351, 0
        %3377 = vmatpush.msra.mxu0 0.0
        %3378 = vmatpush.msra.mxu0 0.0
        %3379 = vmatpush.msra.mxu0 0.0
        %3380 = vmatpush.msra.mxu0 0.0
        %3381 = vmatpush.msra.mxu0 0.0
        %3382 = vmatpush.msra.mxu0 0.0
        %3383 = vmatpush.msra.mxu0 0.0
        %3384 = vmatpush.msra.mxu0 0.0
        %3385 = vmatpush.msra.mxu0 %v3366
        %3386 = vmatpush.msra.mxu0 %v3364
        %3387 = vmatpush.msra.mxu0 %v3362
        %3388 = vmatpush.msra.mxu0 %v3360
        %3389 = vmatpush.msra.mxu0 %v3358
        %3390 = vmatpush.msra.mxu0 %v3356
        %3391 = vmatpush.msra.mxu0 %v3354
        %3392 = vmatpush.msra.mxu0 %v3352
        %3393 = vmatmul.f32.gmra.mxu0 %v3375
        %v3394 = vpop.f32.mrf.mxu0
        %v3395 = vadd.f32 %v3370, %v3394
        %3396 = vdwg.mxu0
        %3397 = vmatpush.msra.mxu0 0.0
        %3398 = vmatpush.msra.mxu0 0.0
        %3399 = vmatpush.msra.mxu0 0.0
        %3400 = vmatpush.msra.mxu0 0.0
        %3401 = vmatpush.msra.mxu0 0.0
        %3402 = vmatpush.msra.mxu0 0.0
        %3403 = vmatpush.msra.mxu0 0.0
        %3404 = vmatpush.msra.mxu0 0.0
        %3405 = vmatpush.msra.mxu0 %v3367
        %3406 = vmatpush.msra.mxu0 %v3365
        %3407 = vmatpush.msra.mxu0 %v3363
        %3408 = vmatpush.msra.mxu0 %v3361
        %3409 = vmatpush.msra.mxu0 %v3359
        %3410 = vmatpush.msra.mxu0 %v3357
        %3411 = vmatpush.msra.mxu0 %v3355
        %3412 = vmatpush.msra.mxu0 %v3353
        %3413 = vmatmul.f32.gmra.mxu0 %v3375
        %v3414 = vpop.f32.mrf.mxu0
        %v3415 = vadd.f32 %v3371, %v3414
        %3416 = vdwg.mxu0
        %3417 = vst [vmem:[%s1042] sm:$0xff] %v3395
        %3418 = vst [vmem:[%s1042 + $0x8] sm:$0xff] %v3415
        %s3419 = sand.u32 %s572, 1
        %s3420 = scalar_lea.sflag [#allocation4], %s3419
        %s3421 = sand.u32 %s572, 1
        %s3422 = smul.addr %s3421, 16
        %s3423 = scalar_lea.vmem [#allocation31], %s3422
        // Predicated region
        $region189: #{adversarial_decoder_forward.1} parent=115 // pred_check
          %p3424 = pneg %p582
        $region190: #{adversarial_decoder_forward.1} parent=115 // pred_check_branch
          %3426 = sbr.rel (%p3424) target = $region192
        $region191: #{adversarial_decoder_forward.1} parent=115 // pred_region
          %3428 = vsyncadd %s3420, 0
          %s3429 = smul.addr %s50, 2
          %s3430 = smul.addr %s3429, 8
          %s3431 = scalar_lea.hbm %s24, %s3430
          %s3433 = sshll.u32 %s3423, 4
          %s3434 = int_to_ptr.vmem [resolvable:$true] %s3433
          %s3435 = sshll.u32 %s3431, 4
          %s3436 = int_to_ptr.hbm [resolvable:$true] %s3435
          %3438 = dma.vmem_to_hbm [thread:$0]  %s3434, 256, %s3436, %s3420
        $region192: #{adversarial_decoder_forward.1} parent=115 // pred_fallthru
          _
      $region116: #{adversarial_decoder_forward.1} parent=5 // pred_fallthru
        _
      %p3439 = scmp.le.s32.totalorder 2, %s45
      // Predicated region
      $region193: #{adversarial_decoder_forward.1} parent=5 // pred_check
        %p3440 = pneg %p3439
      $region194: #{adversarial_decoder_forward.1} parent=5 // pred_check_branch
        %3442 = sbr.rel (%p3440) target = $region196
      $region195: #{adversarial_decoder_forward.1} parent=5 // pred_region
        %s3443 = ssub.s32 %s45, 2
        // Predicated region
        $region197: #{adversarial_decoder_forward.1} parent=195 // pred_check
          %p3444 = pneg %p588
        $region198: #{adversarial_decoder_forward.1} parent=195 // pred_check_branch
          %3446 = sbr.rel (%p3444) target = $region200
        $region199: #{adversarial_decoder_forward.1} parent=195 // pred_region
          %s3447 = sand.u32 %s573, 1
          %s3448 = scalar_lea.sflag [#allocation4], %s3447
          %s3449 = sand.u32 %s573, 1
          %s3450 = smul.addr %s3449, 16
          %s3451 = scalar_lea.vmem [#allocation31], %s3450
          %3453 = dma.done %s3448, 256
        $region200: #{adversarial_decoder_forward.1} parent=195 // pred_fallthru
          _
      $region196: #{adversarial_decoder_forward.1} parent=5 // pred_fallthru
        _
    $region6: #{adversarial_decoder_forward.1} parent=1 // loop_footer
      %s49 = sadd.s32 1, %s45
    $region7: #{adversarial_decoder_forward.1} parent=1 // loop_footer_branch
      %44 = sbr.rel target = $region3
    $region8: #{adversarial_decoder_forward.1} parent=1 // loop_exit
      _
    %3454 = vsyncpa [#allocation3], 1
    %s3455 = scalar_lea.sflag [#allocation3], 1
    %3456 = vsyncpa %s3455, 1
    %3457 = vsyncpa [#allocation6], 1
    %3458 = vsyncpa [#allocation9], 1
    %3459 = vsyncpa [#allocation12], 1
    %3460 = vsyncpa [#allocation15], 1
    %3461 = vsyncpa [#allocation18], 1
    %3462 = vsyncpa [#allocation21], 1
    %3463 = vsyncpa [#allocation24], 1
    %3464 = vsyncpa [#allocation27], 1
    %3465 = vsyncpa [#allocation30], 1
    %3466 = vsyncpa [#allocation4], 1
    %s3467 = scalar_lea.sflag [#allocation4], 1
    %3468 = vsyncpa %s3467, 1

</llo_original>
